<compile_context>
chip_gen: v7x
topology: tpu7x:2x2x1
jax: 0.10.0
libtpu: 0.0.40
codegen_flags: <defaults>
</compile_context>

<pallas_src>
import numpy as np
import jax
import jax.numpy as jnp
from jax import lax
from jax.experimental import pallas as pl
from jax.experimental.pallas import tpu as pltpu

# ----------------------------- configuration --------------------------------
N, C, H, W = 2, 3, 32, 32            # H, W must be multiples of 8
BLK = 8
BH, BW = H // BLK, W // BLK
L = BH * BW                          # 8x8 blocks per channel (= B*B)
DIM = L                              # transformer embedding dim (== B*B) = 16
SEQ = C * BLK * BLK                  # 3 * 64 = 192 tokens
DEPTH = 2
HEADS = 2
DIM_HEAD = 8
INNER = HEADS * DIM_HEAD             # 16
MLP_DIM = 32
LN_EPS = 1e-5
ATTN_SCALE = DIM_HEAD ** -0.5
YUV_KEEP = (25, 9, 9)                # self.yuv_keep_weighs

MXU_DTYPE = jnp.bfloat16             # matmul-operand dtype (accumulation stays f32)

RGB2YUV = np.array([[0.299, 0.587, 0.114],
                    [-0.14713, -0.28886, 0.436],
                    [0.615, -0.51499, -0.10001]], dtype=np.float64)
YUV2RGB = np.array([[1.0, 0.0, 1.13983],
                    [1.0, -0.39465, -0.5806],
                    [1.0, 2.03211, 0.0]], dtype=np.float64)


def _dct_matrix(n=BLK):
    k = np.arange(n)[:, None].astype(np.float64)
    i = np.arange(n)[None, :].astype(np.float64)
    d = np.sqrt(2.0 / n) * np.cos(np.pi * (2.0 * i + 1.0) * k / (2.0 * n))
    d[0, :] = np.sqrt(1.0 / n)
    return d


def _zigzag_keep_mask(keep):
    # get_jpeg_yuv_filter_mask for one 8x8 window (tiling is exactly periodic).
    order = sorted(((i, j) for i in range(BLK) for j in range(BLK)),
                   key=lambda p: (p[0] + p[1], -p[1] if (p[0] + p[1]) % 2 else p[1]))
    m = np.zeros((BLK, BLK), dtype=np.float64)
    for i, j in order[:keep]:
        m[i, j] = 1.0
    return m.reshape(-1)


_D8 = _dct_matrix()
_K = np.kron(_D8, _D8)                                                 # (64,64) 2-D DCT on flattened blocks
_MASK = np.concatenate([_zigzag_keep_mask(k) for k in YUV_KEEP])       # (192,)

# Token layout (per image, TRANSPOSED): row = 8x8 block (row-major over blocks),
# column = channel*64 + u*8 + v.  Acting on the token (column) axis:
#   A_FWD = diag(mask) . kron(I3, K) . kron(RGB2YUV, I64)   (color -> DCT -> mask)
#   A_BWD = kron(YUV2RGB, I64) . kron(I3, K^T)               (IDCT -> color)
# and the kernel computes x_T = t_T @ A_FWD^T,  out_T = x_T @ A_BWD^T.
_A_FWD = _MASK[:, None] * (np.kron(np.eye(C), _K) @ np.kron(RGB2YUV, np.eye(BLK * BLK)))
_A_BWD = np.kron(YUV2RGB, np.eye(BLK * BLK)) @ np.kron(np.eye(C), _K.T)

A_FWD_T = jnp.asarray(_A_FWD.T, dtype=MXU_DTYPE)   # (192, 192)
A_BWD_T = jnp.asarray(_A_BWD.T, dtype=MXU_DTYPE)   # (192, 192)

# Offsets of the packed per-layer vector slab (all multiples of 8 sublanes):
#   [0:16) ln1_g  [16:32) ln1_b  [32:48) bo  [48:64) ln2_g  [64:80) ln2_b
#   [80:96) b2    [96:128) b1
VEC_ROWS = 6 * DIM + MLP_DIM        # 128

# ----------------------------- in-kernel math --------------------------------


def _layer_norm_T(x, g, b):
    # x: (F, T) with features on the sublane axis; normalize over F (axis 0),
    # matching nn.LayerNorm(dim) on the original (T, F) layout.
    mu = jnp.mean(x, axis=0, keepdims=True)
    var = jnp.mean(jnp.square(x - mu), axis=0, keepdims=True)   # biased, like nn.LayerNorm
    return (x - mu) * lax.rsqrt(var + LN_EPS) * g + b


def _erf_approx(x):
    # Abramowitz & Stegun 7.1.26, |err| < 1.5e-7.
    a1, a2, a3, a4, a5 = 0.254829592, -0.284496736, 1.421413741, -1.453152027, 1.061405429
    p = 0.3275911
    s = jnp.where(x >= 0.0, 1.0, -1.0)
    ax = jnp.abs(x)
    t = 1.0 / (1.0 + p * ax)
    poly = ((((a5 * t + a4) * t + a3) * t + a2) * t + a1) * t
    return s * (1.0 - poly * jnp.exp(-ax * ax))


def _gelu_exact(x):
    return 0.5 * x * (1.0 + _erf_approx(x * 0.7071067811865476))


def _vit_kernel(tok_ref, afwd_ref, abwd_ref, wqkv_ref, wo_ref, w1_ref, w2_ref,
                vec_ref, out_ref):
    t = tok_ref[0].astype(MXU_DTYPE)                              # (DIM, SEQ) rgb tokens

    # rgb2yuv + block DCT + zig-zag mask, fused into one matmul (N = 192 on the MXU).
    x = jnp.dot(t, afwd_ref[...], preferred_element_type=jnp.float32)   # (DIM, SEQ) f32

    for d in range(DEPTH):                                        # Transformer, unrolled
        vec = vec_ref[d]                                          # (128, 1) f32 slab
        ln1_g, ln1_b = vec[0:16], vec[16:32]
        bo = vec[32:48]
        ln2_g, ln2_b = vec[48:64], vec[64:80]
        b2 = vec[80:96]
        b1 = vec[96:128]

        # ---- PreNorm multi-head attention + residual ----
        xn = _layer_norm_T(x, ln1_g, ln1_b)                       # (DIM, SEQ) f32
        qkv = jnp.dot(wqkv_ref[d], xn.astype(MXU_DTYPE),
                      preferred_element_type=jnp.float32)         # (3*INNER, SEQ) f32
        y = jnp.zeros_like(x)
        for h in range(HEADS):
            # aligned 8-row sublane slices (free views, no lane shuffles)
            q = qkv[h * DIM_HEAD:(h + 1) * DIM_HEAD].astype(MXU_DTYPE)          # scale folded in
            k = qkv[INNER + h * DIM_HEAD:INNER + (h + 1) * DIM_HEAD].astype(MXU_DTYPE)
            v = qkv[2 * INNER + h * DIM_HEAD:2 * INNER + (h + 1) * DIM_HEAD].astype(MXU_DTYPE)
            dots = lax.dot_general(q, k, (((0,), (0,)), ((), ())),
                                   preferred_element_type=jnp.float32)  # (SEQ_q, SEQ_k)
            e = jnp.exp(dots - jnp.max(dots, axis=-1, keepdims=True))
            attn = (e * pl.reciprocal(jnp.sum(e, axis=-1, keepdims=True),
                                      approx=True)).astype(MXU_DTYPE)   # bf16 probs
            oh = lax.dot_general(v, attn, (((1,), (1,)), ((), ())),
                                 preferred_element_type=jnp.float32)    # (DIM_HEAD, SEQ_q)
            # concat-free output projection: Wo @ concat(o_h) == sum_h Wo[:,h] @ o_h
            y = y + jnp.dot(wo_ref[d, h], oh.astype(MXU_DTYPE),
                            preferred_element_type=jnp.float32)         # (DIM, SEQ)
        x = x + y + bo                                            # residual

        # ---- PreNorm feed-forward + residual ----
        xn = _layer_norm_T(x, ln2_g, ln2_b)
        hdn = jnp.dot(w1_ref[d], xn.astype(MXU_DTYPE),
                      preferred_element_type=jnp.float32) + b1    # (MLP_DIM, SEQ)
        hdn = _gelu_exact(hdn)
        x = x + jnp.dot(w2_ref[d], hdn.astype(MXU_DTYPE),
                        preferred_element_type=jnp.float32) + b2

    # block IDCT + yuv2rgb, fused into one matmul; lane-dense (1, 16, 192) store.
    out_ref[0] = jnp.dot(x.astype(MXU_DTYPE), abwd_ref[...],
                         preferred_element_type=jnp.float32)


# ----------------------------- parameters ------------------------------------

_WEIGHT_ORDER = ("wqkv", "wo", "w1", "w2", "vec")


def init_params(key):
    keys = jax.random.split(key, 5)

    def nrm(k, shape, s=0.05):
        return (s * jax.random.normal(k, shape)).astype(jnp.float32)

    # Kernel-ready (pre-transposed) layouts -- the kernel computes W @ x_T:
    #   wqkv: (DEPTH, 3*INNER, DIM), q rows pre-scaled by dim_head**-0.5
    #   wo  : (DEPTH, HEADS, DIM, DIM_HEAD)   (to_out weight split per head)
    #   w1  : (DEPTH, MLP_DIM, DIM),  w2: (DEPTH, DIM, MLP_DIM)
    #   vec : (DEPTH, 128, 1) packed [ln1_g, ln1_b, bo, ln2_g, ln2_b, b2, b1]
    wqkv = nrm(keys[0], (DEPTH, 3 * INNER, DIM))
    wqkv = wqkv.at[:, :INNER, :].multiply(jnp.float32(ATTN_SCALE))
    wo = (nrm(keys[1], (DEPTH, DIM, INNER))
          .reshape(DEPTH, DIM, HEADS, DIM_HEAD).transpose(0, 2, 1, 3))
    bo = nrm(keys[2], (DEPTH, DIM), 0.01)
    w1 = nrm(keys[3], (DEPTH, MLP_DIM, DIM))
    w2 = nrm(keys[4], (DEPTH, DIM, MLP_DIM))
    b1 = jnp.zeros((DEPTH, MLP_DIM), jnp.float32)
    b2 = jnp.zeros((DEPTH, DIM), jnp.float32)
    ln1_g = jnp.ones((DEPTH, DIM), jnp.float32)
    ln1_b = jnp.zeros((DEPTH, DIM), jnp.float32)
    ln2_g = jnp.ones((DEPTH, DIM), jnp.float32)
    ln2_b = jnp.zeros((DEPTH, DIM), jnp.float32)

    vec = jnp.concatenate([ln1_g, ln1_b, bo, ln2_g, ln2_b, b2, b1], axis=1)  # (DEPTH, 128)
    assert vec.shape == (DEPTH, VEC_ROWS)
    vec = vec[:, :, None].astype(jnp.float32)                               # (DEPTH, 128, 1)

    return dict(
        wqkv=wqkv.astype(MXU_DTYPE),
        wo=wo.astype(MXU_DTYPE),
        w1=w1.astype(MXU_DTYPE),
        w2=w2.astype(MXU_DTYPE),
        vec=vec,
    )


# ----------------------------- forward ----------------------------------------


def _full_spec(shape):
    nd = len(shape)
    return pl.BlockSpec(shape, lambda i, _nd=nd: (0,) * _nd)


def _cost_estimate(n):
    flops_fixed = 2 * (2 * DIM * SEQ * SEQ)                          # A_FWD + A_BWD
    per_layer = (2 * (3 * INNER) * DIM * SEQ                         # qkv projection
                 + HEADS * (2 * SEQ * DIM_HEAD * SEQ                 # q^T k
                            + 2 * DIM_HEAD * SEQ * SEQ               # P @ V
                            + 2 * DIM * DIM_HEAD * SEQ)              # Wo
                 + 2 * MLP_DIM * DIM * SEQ + 2 * DIM * MLP_DIM * SEQ)  # MLP
    flops = n * (flops_fixed + DEPTH * per_layer)
    trans = n * DEPTH * (HEADS * SEQ * SEQ + MLP_DIM * SEQ + 4 * SEQ)  # exp + rsqrt/recip
    weight_bytes = (2 * SEQ * SEQ * 2                                  # A matrices (bf16)
                    + DEPTH * (3 * INNER * DIM + DIM * INNER
                               + MLP_DIM * DIM + DIM * MLP_DIM) * 2
                    + DEPTH * VEC_ROWS * 4)
    bytes_accessed = n * 2 * SEQ * DIM * 4 + weight_bytes
    return pl.CostEstimate(flops=flops, transcendentals=trans,
                           bytes_accessed=bytes_accessed)


@jax.jit
def vit_forward(img, params):
    n = img.shape[0]
    # spatial -> token layout (TRANSPOSED: blocks on rows, channel*freq on lanes):
    #   tokens[n, bi*BW + bj, c*64 + u*8 + v] = img[n, c, 8*bi + u, 8*bj + v]
    tokens = (img.reshape(n, C, BH, BLK, BW, BLK)
                 .transpose(0, 2, 4, 1, 3, 5)
                 .reshape(n, DIM, SEQ))

    weights = [params[k] for k in _WEIGHT_ORDER]
    in_specs = ([pl.BlockSpec((1, DIM, SEQ), lambda i: (i, 0, 0)),
                 _full_spec((SEQ, SEQ)),
                 _full_spec((SEQ, SEQ))]
                + [_full_spec(w.shape) for w in weights])

    out_tok = pl.pallas_call(
        _vit_kernel,
        out_shape=jax.ShapeDtypeStruct((n, DIM, SEQ), jnp.float32),
        grid=(n,),
        in_specs=in_specs,
        out_specs=pl.BlockSpec((1, DIM, SEQ), lambda i: (i, 0, 0)),
        compiler_params=pltpu.CompilerParams(dimension_semantics=("parallel",)),
        cost_estimate=_cost_estimate(n),
    )(tokens, A_FWD_T, A_BWD_T, *weights)

    # token -> spatial layout (inverse of the permutation above).
    out = (out_tok.reshape(n, BH, BW, C, BLK, BLK)
                  .transpose(0, 3, 1, 4, 2, 5)
                  .reshape(n, C, H, W))
    return out


if __name__ == "__main__":
    key = jax.random.PRNGKey(0)
    k_img, k_par = jax.random.split(key)
    img = jax.random.uniform(k_img, (N, C, H, W), dtype=jnp.float32)
    params = init_params(k_par)
    out = vit_forward(img, params)
    out = jax.block_until_ready(out)
    assert out.shape == (N, C, H, W), out.shape
    assert bool(jnp.all(jnp.isfinite(out)))
    print("KERNEL_OK")
</pallas_src>

<mosaic_0001>
module attributes {stable_mosaic.version = 11 : i64} {
  func.func @_vit_kernel(%arg0: i32, %arg1: memref<1x16x192xf32, #tpu.memory_space<vmem>>, %arg2: memref<192x192xbf16, #tpu.memory_space<vmem>>, %arg3: memref<192x192xbf16, #tpu.memory_space<vmem>>, %arg4: memref<2x48x16xbf16, #tpu.memory_space<vmem>>, %arg5: memref<2x2x16x8xbf16, #tpu.memory_space<vmem>>, %arg6: memref<2x32x16xbf16, #tpu.memory_space<vmem>>, %arg7: memref<2x16x32xbf16, #tpu.memory_space<vmem>>, %arg8: memref<2x128x1xf32, #tpu.memory_space<vmem>>, %arg9: memref<1x16x192xf32, #tpu.memory_space<vmem>>) attributes {dimension_semantics = [#tpu.dimension_semantics<parallel>], iteration_bounds = array<i64: 2>, scalar_prefetch = 0 : i64, scratch_operands = 0 : i64, tpu.core_type = #tpu.core_type<tc>, window_params = [{transform_indices = @transform_0, window_bounds = array<i64: 1, 16, 192>}, {pipeline_mode = #tpu.pipeline_mode<synchronous>, transform_indices = @transform_1, window_bounds = array<i64: 192, 192>}, {pipeline_mode = #tpu.pipeline_mode<synchronous>, transform_indices = @transform_2, window_bounds = array<i64: 192, 192>}, {pipeline_mode = #tpu.pipeline_mode<synchronous>, transform_indices = @transform_3, window_bounds = array<i64: 2, 48, 16>}, {pipeline_mode = #tpu.pipeline_mode<synchronous>, transform_indices = @transform_4, window_bounds = array<i64: 2, 2, 16, 8>}, {pipeline_mode = #tpu.pipeline_mode<synchronous>, transform_indices = @transform_5, window_bounds = array<i64: 2, 32, 16>}, {pipeline_mode = #tpu.pipeline_mode<synchronous>, transform_indices = @transform_6, window_bounds = array<i64: 2, 16, 32>}, {pipeline_mode = #tpu.pipeline_mode<synchronous>, transform_indices = @transform_7, window_bounds = array<i64: 2, 128, 1>}, {transform_indices = @transform_8, window_bounds = array<i64: 1, 16, 192>}]} {
    %c0 = arith.constant 0 : index
    %c0_0 = arith.constant 0 : index
    %c0_1 = arith.constant 0 : index
    %0 = vector.load %arg1[%c0, %c0_0, %c0_1] : memref<1x16x192xf32, #tpu.memory_space<vmem>>, vector<1x16x192xf32>
    %1 = vector.shape_cast %0 : vector<1x16x192xf32> to vector<16x192xf32>
    %2 = arith.truncf %1 : vector<16x192xf32> to vector<16x192xbf16>
    %c0_2 = arith.constant 0 : index
    %c0_3 = arith.constant 0 : index
    %3 = vector.load %arg2[%c0_2, %c0_3] : memref<192x192xbf16, #tpu.memory_space<vmem>>, vector<192x192xbf16>
    %cst = arith.constant dense<0.000000e+00> : vector<16x192xf32>
    %4 = tpu.matmul %2, %3, %cst {dimension_numbers = #tpu.dot_dimension_numbers<[1], [0], [0], [1], [0, 0, 1, 1], [], []>} : vector<16x192xbf16>, vector<192x192xbf16>, vector<16x192xf32> -> vector<16x192xf32>
    %c0_4 = arith.constant 0 : index
    %c0_5 = arith.constant 0 : index
    %c0_6 = arith.constant 0 : index
    %5 = vector.load %arg8[%c0_4, %c0_5, %c0_6] : memref<2x128x1xf32, #tpu.memory_space<vmem>>, vector<1x128x1xf32>
    %6 = vector.shape_cast %5 : vector<1x128x1xf32> to vector<128x1xf32>
    %7 = vector.extract_strided_slice %6 {offsets = [0, 0], sizes = [16, 1], strides = [1, 1]} : vector<128x1xf32> to vector<16x1xf32>
    %8 = vector.extract_strided_slice %6 {offsets = [16, 0], sizes = [16, 1], strides = [1, 1]} : vector<128x1xf32> to vector<16x1xf32>
    %9 = vector.extract_strided_slice %6 {offsets = [32, 0], sizes = [16, 1], strides = [1, 1]} : vector<128x1xf32> to vector<16x1xf32>
    %10 = vector.extract_strided_slice %6 {offsets = [48, 0], sizes = [16, 1], strides = [1, 1]} : vector<128x1xf32> to vector<16x1xf32>
    %11 = vector.extract_strided_slice %6 {offsets = [64, 0], sizes = [16, 1], strides = [1, 1]} : vector<128x1xf32> to vector<16x1xf32>
    %12 = vector.extract_strided_slice %6 {offsets = [80, 0], sizes = [16, 1], strides = [1, 1]} : vector<128x1xf32> to vector<16x1xf32>
    %13 = vector.extract_strided_slice %6 {offsets = [96, 0], sizes = [32, 1], strides = [1, 1]} : vector<128x1xf32> to vector<32x1xf32>
    %cst_7 = arith.constant dense<0.000000e+00> : vector<192xf32>
    %14 = vector.multi_reduction <add>, %4, %cst_7 [0] : vector<16x192xf32> to vector<192xf32>
    %15 = vector.shape_cast %14 : vector<192xf32> to vector<1x192xf32>
    %cst_8 = arith.constant 1.600000e+01 : f32
    %16 = vector.broadcast %cst_8 : f32 to vector<1x192xf32>
    %17 = arith.divf %15, %16 : vector<1x192xf32>
    %18 = vector.broadcast %17 : vector<1x192xf32> to vector<16x192xf32>
    %19 = arith.subf %4, %18 : vector<16x192xf32>
    %20 = arith.mulf %19, %19 : vector<16x192xf32>
    %cst_9 = arith.constant dense<0.000000e+00> : vector<192xf32>
    %21 = vector.multi_reduction <add>, %20, %cst_9 [0] : vector<16x192xf32> to vector<192xf32>
    %22 = vector.shape_cast %21 : vector<192xf32> to vector<1x192xf32>
    %cst_10 = arith.constant 1.600000e+01 : f32
    %23 = vector.broadcast %cst_10 : f32 to vector<1x192xf32>
    %24 = arith.divf %22, %23 : vector<1x192xf32>
    %25 = vector.broadcast %17 : vector<1x192xf32> to vector<16x192xf32>
    %26 = arith.subf %4, %25 : vector<16x192xf32>
    %cst_11 = arith.constant 9.99999974E-6 : f32
    %27 = vector.broadcast %cst_11 : f32 to vector<1x192xf32>
    %28 = arith.addf %24, %27 : vector<1x192xf32>
    %29 = math.rsqrt %28 : vector<1x192xf32>
    %30 = vector.broadcast %29 : vector<1x192xf32> to vector<16x192xf32>
    %31 = arith.mulf %26, %30 : vector<16x192xf32>
    %32 = vector.broadcast %7 : vector<16x1xf32> to vector<16x192xf32>
    %33 = arith.mulf %31, %32 : vector<16x192xf32>
    %34 = vector.broadcast %8 : vector<16x1xf32> to vector<16x192xf32>
    %35 = arith.addf %33, %34 : vector<16x192xf32>
    %c0_12 = arith.constant 0 : index
    %c0_13 = arith.constant 0 : index
    %c0_14 = arith.constant 0 : index
    %36 = vector.load %arg4[%c0_12, %c0_13, %c0_14] : memref<2x48x16xbf16, #tpu.memory_space<vmem>>, vector<1x48x16xbf16>
    %37 = vector.shape_cast %36 : vector<1x48x16xbf16> to vector<48x16xbf16>
    %38 = arith.truncf %35 : vector<16x192xf32> to vector<16x192xbf16>
    %cst_15 = arith.constant dense<0.000000e+00> : vector<48x192xf32>
    %39 = tpu.matmul %37, %38, %cst_15 {dimension_numbers = #tpu.dot_dimension_numbers<[1], [0], [0], [1], [0, 0, 1, 1], [], []>} : vector<48x16xbf16>, vector<16x192xbf16>, vector<48x192xf32> -> vector<48x192xf32>
    %cst_16 = arith.constant 0.000000e+00 : f32
    %40 = vector.broadcast %cst_16 : f32 to vector<16x192xf32>
    %41 = vector.extract_strided_slice %39 {offsets = [0, 0], sizes = [8, 192], strides = [1, 1]} : vector<48x192xf32> to vector<8x192xf32>
    %42 = arith.truncf %41 : vector<8x192xf32> to vector<8x192xbf16>
    %43 = vector.extract_strided_slice %39 {offsets = [16, 0], sizes = [8, 192], strides = [1, 1]} : vector<48x192xf32> to vector<8x192xf32>
    %44 = arith.truncf %43 : vector<8x192xf32> to vector<8x192xbf16>
    %45 = vector.extract_strided_slice %39 {offsets = [32, 0], sizes = [8, 192], strides = [1, 1]} : vector<48x192xf32> to vector<8x192xf32>
    %46 = arith.truncf %45 : vector<8x192xf32> to vector<8x192xbf16>
    %cst_17 = arith.constant dense<0.000000e+00> : vector<192x192xf32>
    %47 = tpu.matmul %42, %44, %cst_17 {dimension_numbers = #tpu.dot_dimension_numbers<[0], [0], [1], [1], [0, 1, 1, 1], [], []>} : vector<8x192xbf16>, vector<8x192xbf16>, vector<192x192xf32> -> vector<192x192xf32>
    %cst_18 = arith.constant dense<0xFF800000> : vector<192xf32>
    %48 = vector.multi_reduction <maximumf>, %47, %cst_18 [1] : vector<192x192xf32> to vector<192xf32>
    %49 = vector.shape_cast %48 : vector<192xf32> to vector<192x1xf32>
    %50 = vector.broadcast %49 : vector<192x1xf32> to vector<192x192xf32>
    %51 = arith.subf %47, %50 : vector<192x192xf32>
    %52 = math.exp %51 : vector<192x192xf32>
    %cst_19 = arith.constant dense<0.000000e+00> : vector<192xf32>
    %53 = vector.multi_reduction <add>, %52, %cst_19 [1] : vector<192x192xf32> to vector<192xf32>
    %54 = vector.shape_cast %53 : vector<192xf32> to vector<192x1xf32>
    %55 = tpu.reciprocal %54 {approx = true} : vector<192x1xf32> -> vector<192x1xf32>
    %56 = vector.broadcast %55 : vector<192x1xf32> to vector<192x192xf32>
    %57 = arith.mulf %52, %56 : vector<192x192xf32>
    %58 = arith.truncf %57 : vector<192x192xf32> to vector<192x192xbf16>
    %cst_20 = arith.constant dense<0.000000e+00> : vector<8x192xf32>
    %59 = tpu.matmul %46, %58, %cst_20 {dimension_numbers = #tpu.dot_dimension_numbers<[1], [1], [0], [0], [0, 0, 1, 0], [], []>} : vector<8x192xbf16>, vector<192x192xbf16>, vector<8x192xf32> -> vector<8x192xf32>
    %c0_21 = arith.constant 0 : index
    %c0_22 = arith.constant 0 : index
    %c0_23 = arith.constant 0 : index
    %c0_24 = arith.constant 0 : index
    %60 = vector.load %arg5[%c0_21, %c0_22, %c0_23, %c0_24] : memref<2x2x16x8xbf16, #tpu.memory_space<vmem>>, vector<1x1x16x8xbf16>
    %61 = vector.shape_cast %60 : vector<1x1x16x8xbf16> to vector<16x8xbf16>
    %62 = arith.truncf %59 : vector<8x192xf32> to vector<8x192xbf16>
    %cst_25 = arith.constant dense<0.000000e+00> : vector<16x192xf32>
    %63 = tpu.matmul %61, %62, %cst_25 {dimension_numbers = #tpu.dot_dimension_numbers<[1], [0], [0], [1], [0, 0, 1, 1], [], []>} : vector<16x8xbf16>, vector<8x192xbf16>, vector<16x192xf32> -> vector<16x192xf32>
    %64 = arith.addf %40, %63 : vector<16x192xf32>
    %65 = vector.extract_strided_slice %39 {offsets = [8, 0], sizes = [8, 192], strides = [1, 1]} : vector<48x192xf32> to vector<8x192xf32>
    %66 = arith.truncf %65 : vector<8x192xf32> to vector<8x192xbf16>
    %67 = vector.extract_strided_slice %39 {offsets = [24, 0], sizes = [8, 192], strides = [1, 1]} : vector<48x192xf32> to vector<8x192xf32>
    %68 = arith.truncf %67 : vector<8x192xf32> to vector<8x192xbf16>
    %69 = vector.extract_strided_slice %39 {offsets = [40, 0], sizes = [8, 192], strides = [1, 1]} : vector<48x192xf32> to vector<8x192xf32>
    %70 = arith.truncf %69 : vector<8x192xf32> to vector<8x192xbf16>
    %cst_26 = arith.constant dense<0.000000e+00> : vector<192x192xf32>
    %71 = tpu.matmul %66, %68, %cst_26 {dimension_numbers = #tpu.dot_dimension_numbers<[0], [0], [1], [1], [0, 1, 1, 1], [], []>} : vector<8x192xbf16>, vector<8x192xbf16>, vector<192x192xf32> -> vector<192x192xf32>
    %cst_27 = arith.constant dense<0xFF800000> : vector<192xf32>
    %72 = vector.multi_reduction <maximumf>, %71, %cst_27 [1] : vector<192x192xf32> to vector<192xf32>
    %73 = vector.shape_cast %72 : vector<192xf32> to vector<192x1xf32>
    %74 = vector.broadcast %73 : vector<192x1xf32> to vector<192x192xf32>
    %75 = arith.subf %71, %74 : vector<192x192xf32>
    %76 = math.exp %75 : vector<192x192xf32>
    %cst_28 = arith.constant dense<0.000000e+00> : vector<192xf32>
    %77 = vector.multi_reduction <add>, %76, %cst_28 [1] : vector<192x192xf32> to vector<192xf32>
    %78 = vector.shape_cast %77 : vector<192xf32> to vector<192x1xf32>
    %79 = tpu.reciprocal %78 {approx = true} : vector<192x1xf32> -> vector<192x1xf32>
    %80 = vector.broadcast %79 : vector<192x1xf32> to vector<192x192xf32>
    %81 = arith.mulf %76, %80 : vector<192x192xf32>
    %82 = arith.truncf %81 : vector<192x192xf32> to vector<192x192xbf16>
    %cst_29 = arith.constant dense<0.000000e+00> : vector<8x192xf32>
    %83 = tpu.matmul %70, %82, %cst_29 {dimension_numbers = #tpu.dot_dimension_numbers<[1], [1], [0], [0], [0, 0, 1, 0], [], []>} : vector<8x192xbf16>, vector<192x192xbf16>, vector<8x192xf32> -> vector<8x192xf32>
    %c0_30 = arith.constant 0 : index
    %c1 = arith.constant 1 : index
    %c0_31 = arith.constant 0 : index
    %c0_32 = arith.constant 0 : index
    %84 = vector.load %arg5[%c0_30, %c1, %c0_31, %c0_32] : memref<2x2x16x8xbf16, #tpu.memory_space<vmem>>, vector<1x1x16x8xbf16>
    %85 = vector.shape_cast %84 : vector<1x1x16x8xbf16> to vector<16x8xbf16>
    %86 = arith.truncf %83 : vector<8x192xf32> to vector<8x192xbf16>
    %cst_33 = arith.constant dense<0.000000e+00> : vector<16x192xf32>
    %87 = tpu.matmul %85, %86, %cst_33 {dimension_numbers = #tpu.dot_dimension_numbers<[1], [0], [0], [1], [0, 0, 1, 1], [], []>} : vector<16x8xbf16>, vector<8x192xbf16>, vector<16x192xf32> -> vector<16x192xf32>
    %88 = arith.addf %64, %87 : vector<16x192xf32>
    %89 = arith.addf %4, %88 : vector<16x192xf32>
    %90 = vector.broadcast %9 : vector<16x1xf32> to vector<16x192xf32>
    %91 = arith.addf %89, %90 : vector<16x192xf32>
    %cst_34 = arith.constant dense<0.000000e+00> : vector<192xf32>
    %92 = vector.multi_reduction <add>, %91, %cst_34 [0] : vector<16x192xf32> to vector<192xf32>
    %93 = vector.shape_cast %92 : vector<192xf32> to vector<1x192xf32>
    %cst_35 = arith.constant 1.600000e+01 : f32
    %94 = vector.broadcast %cst_35 : f32 to vector<1x192xf32>
    %95 = arith.divf %93, %94 : vector<1x192xf32>
    %96 = vector.broadcast %95 : vector<1x192xf32> to vector<16x192xf32>
    %97 = arith.subf %91, %96 : vector<16x192xf32>
    %98 = arith.mulf %97, %97 : vector<16x192xf32>
    %cst_36 = arith.constant dense<0.000000e+00> : vector<192xf32>
    %99 = vector.multi_reduction <add>, %98, %cst_36 [0] : vector<16x192xf32> to vector<192xf32>
    %100 = vector.shape_cast %99 : vector<192xf32> to vector<1x192xf32>
    %cst_37 = arith.constant 1.600000e+01 : f32
    %101 = vector.broadcast %cst_37 : f32 to vector<1x192xf32>
    %102 = arith.divf %100, %101 : vector<1x192xf32>
    %103 = vector.broadcast %95 : vector<1x192xf32> to vector<16x192xf32>
    %104 = arith.subf %91, %103 : vector<16x192xf32>
    %cst_38 = arith.constant 9.99999974E-6 : f32
    %105 = vector.broadcast %cst_38 : f32 to vector<1x192xf32>
    %106 = arith.addf %102, %105 : vector<1x192xf32>
    %107 = math.rsqrt %106 : vector<1x192xf32>
    %108 = vector.broadcast %107 : vector<1x192xf32> to vector<16x192xf32>
    %109 = arith.mulf %104, %108 : vector<16x192xf32>
    %110 = vector.broadcast %10 : vector<16x1xf32> to vector<16x192xf32>
    %111 = arith.mulf %109, %110 : vector<16x192xf32>
    %112 = vector.broadcast %11 : vector<16x1xf32> to vector<16x192xf32>
    %113 = arith.addf %111, %112 : vector<16x192xf32>
    %c0_39 = arith.constant 0 : index
    %c0_40 = arith.constant 0 : index
    %c0_41 = arith.constant 0 : index
    %114 = vector.load %arg6[%c0_39, %c0_40, %c0_41] : memref<2x32x16xbf16, #tpu.memory_space<vmem>>, vector<1x32x16xbf16>
    %115 = vector.shape_cast %114 : vector<1x32x16xbf16> to vector<32x16xbf16>
    %116 = arith.truncf %113 : vector<16x192xf32> to vector<16x192xbf16>
    %cst_42 = arith.constant dense<0.000000e+00> : vector<32x192xf32>
    %117 = tpu.matmul %115, %116, %cst_42 {dimension_numbers = #tpu.dot_dimension_numbers<[1], [0], [0], [1], [0, 0, 1, 1], [], []>} : vector<32x16xbf16>, vector<16x192xbf16>, vector<32x192xf32> -> vector<32x192xf32>
    %118 = vector.broadcast %13 : vector<32x1xf32> to vector<32x192xf32>
    %119 = arith.addf %117, %118 : vector<32x192xf32>
    %cst_43 = arith.constant 5.000000e-01 : f32
    %120 = vector.broadcast %cst_43 : f32 to vector<32x192xf32>
    %121 = arith.mulf %120, %119 : vector<32x192xf32>
    %cst_44 = arith.constant 0.707106769 : f32
    %122 = vector.broadcast %cst_44 : f32 to vector<32x192xf32>
    %123 = arith.mulf %119, %122 : vector<32x192xf32>
    %cst_45 = arith.constant 0.000000e+00 : f32
    %124 = vector.broadcast %cst_45 : f32 to vector<32x192xf32>
    %125 = arith.cmpf oge, %123, %124 : vector<32x192xf32>
    %cst_46 = arith.constant 1.000000e+00 : f32
    %cst_47 = arith.constant -1.000000e+00 : f32
    %126 = vector.broadcast %cst_46 : f32 to vector<32x192xf32>
    %127 = vector.broadcast %cst_47 : f32 to vector<32x192xf32>
    %128 = arith.select %125, %126, %127 : vector<32x192xi1>, vector<32x192xf32>
    %129 = math.absf %123 : vector<32x192xf32>
    %cst_48 = arith.constant 0.327591091 : f32
    %130 = vector.broadcast %cst_48 : f32 to vector<32x192xf32>
    %131 = arith.mulf %130, %129 : vector<32x192xf32>
    %cst_49 = arith.constant 1.000000e+00 : f32
    %132 = vector.broadcast %cst_49 : f32 to vector<32x192xf32>
    %133 = arith.addf %132, %131 : vector<32x192xf32>
    %cst_50 = arith.constant 1.000000e+00 : f32
    %134 = vector.broadcast %cst_50 : f32 to vector<32x192xf32>
    %135 = arith.divf %134, %133 : vector<32x192xf32>
    %cst_51 = arith.constant 1.06140542 : f32
    %136 = vector.broadcast %cst_51 : f32 to vector<32x192xf32>
    %137 = arith.mulf %136, %135 : vector<32x192xf32>
    %cst_52 = arith.constant -1.45315206 : f32
    %138 = vector.broadcast %cst_52 : f32 to vector<32x192xf32>
    %139 = arith.addf %137, %138 : vector<32x192xf32>
    %140 = arith.mulf %139, %135 : vector<32x192xf32>
    %cst_53 = arith.constant 1.42141378 : f32
    %141 = vector.broadcast %cst_53 : f32 to vector<32x192xf32>
    %142 = arith.addf %140, %141 : vector<32x192xf32>
    %143 = arith.mulf %142, %135 : vector<32x192xf32>
    %cst_54 = arith.constant -0.284496725 : f32
    %144 = vector.broadcast %cst_54 : f32 to vector<32x192xf32>
    %145 = arith.addf %143, %144 : vector<32x192xf32>
    %146 = arith.mulf %145, %135 : vector<32x192xf32>
    %cst_55 = arith.constant 0.254829586 : f32
    %147 = vector.broadcast %cst_55 : f32 to vector<32x192xf32>
    %148 = arith.addf %146, %147 : vector<32x192xf32>
    %149 = arith.mulf %148, %135 : vector<32x192xf32>
    %cst_56 = arith.constant 0.000000e+00 : f32
    %150 = vector.broadcast %cst_56 : f32 to vector<32x192xf32>
    %151 = arith.subf %150, %129 : vector<32x192xf32>
    %152 = arith.mulf %151, %129 : vector<32x192xf32>
    %153 = math.exp %152 : vector<32x192xf32>
    %154 = arith.mulf %149, %153 : vector<32x192xf32>
    %cst_57 = arith.constant 1.000000e+00 : f32
    %155 = vector.broadcast %cst_57 : f32 to vector<32x192xf32>
    %156 = arith.subf %155, %154 : vector<32x192xf32>
    %157 = arith.mulf %128, %156 : vector<32x192xf32>
    %cst_58 = arith.constant 1.000000e+00 : f32
    %158 = vector.broadcast %cst_58 : f32 to vector<32x192xf32>
    %159 = arith.addf %158, %157 : vector<32x192xf32>
    %160 = arith.mulf %121, %159 : vector<32x192xf32>
    %c0_59 = arith.constant 0 : index
    %c0_60 = arith.constant 0 : index
    %c0_61 = arith.constant 0 : index
    %161 = vector.load %arg7[%c0_59, %c0_60, %c0_61] : memref<2x16x32xbf16, #tpu.memory_space<vmem>>, vector<1x16x32xbf16>
    %162 = vector.shape_cast %161 : vector<1x16x32xbf16> to vector<16x32xbf16>
    %163 = arith.truncf %160 : vector<32x192xf32> to vector<32x192xbf16>
    %cst_62 = arith.constant dense<0.000000e+00> : vector<16x192xf32>
    %164 = tpu.matmul %162, %163, %cst_62 {dimension_numbers = #tpu.dot_dimension_numbers<[1], [0], [0], [1], [0, 0, 1, 1], [], []>} : vector<16x32xbf16>, vector<32x192xbf16>, vector<16x192xf32> -> vector<16x192xf32>
    %165 = arith.addf %91, %164 : vector<16x192xf32>
    %166 = vector.broadcast %12 : vector<16x1xf32> to vector<16x192xf32>
    %167 = arith.addf %165, %166 : vector<16x192xf32>
    %c1_63 = arith.constant 1 : index
    %c0_64 = arith.constant 0 : index
    %c0_65 = arith.constant 0 : index
    %168 = vector.load %arg8[%c1_63, %c0_64, %c0_65] : memref<2x128x1xf32, #tpu.memory_space<vmem>>, vector<1x128x1xf32>
    %169 = vector.shape_cast %168 : vector<1x128x1xf32> to vector<128x1xf32>
    %170 = vector.extract_strided_slice %169 {offsets = [0, 0], sizes = [16, 1], strides = [1, 1]} : vector<128x1xf32> to vector<16x1xf32>
    %171 = vector.extract_strided_slice %169 {offsets = [16, 0], sizes = [16, 1], strides = [1, 1]} : vector<128x1xf32> to vector<16x1xf32>
    %172 = vector.extract_strided_slice %169 {offsets = [32, 0], sizes = [16, 1], strides = [1, 1]} : vector<128x1xf32> to vector<16x1xf32>
    %173 = vector.extract_strided_slice %169 {offsets = [48, 0], sizes = [16, 1], strides = [1, 1]} : vector<128x1xf32> to vector<16x1xf32>
    %174 = vector.extract_strided_slice %169 {offsets = [64, 0], sizes = [16, 1], strides = [1, 1]} : vector<128x1xf32> to vector<16x1xf32>
    %175 = vector.extract_strided_slice %169 {offsets = [80, 0], sizes = [16, 1], strides = [1, 1]} : vector<128x1xf32> to vector<16x1xf32>
    %176 = vector.extract_strided_slice %169 {offsets = [96, 0], sizes = [32, 1], strides = [1, 1]} : vector<128x1xf32> to vector<32x1xf32>
    %cst_66 = arith.constant dense<0.000000e+00> : vector<192xf32>
    %177 = vector.multi_reduction <add>, %167, %cst_66 [0] : vector<16x192xf32> to vector<192xf32>
    %178 = vector.shape_cast %177 : vector<192xf32> to vector<1x192xf32>
    %cst_67 = arith.constant 1.600000e+01 : f32
    %179 = vector.broadcast %cst_67 : f32 to vector<1x192xf32>
    %180 = arith.divf %178, %179 : vector<1x192xf32>
    %181 = vector.broadcast %180 : vector<1x192xf32> to vector<16x192xf32>
    %182 = arith.subf %167, %181 : vector<16x192xf32>
    %183 = arith.mulf %182, %182 : vector<16x192xf32>
    %cst_68 = arith.constant dense<0.000000e+00> : vector<192xf32>
    %184 = vector.multi_reduction <add>, %183, %cst_68 [0] : vector<16x192xf32> to vector<192xf32>
    %185 = vector.shape_cast %184 : vector<192xf32> to vector<1x192xf32>
    %cst_69 = arith.constant 1.600000e+01 : f32
    %186 = vector.broadcast %cst_69 : f32 to vector<1x192xf32>
    %187 = arith.divf %185, %186 : vector<1x192xf32>
    %188 = vector.broadcast %180 : vector<1x192xf32> to vector<16x192xf32>
    %189 = arith.subf %167, %188 : vector<16x192xf32>
    %cst_70 = arith.constant 9.99999974E-6 : f32
    %190 = vector.broadcast %cst_70 : f32 to vector<1x192xf32>
    %191 = arith.addf %187, %190 : vector<1x192xf32>
    %192 = math.rsqrt %191 : vector<1x192xf32>
    %193 = vector.broadcast %192 : vector<1x192xf32> to vector<16x192xf32>
    %194 = arith.mulf %189, %193 : vector<16x192xf32>
    %195 = vector.broadcast %170 : vector<16x1xf32> to vector<16x192xf32>
    %196 = arith.mulf %194, %195 : vector<16x192xf32>
    %197 = vector.broadcast %171 : vector<16x1xf32> to vector<16x192xf32>
    %198 = arith.addf %196, %197 : vector<16x192xf32>
    %c1_71 = arith.constant 1 : index
    %c0_72 = arith.constant 0 : index
    %c0_73 = arith.constant 0 : index
    %199 = vector.load %arg4[%c1_71, %c0_72, %c0_73] : memref<2x48x16xbf16, #tpu.memory_space<vmem>>, vector<1x48x16xbf16>
    %200 = vector.shape_cast %199 : vector<1x48x16xbf16> to vector<48x16xbf16>
    %201 = arith.truncf %198 : vector<16x192xf32> to vector<16x192xbf16>
    %cst_74 = arith.constant dense<0.000000e+00> : vector<48x192xf32>
    %202 = tpu.matmul %200, %201, %cst_74 {dimension_numbers = #tpu.dot_dimension_numbers<[1], [0], [0], [1], [0, 0, 1, 1], [], []>} : vector<48x16xbf16>, vector<16x192xbf16>, vector<48x192xf32> -> vector<48x192xf32>
    %cst_75 = arith.constant 0.000000e+00 : f32
    %203 = vector.broadcast %cst_75 : f32 to vector<16x192xf32>
    %204 = vector.extract_strided_slice %202 {offsets = [0, 0], sizes = [8, 192], strides = [1, 1]} : vector<48x192xf32> to vector<8x192xf32>
    %205 = arith.truncf %204 : vector<8x192xf32> to vector<8x192xbf16>
    %206 = vector.extract_strided_slice %202 {offsets = [16, 0], sizes = [8, 192], strides = [1, 1]} : vector<48x192xf32> to vector<8x192xf32>
    %207 = arith.truncf %206 : vector<8x192xf32> to vector<8x192xbf16>
    %208 = vector.extract_strided_slice %202 {offsets = [32, 0], sizes = [8, 192], strides = [1, 1]} : vector<48x192xf32> to vector<8x192xf32>
    %209 = arith.truncf %208 : vector<8x192xf32> to vector<8x192xbf16>
    %cst_76 = arith.constant dense<0.000000e+00> : vector<192x192xf32>
    %210 = tpu.matmul %205, %207, %cst_76 {dimension_numbers = #tpu.dot_dimension_numbers<[0], [0], [1], [1], [0, 1, 1, 1], [], []>} : vector<8x192xbf16>, vector<8x192xbf16>, vector<192x192xf32> -> vector<192x192xf32>
    %cst_77 = arith.constant dense<0xFF800000> : vector<192xf32>
    %211 = vector.multi_reduction <maximumf>, %210, %cst_77 [1] : vector<192x192xf32> to vector<192xf32>
    %212 = vector.shape_cast %211 : vector<192xf32> to vector<192x1xf32>
    %213 = vector.broadcast %212 : vector<192x1xf32> to vector<192x192xf32>
    %214 = arith.subf %210, %213 : vector<192x192xf32>
    %215 = math.exp %214 : vector<192x192xf32>
    %cst_78 = arith.constant dense<0.000000e+00> : vector<192xf32>
    %216 = vector.multi_reduction <add>, %215, %cst_78 [1] : vector<192x192xf32> to vector<192xf32>
    %217 = vector.shape_cast %216 : vector<192xf32> to vector<192x1xf32>
    %218 = tpu.reciprocal %217 {approx = true} : vector<192x1xf32> -> vector<192x1xf32>
    %219 = vector.broadcast %218 : vector<192x1xf32> to vector<192x192xf32>
    %220 = arith.mulf %215, %219 : vector<192x192xf32>
    %221 = arith.truncf %220 : vector<192x192xf32> to vector<192x192xbf16>
    %cst_79 = arith.constant dense<0.000000e+00> : vector<8x192xf32>
    %222 = tpu.matmul %209, %221, %cst_79 {dimension_numbers = #tpu.dot_dimension_numbers<[1], [1], [0], [0], [0, 0, 1, 0], [], []>} : vector<8x192xbf16>, vector<192x192xbf16>, vector<8x192xf32> -> vector<8x192xf32>
    %c1_80 = arith.constant 1 : index
    %c0_81 = arith.constant 0 : index
    %c0_82 = arith.constant 0 : index
    %c0_83 = arith.constant 0 : index
    %223 = vector.load %arg5[%c1_80, %c0_81, %c0_82, %c0_83] : memref<2x2x16x8xbf16, #tpu.memory_space<vmem>>, vector<1x1x16x8xbf16>
    %224 = vector.shape_cast %223 : vector<1x1x16x8xbf16> to vector<16x8xbf16>
    %225 = arith.truncf %222 : vector<8x192xf32> to vector<8x192xbf16>
    %cst_84 = arith.constant dense<0.000000e+00> : vector<16x192xf32>
    %226 = tpu.matmul %224, %225, %cst_84 {dimension_numbers = #tpu.dot_dimension_numbers<[1], [0], [0], [1], [0, 0, 1, 1], [], []>} : vector<16x8xbf16>, vector<8x192xbf16>, vector<16x192xf32> -> vector<16x192xf32>
    %227 = arith.addf %203, %226 : vector<16x192xf32>
    %228 = vector.extract_strided_slice %202 {offsets = [8, 0], sizes = [8, 192], strides = [1, 1]} : vector<48x192xf32> to vector<8x192xf32>
    %229 = arith.truncf %228 : vector<8x192xf32> to vector<8x192xbf16>
    %230 = vector.extract_strided_slice %202 {offsets = [24, 0], sizes = [8, 192], strides = [1, 1]} : vector<48x192xf32> to vector<8x192xf32>
    %231 = arith.truncf %230 : vector<8x192xf32> to vector<8x192xbf16>
    %232 = vector.extract_strided_slice %202 {offsets = [40, 0], sizes = [8, 192], strides = [1, 1]} : vector<48x192xf32> to vector<8x192xf32>
    %233 = arith.truncf %232 : vector<8x192xf32> to vector<8x192xbf16>
    %cst_85 = arith.constant dense<0.000000e+00> : vector<192x192xf32>
    %234 = tpu.matmul %229, %231, %cst_85 {dimension_numbers = #tpu.dot_dimension_numbers<[0], [0], [1], [1], [0, 1, 1, 1], [], []>} : vector<8x192xbf16>, vector<8x192xbf16>, vector<192x192xf32> -> vector<192x192xf32>
    %cst_86 = arith.constant dense<0xFF800000> : vector<192xf32>
    %235 = vector.multi_reduction <maximumf>, %234, %cst_86 [1] : vector<192x192xf32> to vector<192xf32>
    %236 = vector.shape_cast %235 : vector<192xf32> to vector<192x1xf32>
    %237 = vector.broadcast %236 : vector<192x1xf32> to vector<192x192xf32>
    %238 = arith.subf %234, %237 : vector<192x192xf32>
    %239 = math.exp %238 : vector<192x192xf32>
    %cst_87 = arith.constant dense<0.000000e+00> : vector<192xf32>
    %240 = vector.multi_reduction <add>, %239, %cst_87 [1] : vector<192x192xf32> to vector<192xf32>
    %241 = vector.shape_cast %240 : vector<192xf32> to vector<192x1xf32>
    %242 = tpu.reciprocal %241 {approx = true} : vector<192x1xf32> -> vector<192x1xf32>
    %243 = vector.broadcast %242 : vector<192x1xf32> to vector<192x192xf32>
    %244 = arith.mulf %239, %243 : vector<192x192xf32>
    %245 = arith.truncf %244 : vector<192x192xf32> to vector<192x192xbf16>
    %cst_88 = arith.constant dense<0.000000e+00> : vector<8x192xf32>
    %246 = tpu.matmul %233, %245, %cst_88 {dimension_numbers = #tpu.dot_dimension_numbers<[1], [1], [0], [0], [0, 0, 1, 0], [], []>} : vector<8x192xbf16>, vector<192x192xbf16>, vector<8x192xf32> -> vector<8x192xf32>
    %c1_89 = arith.constant 1 : index
    %c1_90 = arith.constant 1 : index
    %c0_91 = arith.constant 0 : index
    %c0_92 = arith.constant 0 : index
    %247 = vector.load %arg5[%c1_89, %c1_90, %c0_91, %c0_92] : memref<2x2x16x8xbf16, #tpu.memory_space<vmem>>, vector<1x1x16x8xbf16>
    %248 = vector.shape_cast %247 : vector<1x1x16x8xbf16> to vector<16x8xbf16>
    %249 = arith.truncf %246 : vector<8x192xf32> to vector<8x192xbf16>
    %cst_93 = arith.constant dense<0.000000e+00> : vector<16x192xf32>
    %250 = tpu.matmul %248, %249, %cst_93 {dimension_numbers = #tpu.dot_dimension_numbers<[1], [0], [0], [1], [0, 0, 1, 1], [], []>} : vector<16x8xbf16>, vector<8x192xbf16>, vector<16x192xf32> -> vector<16x192xf32>
    %251 = arith.addf %227, %250 : vector<16x192xf32>
    %252 = arith.addf %167, %251 : vector<16x192xf32>
    %253 = vector.broadcast %172 : vector<16x1xf32> to vector<16x192xf32>
    %254 = arith.addf %252, %253 : vector<16x192xf32>
    %cst_94 = arith.constant dense<0.000000e+00> : vector<192xf32>
    %255 = vector.multi_reduction <add>, %254, %cst_94 [0] : vector<16x192xf32> to vector<192xf32>
    %256 = vector.shape_cast %255 : vector<192xf32> to vector<1x192xf32>
    %cst_95 = arith.constant 1.600000e+01 : f32
    %257 = vector.broadcast %cst_95 : f32 to vector<1x192xf32>
    %258 = arith.divf %256, %257 : vector<1x192xf32>
    %259 = vector.broadcast %258 : vector<1x192xf32> to vector<16x192xf32>
    %260 = arith.subf %254, %259 : vector<16x192xf32>
    %261 = arith.mulf %260, %260 : vector<16x192xf32>
    %cst_96 = arith.constant dense<0.000000e+00> : vector<192xf32>
    %262 = vector.multi_reduction <add>, %261, %cst_96 [0] : vector<16x192xf32> to vector<192xf32>
    %263 = vector.shape_cast %262 : vector<192xf32> to vector<1x192xf32>
    %cst_97 = arith.constant 1.600000e+01 : f32
    %264 = vector.broadcast %cst_97 : f32 to vector<1x192xf32>
    %265 = arith.divf %263, %264 : vector<1x192xf32>
    %266 = vector.broadcast %258 : vector<1x192xf32> to vector<16x192xf32>
    %267 = arith.subf %254, %266 : vector<16x192xf32>
    %cst_98 = arith.constant 9.99999974E-6 : f32
    %268 = vector.broadcast %cst_98 : f32 to vector<1x192xf32>
    %269 = arith.addf %265, %268 : vector<1x192xf32>
    %270 = math.rsqrt %269 : vector<1x192xf32>
    %271 = vector.broadcast %270 : vector<1x192xf32> to vector<16x192xf32>
    %272 = arith.mulf %267, %271 : vector<16x192xf32>
    %273 = vector.broadcast %173 : vector<16x1xf32> to vector<16x192xf32>
    %274 = arith.mulf %272, %273 : vector<16x192xf32>
    %275 = vector.broadcast %174 : vector<16x1xf32> to vector<16x192xf32>
    %276 = arith.addf %274, %275 : vector<16x192xf32>
    %c1_99 = arith.constant 1 : index
    %c0_100 = arith.constant 0 : index
    %c0_101 = arith.constant 0 : index
    %277 = vector.load %arg6[%c1_99, %c0_100, %c0_101] : memref<2x32x16xbf16, #tpu.memory_space<vmem>>, vector<1x32x16xbf16>
    %278 = vector.shape_cast %277 : vector<1x32x16xbf16> to vector<32x16xbf16>
    %279 = arith.truncf %276 : vector<16x192xf32> to vector<16x192xbf16>
    %cst_102 = arith.constant dense<0.000000e+00> : vector<32x192xf32>
    %280 = tpu.matmul %278, %279, %cst_102 {dimension_numbers = #tpu.dot_dimension_numbers<[1], [0], [0], [1], [0, 0, 1, 1], [], []>} : vector<32x16xbf16>, vector<16x192xbf16>, vector<32x192xf32> -> vector<32x192xf32>
    %281 = vector.broadcast %176 : vector<32x1xf32> to vector<32x192xf32>
    %282 = arith.addf %280, %281 : vector<32x192xf32>
    %cst_103 = arith.constant 5.000000e-01 : f32
    %283 = vector.broadcast %cst_103 : f32 to vector<32x192xf32>
    %284 = arith.mulf %283, %282 : vector<32x192xf32>
    %cst_104 = arith.constant 0.707106769 : f32
    %285 = vector.broadcast %cst_104 : f32 to vector<32x192xf32>
    %286 = arith.mulf %282, %285 : vector<32x192xf32>
    %cst_105 = arith.constant 0.000000e+00 : f32
    %287 = vector.broadcast %cst_105 : f32 to vector<32x192xf32>
    %288 = arith.cmpf oge, %286, %287 : vector<32x192xf32>
    %cst_106 = arith.constant 1.000000e+00 : f32
    %cst_107 = arith.constant -1.000000e+00 : f32
    %289 = vector.broadcast %cst_106 : f32 to vector<32x192xf32>
    %290 = vector.broadcast %cst_107 : f32 to vector<32x192xf32>
    %291 = arith.select %288, %289, %290 : vector<32x192xi1>, vector<32x192xf32>
    %292 = math.absf %286 : vector<32x192xf32>
    %cst_108 = arith.constant 0.327591091 : f32
    %293 = vector.broadcast %cst_108 : f32 to vector<32x192xf32>
    %294 = arith.mulf %293, %292 : vector<32x192xf32>
    %cst_109 = arith.constant 1.000000e+00 : f32
    %295 = vector.broadcast %cst_109 : f32 to vector<32x192xf32>
    %296 = arith.addf %295, %294 : vector<32x192xf32>
    %cst_110 = arith.constant 1.000000e+00 : f32
    %297 = vector.broadcast %cst_110 : f32 to vector<32x192xf32>
    %298 = arith.divf %297, %296 : vector<32x192xf32>
    %cst_111 = arith.constant 1.06140542 : f32
    %299 = vector.broadcast %cst_111 : f32 to vector<32x192xf32>
    %300 = arith.mulf %299, %298 : vector<32x192xf32>
    %cst_112 = arith.constant -1.45315206 : f32
    %301 = vector.broadcast %cst_112 : f32 to vector<32x192xf32>
    %302 = arith.addf %300, %301 : vector<32x192xf32>
    %303 = arith.mulf %302, %298 : vector<32x192xf32>
    %cst_113 = arith.constant 1.42141378 : f32
    %304 = vector.broadcast %cst_113 : f32 to vector<32x192xf32>
    %305 = arith.addf %303, %304 : vector<32x192xf32>
    %306 = arith.mulf %305, %298 : vector<32x192xf32>
    %cst_114 = arith.constant -0.284496725 : f32
    %307 = vector.broadcast %cst_114 : f32 to vector<32x192xf32>
    %308 = arith.addf %306, %307 : vector<32x192xf32>
    %309 = arith.mulf %308, %298 : vector<32x192xf32>
    %cst_115 = arith.constant 0.254829586 : f32
    %310 = vector.broadcast %cst_115 : f32 to vector<32x192xf32>
    %311 = arith.addf %309, %310 : vector<32x192xf32>
    %312 = arith.mulf %311, %298 : vector<32x192xf32>
    %cst_116 = arith.constant 0.000000e+00 : f32
    %313 = vector.broadcast %cst_116 : f32 to vector<32x192xf32>
    %314 = arith.subf %313, %292 : vector<32x192xf32>
    %315 = arith.mulf %314, %292 : vector<32x192xf32>
    %316 = math.exp %315 : vector<32x192xf32>
    %317 = arith.mulf %312, %316 : vector<32x192xf32>
    %cst_117 = arith.constant 1.000000e+00 : f32
    %318 = vector.broadcast %cst_117 : f32 to vector<32x192xf32>
    %319 = arith.subf %318, %317 : vector<32x192xf32>
    %320 = arith.mulf %291, %319 : vector<32x192xf32>
    %cst_118 = arith.constant 1.000000e+00 : f32
    %321 = vector.broadcast %cst_118 : f32 to vector<32x192xf32>
    %322 = arith.addf %321, %320 : vector<32x192xf32>
    %323 = arith.mulf %284, %322 : vector<32x192xf32>
    %c1_119 = arith.constant 1 : index
    %c0_120 = arith.constant 0 : index
    %c0_121 = arith.constant 0 : index
    %324 = vector.load %arg7[%c1_119, %c0_120, %c0_121] : memref<2x16x32xbf16, #tpu.memory_space<vmem>>, vector<1x16x32xbf16>
    %325 = vector.shape_cast %324 : vector<1x16x32xbf16> to vector<16x32xbf16>
    %326 = arith.truncf %323 : vector<32x192xf32> to vector<32x192xbf16>
    %cst_122 = arith.constant dense<0.000000e+00> : vector<16x192xf32>
    %327 = tpu.matmul %325, %326, %cst_122 {dimension_numbers = #tpu.dot_dimension_numbers<[1], [0], [0], [1], [0, 0, 1, 1], [], []>} : vector<16x32xbf16>, vector<32x192xbf16>, vector<16x192xf32> -> vector<16x192xf32>
    %328 = arith.addf %254, %327 : vector<16x192xf32>
    %329 = vector.broadcast %175 : vector<16x1xf32> to vector<16x192xf32>
    %330 = arith.addf %328, %329 : vector<16x192xf32>
    %331 = arith.truncf %330 : vector<16x192xf32> to vector<16x192xbf16>
    %c0_123 = arith.constant 0 : index
    %c0_124 = arith.constant 0 : index
    %332 = vector.load %arg3[%c0_123, %c0_124] : memref<192x192xbf16, #tpu.memory_space<vmem>>, vector<192x192xbf16>
    %cst_125 = arith.constant dense<0.000000e+00> : vector<16x192xf32>
    %333 = tpu.matmul %331, %332, %cst_125 {dimension_numbers = #tpu.dot_dimension_numbers<[1], [0], [0], [1], [0, 0, 1, 1], [], []>} : vector<16x192xbf16>, vector<192x192xbf16>, vector<16x192xf32> -> vector<16x192xf32>
    %c0_126 = arith.constant 0 : index
    %c0_127 = arith.constant 0 : index
    %c0_128 = arith.constant 0 : index
    %334 = vector.load %arg9[%c0_126, %c0_127, %c0_128] : memref<1x16x192xf32, #tpu.memory_space<vmem>>, vector<1x16x192xf32>
    %335 = vector.shape_cast %334 : vector<1x16x192xf32> to vector<16x192xf32>
    %336 = vector.shape_cast %333 : vector<16x192xf32> to vector<1x16x192xf32>
    tpu.vector_store %arg9[%c0_126, %c0_127, %c0_128], %336 {strides = array<i32>} : memref<1x16x192xf32, #tpu.memory_space<vmem>>, vector<1x16x192xf32>,
    return
  }
  func.func @transform_0(%arg0: i32) -> (i32, i32, i32) {
    %c0_i32 = arith.constant 0 : i32
    %c0_i32_0 = arith.constant 0 : i32
    %c0_i32_1 = arith.constant 0 : i32
    return %arg0, %c0_i32, %c0_i32_0 : i32, i32, i32
  }
  func.func @transform_1(%arg0: i32) -> (i32, i32) {
    %c0_i32 = arith.constant 0 : i32
    %c0_i32_0 = arith.constant 0 : i32
    %c0_i32_1 = arith.constant 0 : i32
    return %c0_i32, %c0_i32_0 : i32, i32
  }
  func.func @transform_2(%arg0: i32) -> (i32, i32) {
    %c0_i32 = arith.constant 0 : i32
    %c0_i32_0 = arith.constant 0 : i32
    %c0_i32_1 = arith.constant 0 : i32
    return %c0_i32, %c0_i32_0 : i32, i32
  }
  func.func @transform_3(%arg0: i32) -> (i32, i32, i32) {
    %c0_i32 = arith.constant 0 : i32
    %c0_i32_0 = arith.constant 0 : i32
    %c0_i32_1 = arith.constant 0 : i32
    %c0_i32_2 = arith.constant 0 : i32
    return %c0_i32, %c0_i32_0, %c0_i32_1 : i32, i32, i32
  }
  func.func @transform_4(%arg0: i32) -> (i32, i32, i32, i32) {
    %c0_i32 = arith.constant 0 : i32
    %c0_i32_0 = arith.constant 0 : i32
    %c0_i32_1 = arith.constant 0 : i32
    %c0_i32_2 = arith.constant 0 : i32
    %c0_i32_3 = arith.constant 0 : i32
    return %c0_i32, %c0_i32_0, %c0_i32_1, %c0_i32_2 : i32, i32, i32, i32
  }
  func.func @transform_5(%arg0: i32) -> (i32, i32, i32) {
    %c0_i32 = arith.constant 0 : i32
    %c0_i32_0 = arith.constant 0 : i32
    %c0_i32_1 = arith.constant 0 : i32
    %c0_i32_2 = arith.constant 0 : i32
    return %c0_i32, %c0_i32_0, %c0_i32_1 : i32, i32, i32
  }
  func.func @transform_6(%arg0: i32) -> (i32, i32, i32) {
    %c0_i32 = arith.constant 0 : i32
    %c0_i32_0 = arith.constant 0 : i32
    %c0_i32_1 = arith.constant 0 : i32
    %c0_i32_2 = arith.constant 0 : i32
    return %c0_i32, %c0_i32_0, %c0_i32_1 : i32, i32, i32
  }
  func.func @transform_7(%arg0: i32) -> (i32, i32, i32) {
    %c0_i32 = arith.constant 0 : i32
    %c0_i32_0 = arith.constant 0 : i32
    %c0_i32_1 = arith.constant 0 : i32
    %c0_i32_2 = arith.constant 0 : i32
    return %c0_i32, %c0_i32_0, %c0_i32_1 : i32, i32, i32
  }
  func.func @transform_8(%arg0: i32) -> (i32, i32, i32) {
    %c0_i32 = arith.constant 0 : i32
    %c0_i32_0 = arith.constant 0 : i32
    %c0_i32_1 = arith.constant 0 : i32
    return %arg0, %c0_i32, %c0_i32_0 : i32, i32, i32
  }
}

</mosaic_0001>

<llo_original>
// kernel: vit_forward.1
$region0: #{vit_forward.1}
  #allocation0 [shape = 'u32[]', space=smem, size = 0x4, offset = 0x4, fixed_abs, tag = 'smem constant byte address 0x4 - core index']
  #allocation1 [shape = 'u32[144,128]{1,0:T(1,128)}', space=vmem, size = 0x12000, scoped, tag = 'internal scratch']
  %s0 = inlined_call_operand.vmem [shape: f32[2,16,192], index: 0, kind: input, shape index: {}]
  %s1 = inlined_call_operand.vmem [shape: bf16[192,192], index: 1, kind: input, shape index: {}]
  %s2 = inlined_call_operand.vmem [shape: bf16[192,192], index: 2, kind: input, shape index: {}]
  %s3 = inlined_call_operand.vmem [shape: bf16[2,48,16], index: 3, kind: input, shape index: {}]
  %s4 = inlined_call_operand.vmem [shape: bf16[2,2,16,8], index: 4, kind: input, shape index: {}]
  %s5 = inlined_call_operand.vmem [shape: bf16[2,32,16], index: 5, kind: input, shape index: {}]
  %s6 = inlined_call_operand.vmem [shape: bf16[2,16,32], index: 6, kind: input, shape index: {}]
  %s7 = inlined_call_operand.vmem [shape: f32[2,128,1], index: 7, kind: input, shape index: {}]
  %s8 = inlined_call_operand.vmem [shape: f32[2,16,192], index: 8, kind: output, shape index: {}]
  %s9 = sld [smem:[#allocation0]]
  $region65: #{vit_forward.1} parent=0
    _
  %s11 = ssub.s32 1, %s9
  %s12 = scalar_select 0, %s11, %s9
  loop: start=0, step=1, limit=4
  $region2: #{vit_forward.1} parent=0 // loop_pre_header
    _
  $region3: #{vit_forward.1} parent=0 // loop_header
    %s14 = sphi 0, %s18
    %p15 = scmp.ge.s32.totalorder %s14, 4
    %s24 = sphi 0, %s26
    %s27 = sphi 0, %s24
    %s28 = sphi 0, %s27
    %s44 = sphi 0, %s28
    %s48 = sphi 0, %s48
    %s50 = sphi 0, %s48
    %s51 = sphi 0, %s50
    %s65 = sphi 0, %s51
    %s69 = sphi 0, %s69
    %s71 = sphi 0, %s69
    %s72 = sphi 0, %s71
    %s86 = sphi 0, %s72
    %s90 = sphi 0, %s90
    %s92 = sphi 0, %s90
    %s93 = sphi 0, %s92
    %s107 = sphi 0, %s93
    %s111 = sphi 0, %s111
    %s113 = sphi 0, %s111
    %s114 = sphi 0, %s113
    %s128 = sphi 0, %s114
    %s132 = sphi 0, %s132
    %s134 = sphi 0, %s132
    %s135 = sphi 0, %s134
    %s149 = sphi 0, %s135
    %s153 = sphi 0, %s153
    %s155 = sphi 0, %s153
    %s156 = sphi 0, %s155
    %s170 = sphi 0, %s156
    %s174 = sphi 0, %s174
    %s176 = sphi 0, %s174
    %s177 = sphi 0, %s176
    %s191 = sphi 0, %s177
    %s197 = sphi 0, %s199
    %s200 = sphi 0, %s197
    %s201 = sphi 0, %s200
    %s217 = sphi 0, %s201
  $region4: #{vit_forward.1} parent=0 // loop_header_branch
    %17 = sbr.rel (%p15) target = $region8
  $region5: #{vit_forward.1} parent=0 // loop_body
    %s19 = ssub.s32 %s14, 1
    %s20 = ssub.s32 %s14, 2
    %s21 = sadd.s32 %s14, 1
    %s22 = ssub.s32 %s14, %s21
    %p23 = scmp.eq.s32.totalorder %s22, 0
    %s25 = sadd.s32 %s24, 1
    %s26 = scalar_select %p23, %s24, %s25
    %p29 = pneg %p23
    %p30 = scmp.eq.s32.totalorder %s14, 1
    %p31 = por %p29, %p30
    %p32 = scmp.ne.s32.totalorder %s24, %s27
    %p33 = scmp.eq.s32.totalorder %s14, 0
    %p34 = por %p32, %p33
    %p35 = scmp.ne.s32.totalorder %s24, %s27
    %p36 = scmp.eq.s32.totalorder %s19, 1
    %p37 = por %p35, %p36
    %p38 = scmp.ne.s32.totalorder %s27, %s28
    %p39 = scmp.eq.s32.totalorder %s19, 0
    %p40 = por %p38, %p39
    %p41 = scmp.ne.s32.totalorder %s27, %s28
    %p42 = scmp.eq.s32.totalorder %s20, 1
    %p43 = por %p41, %p42
    %p45 = scmp.ne.s32.totalorder %s28, %s44
    %p46 = scmp.eq.s32.totalorder %s20, 0
    %p47 = por %p45, %p46
    %s49 = sadd.s32 %s48, 1
    %p52 = scmp.eq.s32.totalorder %s14, 1
    %p53 = scmp.ne.s32.totalorder %s48, %s50
    %p54 = scmp.eq.s32.totalorder %s14, 0
    %p55 = por %p53, %p54
    %p56 = scmp.ne.s32.totalorder %s48, %s50
    %p57 = scmp.eq.s32.totalorder %s19, 1
    %p58 = por %p56, %p57
    %p59 = scmp.ne.s32.totalorder %s50, %s51
    %p60 = scmp.eq.s32.totalorder %s19, 0
    %p61 = por %p59, %p60
    %p62 = scmp.ne.s32.totalorder %s50, %s51
    %p63 = scmp.eq.s32.totalorder %s20, 1
    %p64 = por %p62, %p63
    %p66 = scmp.ne.s32.totalorder %s51, %s65
    %p67 = scmp.eq.s32.totalorder %s20, 0
    %p68 = por %p66, %p67
    %s70 = sadd.s32 %s69, 1
    %p73 = scmp.eq.s32.totalorder %s14, 1
    %p74 = scmp.ne.s32.totalorder %s69, %s71
    %p75 = scmp.eq.s32.totalorder %s14, 0
    %p76 = por %p74, %p75
    %p77 = scmp.ne.s32.totalorder %s69, %s71
    %p78 = scmp.eq.s32.totalorder %s19, 1
    %p79 = por %p77, %p78
    %p80 = scmp.ne.s32.totalorder %s71, %s72
    %p81 = scmp.eq.s32.totalorder %s19, 0
    %p82 = por %p80, %p81
    %p83 = scmp.ne.s32.totalorder %s71, %s72
    %p84 = scmp.eq.s32.totalorder %s20, 1
    %p85 = por %p83, %p84
    %p87 = scmp.ne.s32.totalorder %s72, %s86
    %p88 = scmp.eq.s32.totalorder %s20, 0
    %p89 = por %p87, %p88
    %s91 = sadd.s32 %s90, 1
    %p94 = scmp.eq.s32.totalorder %s14, 1
    %p95 = scmp.ne.s32.totalorder %s90, %s92
    %p96 = scmp.eq.s32.totalorder %s14, 0
    %p97 = por %p95, %p96
    %p98 = scmp.ne.s32.totalorder %s90, %s92
    %p99 = scmp.eq.s32.totalorder %s19, 1
    %p100 = por %p98, %p99
    %p101 = scmp.ne.s32.totalorder %s92, %s93
    %p102 = scmp.eq.s32.totalorder %s19, 0
    %p103 = por %p101, %p102
    %p104 = scmp.ne.s32.totalorder %s92, %s93
    %p105 = scmp.eq.s32.totalorder %s20, 1
    %p106 = por %p104, %p105
    %p108 = scmp.ne.s32.totalorder %s93, %s107
    %p109 = scmp.eq.s32.totalorder %s20, 0
    %p110 = por %p108, %p109
    %s112 = sadd.s32 %s111, 1
    %p115 = scmp.eq.s32.totalorder %s14, 1
    %p116 = scmp.ne.s32.totalorder %s111, %s113
    %p117 = scmp.eq.s32.totalorder %s14, 0
    %p118 = por %p116, %p117
    %p119 = scmp.ne.s32.totalorder %s111, %s113
    %p120 = scmp.eq.s32.totalorder %s19, 1
    %p121 = por %p119, %p120
    %p122 = scmp.ne.s32.totalorder %s113, %s114
    %p123 = scmp.eq.s32.totalorder %s19, 0
    %p124 = por %p122, %p123
    %p125 = scmp.ne.s32.totalorder %s113, %s114
    %p126 = scmp.eq.s32.totalorder %s20, 1
    %p127 = por %p125, %p126
    %p129 = scmp.ne.s32.totalorder %s114, %s128
    %p130 = scmp.eq.s32.totalorder %s20, 0
    %p131 = por %p129, %p130
    %s133 = sadd.s32 %s132, 1
    %p136 = scmp.eq.s32.totalorder %s14, 1
    %p137 = scmp.ne.s32.totalorder %s132, %s134
    %p138 = scmp.eq.s32.totalorder %s14, 0
    %p139 = por %p137, %p138
    %p140 = scmp.ne.s32.totalorder %s132, %s134
    %p141 = scmp.eq.s32.totalorder %s19, 1
    %p142 = por %p140, %p141
    %p143 = scmp.ne.s32.totalorder %s134, %s135
    %p144 = scmp.eq.s32.totalorder %s19, 0
    %p145 = por %p143, %p144
    %p146 = scmp.ne.s32.totalorder %s134, %s135
    %p147 = scmp.eq.s32.totalorder %s20, 1
    %p148 = por %p146, %p147
    %p150 = scmp.ne.s32.totalorder %s135, %s149
    %p151 = scmp.eq.s32.totalorder %s20, 0
    %p152 = por %p150, %p151
    %s154 = sadd.s32 %s153, 1
    %p157 = scmp.eq.s32.totalorder %s14, 1
    %p158 = scmp.ne.s32.totalorder %s153, %s155
    %p159 = scmp.eq.s32.totalorder %s14, 0
    %p160 = por %p158, %p159
    %p161 = scmp.ne.s32.totalorder %s153, %s155
    %p162 = scmp.eq.s32.totalorder %s19, 1
    %p163 = por %p161, %p162
    %p164 = scmp.ne.s32.totalorder %s155, %s156
    %p165 = scmp.eq.s32.totalorder %s19, 0
    %p166 = por %p164, %p165
    %p167 = scmp.ne.s32.totalorder %s155, %s156
    %p168 = scmp.eq.s32.totalorder %s20, 1
    %p169 = por %p167, %p168
    %p171 = scmp.ne.s32.totalorder %s156, %s170
    %p172 = scmp.eq.s32.totalorder %s20, 0
    %p173 = por %p171, %p172
    %s175 = sadd.s32 %s174, 1
    %p178 = scmp.eq.s32.totalorder %s14, 1
    %p179 = scmp.ne.s32.totalorder %s174, %s176
    %p180 = scmp.eq.s32.totalorder %s14, 0
    %p181 = por %p179, %p180
    %p182 = scmp.ne.s32.totalorder %s174, %s176
    %p183 = scmp.eq.s32.totalorder %s19, 1
    %p184 = por %p182, %p183
    %p185 = scmp.ne.s32.totalorder %s176, %s177
    %p186 = scmp.eq.s32.totalorder %s19, 0
    %p187 = por %p185, %p186
    %p188 = scmp.ne.s32.totalorder %s176, %s177
    %p189 = scmp.eq.s32.totalorder %s20, 1
    %p190 = por %p188, %p189
    %p192 = scmp.ne.s32.totalorder %s177, %s191
    %p193 = scmp.eq.s32.totalorder %s20, 0
    %p194 = por %p192, %p193
    %s195 = ssub.s32 %s14, %s21
    %p196 = scmp.eq.s32.totalorder %s195, 0
    %s198 = sadd.s32 %s197, 1
    %s199 = scalar_select %p196, %s197, %s198
    %p202 = pneg %p196
    %p203 = scmp.eq.s32.totalorder %s14, 1
    %p204 = por %p202, %p203
    %p205 = scmp.ne.s32.totalorder %s197, %s200
    %p206 = scmp.eq.s32.totalorder %s14, 0
    %p207 = por %p205, %p206
    %p208 = scmp.ne.s32.totalorder %s197, %s200
    %p209 = scmp.eq.s32.totalorder %s19, 1
    %p210 = por %p208, %p209
    %p211 = scmp.ne.s32.totalorder %s200, %s201
    %p212 = scmp.eq.s32.totalorder %s19, 0
    %p213 = por %p211, %p212
    %p214 = scmp.ne.s32.totalorder %s200, %s201
    %p215 = scmp.eq.s32.totalorder %s20, 1
    %p216 = por %p214, %p215
    %p218 = scmp.ne.s32.totalorder %s201, %s217
    %p219 = scmp.eq.s32.totalorder %s20, 0
    %p220 = por %p218, %p219
    %p221 = scmp.le.s32.totalorder 1, %s14
    %p222 = scmp.lt.s32.totalorder %s14, 3
    %p223 = pnand %p221, %p222
    %p224 = pneg %p223
    // Predicated region
    $region9: #{vit_forward.1} parent=5 // pred_check
      _
    $region10: #{vit_forward.1} parent=5 // pred_check_branch
      %226 = sbr.rel (%p223) target = $region12
    $region11: #{vit_forward.1} parent=5 // pred_region
      %s227 = ssub.s32 %s14, 1
      // Predicated region
      $region13: #{vit_forward.1} parent=11 // pred_check
        %p228 = pneg %p61
      $region14: #{vit_forward.1} parent=11 // pred_check_branch
        %230 = sbr.rel (%p228) target = $region16
      $region15: #{vit_forward.1} parent=11 // pred_region
        _
      $region16: #{vit_forward.1} parent=11 // pred_fallthru
        _
      // Predicated region
      $region17: #{vit_forward.1} parent=11 // pred_check
        %p231 = pneg %p82
      $region18: #{vit_forward.1} parent=11 // pred_check_branch
        %233 = sbr.rel (%p231) target = $region20
      $region19: #{vit_forward.1} parent=11 // pred_region
        _
      $region20: #{vit_forward.1} parent=11 // pred_fallthru
        _
      // Predicated region
      $region21: #{vit_forward.1} parent=11 // pred_check
        %p234 = pneg %p103
      $region22: #{vit_forward.1} parent=11 // pred_check_branch
        %236 = sbr.rel (%p234) target = $region24
      $region23: #{vit_forward.1} parent=11 // pred_region
        _
      $region24: #{vit_forward.1} parent=11 // pred_fallthru
        _
      // Predicated region
      $region25: #{vit_forward.1} parent=11 // pred_check
        %p237 = pneg %p124
      $region26: #{vit_forward.1} parent=11 // pred_check_branch
        %239 = sbr.rel (%p237) target = $region28
      $region27: #{vit_forward.1} parent=11 // pred_region
        _
      $region28: #{vit_forward.1} parent=11 // pred_fallthru
        _
      // Predicated region
      $region29: #{vit_forward.1} parent=11 // pred_check
        %p240 = pneg %p145
      $region30: #{vit_forward.1} parent=11 // pred_check_branch
        %242 = sbr.rel (%p240) target = $region32
      $region31: #{vit_forward.1} parent=11 // pred_region
        _
      $region32: #{vit_forward.1} parent=11 // pred_fallthru
        _
      // Predicated region
      $region33: #{vit_forward.1} parent=11 // pred_check
        %p243 = pneg %p166
      $region34: #{vit_forward.1} parent=11 // pred_check_branch
        %245 = sbr.rel (%p243) target = $region36
      $region35: #{vit_forward.1} parent=11 // pred_region
        _
      $region36: #{vit_forward.1} parent=11 // pred_fallthru
        _
      // Predicated region
      $region37: #{vit_forward.1} parent=11 // pred_check
        %p246 = pneg %p187
      $region38: #{vit_forward.1} parent=11 // pred_check_branch
        %248 = sbr.rel (%p246) target = $region40
      $region39: #{vit_forward.1} parent=11 // pred_region
        _
      $region40: #{vit_forward.1} parent=11 // pred_fallthru
        _
    $region12: #{vit_forward.1} parent=5 // pred_fallthru
      _
    %p249 = scmp.lt.s32.totalorder %s14, 2
    // Predicated region
    $region41: #{vit_forward.1} parent=5 // pred_check
      %p250 = pneg %p249
    $region42: #{vit_forward.1} parent=5 // pred_check_branch
      %252 = sbr.rel (%p250) target = $region44
    $region43: #{vit_forward.1} parent=5 // pred_region
      // Predicated region
      $region45: #{vit_forward.1} parent=43 // pred_check
        %p253 = pneg %p34
      $region46: #{vit_forward.1} parent=43 // pred_check_branch
        %255 = sbr.rel (%p253) target = $region48
      $region47: #{vit_forward.1} parent=43 // pred_region
        %p256 = scmp.lt.s32.totalorder %s14, 1
        %s257 = scalar_select %p256, %s14, 1
        %s258 = smul.addr %s257, 4
        %s259 = smul.addr %s258, 8
        %s260 = scalar_lea.vmem %s0, %s259
      $region48: #{vit_forward.1} parent=43 // pred_fallthru
        _
    $region44: #{vit_forward.1} parent=5 // pred_fallthru
      _
    %p261 = scmp.le.s32.totalorder 1, %s14
    %p262 = scmp.lt.s32.totalorder %s14, 3
    %p263 = pnand %p261, %p262
    %p264 = pneg %p263
    // Predicated region
    $region49: #{vit_forward.1} parent=5 // pred_check
      _
    $region50: #{vit_forward.1} parent=5 // pred_check_branch
      %266 = sbr.rel (%p263) target = $region52
    $region51: #{vit_forward.1} parent=5 // pred_region
      %s267 = ssub.s32 %s14, 1
      %p268 = scmp.lt.s32.totalorder %s19, 1
      %s269 = scalar_select %p268, %s19, 1
      %s270 = smul.addr %s269, 4
      %s271 = smul.addr %s270, 8
      %s272 = scalar_lea.vmem %s0, %s271
      %p273 = pneg %p40
      %p274 = pneg %p37
      %p275 = pneg %p61
      %p276 = pneg %p58
      %p277 = pneg %p82
      %p278 = pneg %p79
      %p279 = pneg %p103
      %p280 = pneg %p100
      %p281 = pneg %p124
      %p282 = pneg %p121
      %p283 = pneg %p145
      %p284 = pneg %p142
      %p285 = pneg %p166
      %p286 = pneg %p163
      %p287 = pneg %p187
      %p288 = pneg %p184
      %p289 = pneg %p213
      %p290 = pneg %p210
      %p291 = scmp.lt.s32.totalorder %s19, 1
      %s292 = scalar_select %p291, %s19, 1
      %s293 = smul.addr %s292, 4
      %s294 = smul.addr %s293, 8
      %s295 = scalar_lea.vmem %s8, %s294
      %p296 = scmp.lt.s32.totalorder %s19, 1
      %s297 = scalar_select %p296, %s19, 1
      %s298 = smul.addr %s297, 4
      %s299 = smul.addr %s298, 8
      %s300 = scalar_lea.vmem %s0, %s299
      %p301 = scmp.lt.s32.totalorder %s19, 1
      %s302 = scalar_select %p301, %s19, 1
      %s303 = smul.addr %s302, 4
      %s304 = smul.addr %s303, 8
      %s305 = scalar_lea.vmem %s8, %s304
      %v307 = vld [vmem:[%s300] sm:$0xff]
      %v308 = vld [vmem:[%s300 + $0x8] sm:$0xff]
      %v309 = vld [vmem:[%s300 + $0x10] sm:$0xff]
      %v310 = vld [vmem:[%s300 + $0x18] sm:$0xff]
      %v311 = vpack.c.bf16 %v309, %v307
      %v312 = vpack.c.bf16 %v310, %v308
      %v313 = vld [vmem:[%s1] sm:$0xff]
      %v314 = vld [vmem:[%s1 + $0x8] sm:$0xff]
      %v315 = vld [vmem:[%s1 + $0x10] sm:$0xff]
      %v316 = vld [vmem:[%s1 + $0x18] sm:$0xff]
      %v317 = vld [vmem:[%s1 + $0x20] sm:$0xff]
      %v318 = vld [vmem:[%s1 + $0x28] sm:$0xff]
      %v319 = vld [vmem:[%s1 + $0x30] sm:$0xff]
      %v320 = vld [vmem:[%s1 + $0x38] sm:$0xff]
      %v321 = vld [vmem:[%s1 + $0x40] sm:$0xff]
      %v322 = vld [vmem:[%s1 + $0x48] sm:$0xff]
      %v323 = vld [vmem:[%s1 + $0x50] sm:$0xff]
      %v324 = vld [vmem:[%s1 + $0x58] sm:$0xff]
      %v325 = vld [vmem:[%s1 + $0x60] sm:$0xff]
      %v326 = vld [vmem:[%s1 + $0x68] sm:$0xff]
      %v327 = vld [vmem:[%s1 + $0x70] sm:$0xff]
      %v328 = vld [vmem:[%s1 + $0x78] sm:$0xff]
      %v329 = vld [vmem:[%s1 + $0x80] sm:$0xff]
      %v330 = vld [vmem:[%s1 + $0x88] sm:$0xff]
      %v331 = vld [vmem:[%s1 + $0x90] sm:$0xff]
      %v332 = vld [vmem:[%s1 + $0x98] sm:$0xff]
      %v333 = vld [vmem:[%s1 + $0xa0] sm:$0xff]
      %v334 = vld [vmem:[%s1 + $0xa8] sm:$0xff]
      %v335 = vld [vmem:[%s1 + $0xb0] sm:$0xff]
      %v336 = vld [vmem:[%s1 + $0xb8] sm:$0xff]
      %v361 = vunpack.c.l.b16 %v313
      %v362 = vunpack.c.h.b16 %v313
      %v363 = vunpack.c.l.b16 %v314
      %v364 = vunpack.c.h.b16 %v314
      %v365 = vunpack.c.l.b16 %v315
      %v366 = vunpack.c.h.b16 %v315
      %v367 = vunpack.c.l.b16 %v316
      %v368 = vunpack.c.h.b16 %v316
      %v369 = vunpack.c.l.b16 %v317
      %v370 = vunpack.c.h.b16 %v317
      %v371 = vunpack.c.l.b16 %v318
      %v372 = vunpack.c.h.b16 %v318
      %v373 = vunpack.c.l.b16 %v319
      %v374 = vunpack.c.h.b16 %v319
      %v375 = vunpack.c.l.b16 %v320
      %v376 = vunpack.c.h.b16 %v320
      %v377 = vunpack.c.l.b16 %v321
      %v378 = vunpack.c.h.b16 %v321
      %v379 = vunpack.c.l.b16 %v322
      %v380 = vunpack.c.h.b16 %v322
      %v381 = vunpack.c.l.b16 %v323
      %v382 = vunpack.c.h.b16 %v323
      %v383 = vunpack.c.l.b16 %v324
      %v384 = vunpack.c.h.b16 %v324
      %v385 = vunpack.c.l.b16 %v325
      %v386 = vunpack.c.h.b16 %v325
      %v387 = vunpack.c.l.b16 %v326
      %v388 = vunpack.c.h.b16 %v326
      %v389 = vunpack.c.l.b16 %v327
      %v390 = vunpack.c.h.b16 %v327
      %v391 = vunpack.c.l.b16 %v328
      %v392 = vunpack.c.h.b16 %v328
      %v393 = vunpack.c.l.b16 %v329
      %v394 = vunpack.c.h.b16 %v329
      %v395 = vunpack.c.l.b16 %v330
      %v396 = vunpack.c.h.b16 %v330
      %v397 = vunpack.c.l.b16 %v331
      %v398 = vunpack.c.h.b16 %v331
      %v399 = vunpack.c.l.b16 %v332
      %v400 = vunpack.c.h.b16 %v332
      %v401 = vunpack.c.l.b16 %v333
      %v402 = vunpack.c.h.b16 %v333
      %v403 = vunpack.c.l.b16 %v334
      %v404 = vunpack.c.h.b16 %v334
      %v405 = vunpack.c.l.b16 %v335
      %v406 = vunpack.c.h.b16 %v335
      %v407 = vunpack.c.l.b16 %v336
      %v408 = vunpack.c.h.b16 %v336
      %v409 = vpack.c.b16 %v363, %v361
      %v410 = vpack.c.b16 %v364, %v362
      %v411 = vpack.c.b16 %v367, %v365
      %v412 = vpack.c.b16 %v368, %v366
      %v413 = vpack.c.b16 %v371, %v369
      %v414 = vpack.c.b16 %v372, %v370
      %v415 = vpack.c.b16 %v375, %v373
      %v416 = vpack.c.b16 %v376, %v374
      %v417 = vpack.c.b16 %v379, %v377
      %v418 = vpack.c.b16 %v380, %v378
      %v419 = vpack.c.b16 %v383, %v381
      %v420 = vpack.c.b16 %v384, %v382
      %v421 = vpack.c.b16 %v387, %v385
      %v422 = vpack.c.b16 %v388, %v386
      %v423 = vpack.c.b16 %v391, %v389
      %v424 = vpack.c.b16 %v392, %v390
      %v425 = vpack.c.b16 %v395, %v393
      %v426 = vpack.c.b16 %v396, %v394
      %v427 = vpack.c.b16 %v399, %v397
      %v428 = vpack.c.b16 %v400, %v398
      %v429 = vpack.c.b16 %v403, %v401
      %v430 = vpack.c.b16 %v404, %v402
      %v431 = vpack.c.b16 %v407, %v405
      %v432 = vpack.c.b16 %v408, %v406
      %vm457 = vcmask 523264
      %v459 = vsel %vm457, %v312, 0
      %461 = vmatprep.subr.bf16.mxu0 %v410
      %462 = vmatpush1.bf16.msra.mxu0 %v409
      %463 = vmatprep.subr.bf16.mxu0 %v412
      %464 = vmatpush1.bf16.msra.mxu0 %v411
      %465 = vmatprep.subr.bf16.mxu0 %v414
      %466 = vmatpush1.bf16.msra.mxu0 %v413
      %467 = vmatprep.subr.bf16.mxu0 %v416
      %468 = vmatpush1.bf16.msra.mxu0 %v415
      %469 = vmatprep.subr.bf16.mxu0 %v418
      %470 = vmatpush1.bf16.msra.mxu0 %v417
      %471 = vmatprep.subr.bf16.mxu0 %v420
      %472 = vmatpush1.bf16.msra.mxu0 %v419
      %473 = vmatprep.subr.bf16.mxu0 %v422
      %474 = vmatpush1.bf16.msra.mxu0 %v421
      %475 = vmatprep.subr.bf16.mxu0 %v424
      %476 = vmatpush1.bf16.msra.mxu0 %v423
      %477 = vmatprep.subr.bf16.mxu0 %v426
      %478 = vmatpush1.bf16.msra.mxu0 %v425
      %479 = vmatprep.subr.bf16.mxu0 %v428
      %480 = vmatpush1.bf16.msra.mxu0 %v427
      %481 = vmatprep.subr.bf16.mxu0 %v430
      %482 = vmatpush1.bf16.msra.mxu0 %v429
      %483 = vmatprep.subr.bf16.mxu0 %v432
      %484 = vmatpush1.bf16.msra.mxu0 %v431
      %485 = vmatprep.subr.bf16.mxu0 0
      %486 = vmatpush1.bf16.msra.mxu0 0
      %487 = vmatprep.subr.bf16.mxu0 0
      %488 = vmatpush1.bf16.msra.mxu0 0
      %489 = vmatprep.subr.bf16.mxu0 0
      %490 = vmatpush1.bf16.msra.mxu0 0
      %491 = vmatprep.subr.bf16.mxu0 0
      %492 = vmatpush1.bf16.msra.mxu0 0
      %493 = vmatprep.mubr.bf16.mxu0 %v459
      %494 = vmatmul.mubr.bf16.gmra.mrb[0].mxu0 %v311
      %v495 = vpop.f32.mrb[0].mxu0
      %v496 = vadd.f32 0.0, %v495
      %v497 = vpop.f32.mrb[0].mxu0
      %v498 = vadd.f32 0.0, %v497
      %v499 = vpop.f32.mrb[0].mxu0
      %v500 = vadd.f32 0.0, %v499
      %v501 = vpop.f32.mrb[0].mxu0
      %v502 = vadd.f32 0.0, %v501
      %503 = vdwg.mxu0
      %v504 = vld [vmem:[%s7] sm:$0xff]
      %v505 = vld [vmem:[%s7 + $0x8] sm:$0xff]
      %v506 = vld [vmem:[%s7 + $0x10] sm:$0xff]
      %v507 = vld [vmem:[%s7 + $0x18] sm:$0xff]
      %v508 = vld [vmem:[%s7 + $0x20] sm:$0xff]
      %v509 = vld [vmem:[%s7 + $0x28] sm:$0xff]
      %v510 = vld [vmem:[%s7 + $0x30] sm:$0xff]
      %v511 = vld [vmem:[%s7 + $0x38] sm:$0xff]
      %v512 = vld [vmem:[%s7 + $0x40] sm:$0xff]
      %v513 = vld [vmem:[%s7 + $0x48] sm:$0xff]
      %v514 = vld [vmem:[%s7 + $0x50] sm:$0xff]
      %v515 = vld [vmem:[%s7 + $0x58] sm:$0xff]
      %v516 = vld [vmem:[%s7 + $0x60] sm:$0xff]
      %v517 = vld [vmem:[%s7 + $0x68] sm:$0xff]
      %v518 = vld [vmem:[%s7 + $0x70] sm:$0xff]
      %v519 = vld [vmem:[%s7 + $0x78] sm:$0xff]
      %v520 = vadd.f32 %v496, %v500
      %v521 = vrot.slane %v520, 4
      %v522 = vadd.f32 %v520, %v521
      %v523 = vrot.slane %v522, 2
      %v524 = vadd.f32 %v522, %v523
      %v525 = vrot.slane %v524, 1
      %v526 = vadd.f32 %v524, %v525
      %v527 = vsel %vm457, %v498, 0.0
      %v528 = vsel %vm457, %v502, 0.0
      %v529 = vadd.f32 %v527, %v528
      %v530 = vrot.slane %v529, 4
      %v531 = vadd.f32 %v529, %v530
      %v532 = vrot.slane %v531, 2
      %v533 = vadd.f32 %v531, %v532
      %v534 = vrot.slane %v533, 1
      %v535 = vadd.f32 %v533, %v534
      %v536 = vrcp.pop 16.0
      %v537 = vmul.f32 %v526, %v536
      %v538 = vmul.f32 %v535, %v536
      %v539 = vsub.f32 %v496, %v537
      %v540 = vsub.f32 %v498, %v538
      %v541 = vsub.f32 %v500, %v537
      %v542 = vsub.f32 %v502, %v538
      %v543 = vmul.f32 %v539, %v539
      %v544 = vmul.f32 %v540, %v540
      %v545 = vmul.f32 %v541, %v541
      %v546 = vmul.f32 %v542, %v542
      %v547 = vadd.f32 %v543, %v545
      %v548 = vrot.slane %v547, 4
      %v549 = vadd.f32 %v547, %v548
      %v550 = vrot.slane %v549, 2
      %v551 = vadd.f32 %v549, %v550
      %v552 = vrot.slane %v551, 1
      %v553 = vadd.f32 %v551, %v552
      %v554 = vsel %vm457, %v544, 0.0
      %v555 = vsel %vm457, %v546, 0.0
      %v556 = vadd.f32 %v554, %v555
      %v557 = vrot.slane %v556, 4
      %v558 = vadd.f32 %v556, %v557
      %v559 = vrot.slane %v558, 2
      %v560 = vadd.f32 %v558, %v559
      %v561 = vrot.slane %v560, 1
      %v562 = vadd.f32 %v560, %v561
      %v563 = vmul.f32 %v553, %v536
      %v564 = vmul.f32 %v562, %v536
      %v565 = vadd.f32 %v563, 1e-05
      %v566 = vadd.f32 %v564, 1e-05
      %v567 = vrsqrt.pop %v565
      %v568 = vrsqrt.pop %v566
      %v569 = vmul.f32 %v539, %v567
      %v570 = vmul.f32 %v540, %v568
      %v571 = vmul.f32 %v541, %v567
      %v572 = vmul.f32 %v542, %v568
      %574 = vset.pattern.permute.xlu0 0
      %575 = vperm.xlu0 %574, %v504
      %v576 = vpop.permute.xlu0 %575
      %579 = vset.pattern.permute.xlu0 0
      %580 = vperm.xlu0 %579, %v505
      %v581 = vpop.permute.xlu0 %580
      %v583 = vmul.f32 %v569, %v576
      %v584 = vmul.f32 %v570, %v576
      %v585 = vmul.f32 %v571, %v581
      %v586 = vmul.f32 %v572, %v581
      %588 = vset.pattern.permute.xlu0 0
      %589 = vperm.xlu0 %588, %v506
      %v590 = vpop.permute.xlu0 %589
      %593 = vset.pattern.permute.xlu0 0
      %594 = vperm.xlu0 %593, %v507
      %v595 = vpop.permute.xlu0 %594
      %v597 = vadd.f32 %v583, %v590
      %v598 = vadd.f32 %v584, %v590
      %v599 = vadd.f32 %v585, %v595
      %v600 = vadd.f32 %v586, %v595
      %v601 = vld [vmem:[%s3] sm:$0xf]
      %v602 = vld [vmem:[%s3 + $0x4] sm:$0xf]
      %v603 = vld [vmem:[%s3 + $0x8] sm:$0xf]
      %v604 = vld [vmem:[%s3 + $0xc] sm:$0xf]
      %v605 = vld [vmem:[%s3 + $0x10] sm:$0xf]
      %v606 = vld [vmem:[%s3 + $0x14] sm:$0xf]
      %v607 = vpack.c.bf16 %v599, %v597
      %v608 = vpack.c.bf16 %v600, %v598
      %v615 = vunpack.c.l.b16 %v601
      %v616 = vunpack.c.l.b16 %v602
      %v617 = vunpack.c.l.b16 %v603
      %v618 = vunpack.c.l.b16 %v604
      %v619 = vunpack.c.l.b16 %v605
      %v620 = vunpack.c.l.b16 %v606
      %v621 = vpack.c.b16 %v616, %v615
      %v622 = vpack.c.b16 %v618, %v617
      %v623 = vpack.c.b16 %v620, %v619
      %vm624 = vcmask 130048
      %v626 = vsel %vm624, %v621, 0
      %v629 = vsel %vm624, %v622, 0
      %v632 = vsel %vm624, %v623, 0
      %634 = vmatprep.subr.bf16.mxu0 %v608
      %635 = vmatpush1.bf16.msra.mxu0 %v607
      %636 = vmatprep.subr.bf16.mxu0 0
      %637 = vmatpush1.bf16.msra.mxu0 0
      %638 = vmatprep.subr.bf16.mxu0 0
      %639 = vmatpush1.bf16.msra.mxu0 0
      %640 = vmatprep.subr.bf16.mxu0 0
      %641 = vmatpush1.bf16.msra.mxu0 0
      %642 = vmatprep.subr.bf16.mxu0 0
      %643 = vmatpush1.bf16.msra.mxu0 0
      %644 = vmatprep.subr.bf16.mxu0 0
      %645 = vmatpush1.bf16.msra.mxu0 0
      %646 = vmatprep.subr.bf16.mxu0 0
      %647 = vmatpush1.bf16.msra.mxu0 0
      %648 = vmatprep.subr.bf16.mxu0 0
      %649 = vmatpush1.bf16.msra.mxu0 0
      %650 = vmatprep.subr.bf16.mxu0 0
      %651 = vmatpush1.bf16.msra.mxu0 0
      %652 = vmatprep.subr.bf16.mxu0 0
      %653 = vmatpush1.bf16.msra.mxu0 0
      %654 = vmatprep.subr.bf16.mxu0 0
      %655 = vmatpush1.bf16.msra.mxu0 0
      %656 = vmatprep.subr.bf16.mxu0 0
      %657 = vmatpush1.bf16.msra.mxu0 0
      %658 = vmatprep.subr.bf16.mxu0 0
      %659 = vmatpush1.bf16.msra.mxu0 0
      %660 = vmatprep.subr.bf16.mxu0 0
      %661 = vmatpush1.bf16.msra.mxu0 0
      %662 = vmatprep.subr.bf16.mxu0 0
      %663 = vmatpush1.bf16.msra.mxu0 0
      %664 = vmatprep.subr.bf16.mxu0 0
      %665 = vmatpush1.bf16.msra.mxu0 0
      %666 = vmatprep.mubr.bf16.mxu0 0
      %667 = vmatmul.mubr.bf16.gmra.mrb[0].mxu0 %v626
      %v668 = vpop.f32.mrb[0].mxu0
      %v669 = vadd.f32 0.0, %v668
      %v670 = vpop.f32.mrb[0].mxu0
      %v671 = vadd.f32 0.0, %v670
      %v672 = vpop.f32.mrb[0].mxu0
      %v673 = vadd.f32 0.0, %v672
      %v674 = vpop.f32.mrb[0].mxu0
      %v675 = vadd.f32 0.0, %v674
      %676 = vmatprep.mubr.bf16.mxu0 0
      %677 = vmatmul.mubr.bf16.gmra.mrb[0].mxu0 %v629
      %v678 = vpop.f32.mrb[0].mxu0
      %v679 = vadd.f32 0.0, %v678
      %v680 = vpop.f32.mrb[0].mxu0
      %v681 = vadd.f32 0.0, %v680
      %v682 = vpop.f32.mrb[0].mxu0
      %v683 = vadd.f32 0.0, %v682
      %v684 = vpop.f32.mrb[0].mxu0
      %v685 = vadd.f32 0.0, %v684
      %686 = vmatprep.mubr.bf16.mxu0 0
      %687 = vmatmul.mubr.bf16.gmra.mrb[0].mxu0 %v632
      %v688 = vpop.f32.mrb[0].mxu0
      %v689 = vadd.f32 0.0, %v688
      %v690 = vpop.f32.mrb[0].mxu0
      %v691 = vadd.f32 0.0, %v690
      %v692 = vpop.f32.mrb[0].mxu0
      %v693 = vadd.f32 0.0, %v692
      %v694 = vpop.f32.mrb[0].mxu0
      %v695 = vadd.f32 0.0, %v694
      %696 = vdwg.mxu0
      %v697 = vpack.c.bf16 %v669, %v669
      %v698 = vpack.c.bf16 %v671, %v671
      %v699 = vpack.c.bf16 %v679, %v679
      %v700 = vpack.c.bf16 %v681, %v681
      %v701 = vpack.c.bf16 %v689, %v689
      %v702 = vpack.c.bf16 %v691, %v691
      %703 = vxpose.xlu0.c.b16.start [1/8] %v697, 128
      %704 = vxpose.xlu0.c.b16.cont [2/8] 0, 128
      %705 = vxpose.xlu0.c.b16.cont [3/8] 0, 128
      %706 = vxpose.xlu0.c.b16.cont [4/8] 0, 128
      %707 = vxpose.xlu0.c.b16.cont [5/8] 0, 128
      %708 = vxpose.xlu0.c.b16.cont [6/8] 0, 128
      %709 = vxpose.xlu0.c.b16.cont [7/8] 0, 128
      %710 = vxpose.xlu0.c.b16.end [8/8] 0, 128
      %v711 = vpop.trf.xlu0
      %v712 = vpop.trf.xlu0
      %v713 = vpop.trf.xlu0
      %v714 = vpop.trf.xlu0
      %v715 = vpop.trf.xlu0
      %v716 = vpop.trf.xlu0
      %v717 = vpop.trf.xlu0
      %v718 = vpop.trf.xlu0
      %719 = vxpose.xlu0.c.b16.start [1/8] %v698, 128
      %720 = vxpose.xlu0.c.b16.cont [2/8] 0, 128
      %721 = vxpose.xlu0.c.b16.cont [3/8] 0, 128
      %722 = vxpose.xlu0.c.b16.cont [4/8] 0, 128
      %723 = vxpose.xlu0.c.b16.cont [5/8] 0, 128
      %724 = vxpose.xlu0.c.b16.cont [6/8] 0, 128
      %725 = vxpose.xlu0.c.b16.cont [7/8] 0, 128
      %726 = vxpose.xlu0.c.b16.end [8/8] 0, 128
      %v727 = vpop.trf.xlu0
      %v728 = vpop.trf.xlu0
      %v729 = vpop.trf.xlu0
      %v730 = vpop.trf.xlu0
      %v731 = vpop.trf.xlu0
      %v732 = vpop.trf.xlu0
      %v733 = vpop.trf.xlu0
      %v734 = vpop.trf.xlu0
      %vm735 = vcmask 64512
      %v737 = vsel %vm735, %v711, 0
      %v740 = vsel %vm735, %v712, 0
      %v743 = vsel %vm735, %v713, 0
      %v746 = vsel %vm735, %v714, 0
      %v749 = vsel %vm735, %v715, 0
      %v752 = vsel %vm735, %v716, 0
      %v755 = vsel %vm735, %v717, 0
      %v758 = vsel %vm735, %v718, 0
      %v761 = vsel %vm735, %v727, 0
      %v764 = vsel %vm735, %v728, 0
      %v767 = vsel %vm735, %v729, 0
      %v770 = vsel %vm735, %v730, 0
      %vm772 = vcmask 1043456
      %v774 = vsel %vm772, %v699, 0
      %v777 = vsel %vm772, %v700, 0
      %779 = vmatprep.subr.bf16.mxu0 %v777
      %780 = vmatpush1.bf16.msra.mxu0 %v774
      %781 = vmatprep.subr.bf16.mxu0 0
      %782 = vmatpush1.bf16.msra.mxu0 0
      %783 = vmatprep.subr.bf16.mxu0 0
      %784 = vmatpush1.bf16.msra.mxu0 0
      %785 = vmatprep.subr.bf16.mxu0 0
      %786 = vmatpush1.bf16.msra.mxu0 0
      %787 = vmatprep.subr.bf16.mxu0 0
      %788 = vmatpush1.bf16.msra.mxu0 0
      %789 = vmatprep.subr.bf16.mxu0 0
      %790 = vmatpush1.bf16.msra.mxu0 0
      %791 = vmatprep.subr.bf16.mxu0 0
      %792 = vmatpush1.bf16.msra.mxu0 0
      %793 = vmatprep.subr.bf16.mxu0 0
      %794 = vmatpush1.bf16.msra.mxu0 0
      %795 = vmatprep.subr.bf16.mxu0 0
      %796 = vmatpush1.bf16.msra.mxu0 0
      %797 = vmatprep.subr.bf16.mxu0 0
      %798 = vmatpush1.bf16.msra.mxu0 0
      %799 = vmatprep.subr.bf16.mxu0 0
      %800 = vmatpush1.bf16.msra.mxu0 0
      %801 = vmatprep.subr.bf16.mxu0 0
      %802 = vmatpush1.bf16.msra.mxu0 0
      %803 = vmatprep.subr.bf16.mxu0 0
      %804 = vmatpush1.bf16.msra.mxu0 0
      %805 = vmatprep.subr.bf16.mxu0 0
      %806 = vmatpush1.bf16.msra.mxu0 0
      %807 = vmatprep.subr.bf16.mxu0 0
      %808 = vmatpush1.bf16.msra.mxu0 0
      %809 = vmatprep.subr.bf16.mxu0 0
      %810 = vmatpush1.bf16.msra.mxu0 0
      %811 = vmatprep.mubr.bf16.mxu0 0
      %812 = vmatmul.mubr.bf16.gmra.mrb[0].mxu0 %v737
      %v813 = vpop.f32.mrb[0].mxu0
      %v814 = vadd.f32 0.0, %v813
      %v815 = vpop.f32.mrb[0].mxu0
      %v816 = vadd.f32 0.0, %v815
      %v817 = vpop.f32.mrb[0].mxu0
      %v818 = vadd.f32 0.0, %v817
      %v819 = vpop.f32.mrb[0].mxu0
      %v820 = vadd.f32 0.0, %v819
      %821 = vmatprep.mubr.bf16.mxu0 0
      %822 = vmatmul.mubr.bf16.gmra.mrb[0].mxu0 %v740
      %v823 = vpop.f32.mrb[0].mxu0
      %v824 = vadd.f32 0.0, %v823
      %v825 = vpop.f32.mrb[0].mxu0
      %v826 = vadd.f32 0.0, %v825
      %v827 = vpop.f32.mrb[0].mxu0
      %v828 = vadd.f32 0.0, %v827
      %v829 = vpop.f32.mrb[0].mxu0
      %v830 = vadd.f32 0.0, %v829
      %831 = vmatprep.mubr.bf16.mxu0 0
      %832 = vmatmul.mubr.bf16.gmra.mrb[0].mxu0 %v743
      %v833 = vpop.f32.mrb[0].mxu0
      %v834 = vadd.f32 0.0, %v833
      %v835 = vpop.f32.mrb[0].mxu0
      %v836 = vadd.f32 0.0, %v835
      %v837 = vpop.f32.mrb[0].mxu0
      %v838 = vadd.f32 0.0, %v837
      %v839 = vpop.f32.mrb[0].mxu0
      %v840 = vadd.f32 0.0, %v839
      %841 = vmatprep.mubr.bf16.mxu0 0
      %842 = vmatmul.mubr.bf16.gmra.mrb[0].mxu0 %v746
      %v843 = vpop.f32.mrb[0].mxu0
      %v844 = vadd.f32 0.0, %v843
      %v845 = vpop.f32.mrb[0].mxu0
      %v846 = vadd.f32 0.0, %v845
      %v847 = vpop.f32.mrb[0].mxu0
      %v848 = vadd.f32 0.0, %v847
      %v849 = vpop.f32.mrb[0].mxu0
      %v850 = vadd.f32 0.0, %v849
      %851 = vmatprep.mubr.bf16.mxu0 0
      %852 = vmatmul.mubr.bf16.gmra.mrb[0].mxu0 %v749
      %v853 = vpop.f32.mrb[0].mxu0
      %v854 = vadd.f32 0.0, %v853
      %v855 = vpop.f32.mrb[0].mxu0
      %v856 = vadd.f32 0.0, %v855
      %v857 = vpop.f32.mrb[0].mxu0
      %v858 = vadd.f32 0.0, %v857
      %v859 = vpop.f32.mrb[0].mxu0
      %v860 = vadd.f32 0.0, %v859
      %861 = vmatprep.mubr.bf16.mxu0 0
      %862 = vmatmul.mubr.bf16.gmra.mrb[0].mxu0 %v752
      %v863 = vpop.f32.mrb[0].mxu0
      %v864 = vadd.f32 0.0, %v863
      %v865 = vpop.f32.mrb[0].mxu0
      %v866 = vadd.f32 0.0, %v865
      %v867 = vpop.f32.mrb[0].mxu0
      %v868 = vadd.f32 0.0, %v867
      %v869 = vpop.f32.mrb[0].mxu0
      %v870 = vadd.f32 0.0, %v869
      %871 = vmatprep.mubr.bf16.mxu0 0
      %872 = vmatmul.mubr.bf16.gmra.mrb[0].mxu0 %v755
      %v873 = vpop.f32.mrb[0].mxu0
      %v874 = vadd.f32 0.0, %v873
      %v875 = vpop.f32.mrb[0].mxu0
      %v876 = vadd.f32 0.0, %v875
      %v877 = vpop.f32.mrb[0].mxu0
      %v878 = vadd.f32 0.0, %v877
      %v879 = vpop.f32.mrb[0].mxu0
      %v880 = vadd.f32 0.0, %v879
      %881 = vmatprep.mubr.bf16.mxu0 0
      %882 = vmatmul.mubr.bf16.gmra.mrb[0].mxu0 %v758
      %v883 = vpop.f32.mrb[0].mxu0
      %v884 = vadd.f32 0.0, %v883
      %v885 = vpop.f32.mrb[0].mxu0
      %v886 = vadd.f32 0.0, %v885
      %v887 = vpop.f32.mrb[0].mxu0
      %v888 = vadd.f32 0.0, %v887
      %v889 = vpop.f32.mrb[0].mxu0
      %v890 = vadd.f32 0.0, %v889
      %891 = vmatprep.mubr.bf16.mxu0 0
      %892 = vmatmul.mubr.bf16.gmra.mrb[0].mxu0 %v761
      %v893 = vpop.f32.mrb[0].mxu0
      %v894 = vadd.f32 0.0, %v893
      %v895 = vpop.f32.mrb[0].mxu0
      %v896 = vadd.f32 0.0, %v895
      %v897 = vpop.f32.mrb[0].mxu0
      %v898 = vadd.f32 0.0, %v897
      %v899 = vpop.f32.mrb[0].mxu0
      %v900 = vadd.f32 0.0, %v899
      %901 = vmatprep.mubr.bf16.mxu0 0
      %902 = vmatmul.mubr.bf16.gmra.mrb[0].mxu0 %v764
      %v903 = vpop.f32.mrb[0].mxu0
      %v904 = vadd.f32 0.0, %v903
      %v905 = vpop.f32.mrb[0].mxu0
      %v906 = vadd.f32 0.0, %v905
      %v907 = vpop.f32.mrb[0].mxu0
      %v908 = vadd.f32 0.0, %v907
      %v909 = vpop.f32.mrb[0].mxu0
      %v910 = vadd.f32 0.0, %v909
      %911 = vmatprep.mubr.bf16.mxu0 0
      %912 = vmatmul.mubr.bf16.gmra.mrb[0].mxu0 %v767
      %v913 = vpop.f32.mrb[0].mxu0
      %v914 = vadd.f32 0.0, %v913
      %v915 = vpop.f32.mrb[0].mxu0
      %v916 = vadd.f32 0.0, %v915
      %v917 = vpop.f32.mrb[0].mxu0
      %v918 = vadd.f32 0.0, %v917
      %v919 = vpop.f32.mrb[0].mxu0
      %v920 = vadd.f32 0.0, %v919
      %921 = vmatprep.mubr.bf16.mxu0 0
      %922 = vmatmul.mubr.bf16.gmra.mrb[0].mxu0 %v770
      %v923 = vpop.f32.mrb[0].mxu0
      %v924 = vadd.f32 0.0, %v923
      %v925 = vpop.f32.mrb[0].mxu0
      %v926 = vadd.f32 0.0, %v925
      %v927 = vpop.f32.mrb[0].mxu0
      %v928 = vadd.f32 0.0, %v927
      %v929 = vpop.f32.mrb[0].mxu0
      %v930 = vadd.f32 0.0, %v929
      %931 = vdwg.mxu0
      %v932 = vsel %vm457, %v816, -inf
      %v933 = vmax.f32 %v814, %v932
      %934 = vmax.xlane.f32.xlu0 %v933
      %v935 = vpop.xlane.xlu0 %934
      %v936 = vsel %vm457, %v820, -inf
      %v937 = vmax.f32 %v818, %v936
      %938 = vmax.xlane.f32.xlu0 %v937
      %v939 = vpop.xlane.xlu0 %938
      %v940 = vsel %vm457, %v826, -inf
      %v941 = vmax.f32 %v824, %v940
      %942 = vmax.xlane.f32.xlu0 %v941
      %v943 = vpop.xlane.xlu0 %942
      %v944 = vsel %vm457, %v830, -inf
      %v945 = vmax.f32 %v828, %v944
      %946 = vmax.xlane.f32.xlu0 %v945
      %v947 = vpop.xlane.xlu0 %946
      %v948 = vsel %vm457, %v836, -inf
      %v949 = vmax.f32 %v834, %v948
      %950 = vmax.xlane.f32.xlu0 %v949
      %v951 = vpop.xlane.xlu0 %950
      %v952 = vsel %vm457, %v840, -inf
      %v953 = vmax.f32 %v838, %v952
      %954 = vmax.xlane.f32.xlu0 %v953
      %v955 = vpop.xlane.xlu0 %954
      %v956 = vsel %vm457, %v846, -inf
      %v957 = vmax.f32 %v844, %v956
      %958 = vmax.xlane.f32.xlu0 %v957
      %v959 = vpop.xlane.xlu0 %958
      %v960 = vsel %vm457, %v850, -inf
      %v961 = vmax.f32 %v848, %v960
      %962 = vmax.xlane.f32.xlu0 %v961
      %v963 = vpop.xlane.xlu0 %962
      %v964 = vsel %vm457, %v856, -inf
      %v965 = vmax.f32 %v854, %v964
      %966 = vmax.xlane.f32.xlu0 %v965
      %v967 = vpop.xlane.xlu0 %966
      %v968 = vsel %vm457, %v860, -inf
      %v969 = vmax.f32 %v858, %v968
      %970 = vmax.xlane.f32.xlu0 %v969
      %v971 = vpop.xlane.xlu0 %970
      %v972 = vsel %vm457, %v866, -inf
      %v973 = vmax.f32 %v864, %v972
      %974 = vmax.xlane.f32.xlu0 %v973
      %v975 = vpop.xlane.xlu0 %974
      %v976 = vsel %vm457, %v870, -inf
      %v977 = vmax.f32 %v868, %v976
      %978 = vmax.xlane.f32.xlu0 %v977
      %v979 = vpop.xlane.xlu0 %978
      %v980 = vsel %vm457, %v876, -inf
      %v981 = vmax.f32 %v874, %v980
      %982 = vmax.xlane.f32.xlu0 %v981
      %v983 = vpop.xlane.xlu0 %982
      %v984 = vsel %vm457, %v880, -inf
      %v985 = vmax.f32 %v878, %v984
      %986 = vmax.xlane.f32.xlu0 %v985
      %v987 = vpop.xlane.xlu0 %986
      %v988 = vsel %vm457, %v886, -inf
      %v989 = vmax.f32 %v884, %v988
      %990 = vmax.xlane.f32.xlu0 %v989
      %v991 = vpop.xlane.xlu0 %990
      %v992 = vsel %vm457, %v890, -inf
      %v993 = vmax.f32 %v888, %v992
      %994 = vmax.xlane.f32.xlu0 %v993
      %v995 = vpop.xlane.xlu0 %994
      %v996 = vsel %vm457, %v896, -inf
      %v997 = vmax.f32 %v894, %v996
      %998 = vmax.xlane.f32.xlu0 %v997
      %v999 = vpop.xlane.xlu0 %998
      %v1000 = vsel %vm457, %v900, -inf
      %v1001 = vmax.f32 %v898, %v1000
      %1002 = vmax.xlane.f32.xlu0 %v1001
      %v1003 = vpop.xlane.xlu0 %1002
      %v1004 = vsel %vm457, %v906, -inf
      %v1005 = vmax.f32 %v904, %v1004
      %1006 = vmax.xlane.f32.xlu0 %v1005
      %v1007 = vpop.xlane.xlu0 %1006
      %v1008 = vsel %vm457, %v910, -inf
      %v1009 = vmax.f32 %v908, %v1008
      %1010 = vmax.xlane.f32.xlu0 %v1009
      %v1011 = vpop.xlane.xlu0 %1010
      %v1012 = vsel %vm457, %v916, -inf
      %v1013 = vmax.f32 %v914, %v1012
      %1014 = vmax.xlane.f32.xlu0 %v1013
      %v1015 = vpop.xlane.xlu0 %1014
      %v1016 = vsel %vm457, %v920, -inf
      %v1017 = vmax.f32 %v918, %v1016
      %1018 = vmax.xlane.f32.xlu0 %v1017
      %v1019 = vpop.xlane.xlu0 %1018
      %v1020 = vsel %vm457, %v926, -inf
      %v1021 = vmax.f32 %v924, %v1020
      %1022 = vmax.xlane.f32.xlu0 %v1021
      %v1023 = vpop.xlane.xlu0 %1022
      %v1024 = vsel %vm457, %v930, -inf
      %v1025 = vmax.f32 %v928, %v1024
      %1026 = vmax.xlane.f32.xlu0 %v1025
      %v1027 = vpop.xlane.xlu0 %1026
      %v1028 = vsub.f32 %v814, %v935
      %v1029 = vsub.f32 %v816, %v935
      %v1030 = vsub.f32 %v818, %v939
      %v1031 = vsub.f32 %v820, %v939
      %v1032 = vsub.f32 %v824, %v943
      %v1033 = vsub.f32 %v826, %v943
      %v1034 = vsub.f32 %v828, %v947
      %v1035 = vsub.f32 %v830, %v947
      %v1036 = vsub.f32 %v834, %v951
      %v1037 = vsub.f32 %v836, %v951
      %v1038 = vsub.f32 %v838, %v955
      %v1039 = vsub.f32 %v840, %v955
      %v1040 = vsub.f32 %v844, %v959
      %v1041 = vsub.f32 %v846, %v959
      %v1042 = vsub.f32 %v848, %v963
      %v1043 = vsub.f32 %v850, %v963
      %v1044 = vsub.f32 %v854, %v967
      %v1045 = vsub.f32 %v856, %v967
      %v1046 = vsub.f32 %v858, %v971
      %v1047 = vsub.f32 %v860, %v971
      %v1048 = vsub.f32 %v864, %v975
      %v1049 = vsub.f32 %v866, %v975
      %v1050 = vsub.f32 %v868, %v979
      %v1051 = vsub.f32 %v870, %v979
      %v1052 = vsub.f32 %v874, %v983
      %v1053 = vsub.f32 %v876, %v983
      %v1054 = vsub.f32 %v878, %v987
      %v1055 = vsub.f32 %v880, %v987
      %v1056 = vsub.f32 %v884, %v991
      %v1057 = vsub.f32 %v886, %v991
      %v1058 = vsub.f32 %v888, %v995
      %v1059 = vsub.f32 %v890, %v995
      %v1060 = vsub.f32 %v894, %v999
      %v1061 = vsub.f32 %v896, %v999
      %v1062 = vsub.f32 %v898, %v1003
      %v1063 = vsub.f32 %v900, %v1003
      %v1064 = vsub.f32 %v904, %v1007
      %v1065 = vsub.f32 %v906, %v1007
      %v1066 = vsub.f32 %v908, %v1011
      %v1067 = vsub.f32 %v910, %v1011
      %v1068 = vsub.f32 %v914, %v1015
      %v1069 = vsub.f32 %v916, %v1015
      %v1070 = vsub.f32 %v918, %v1019
      %v1071 = vsub.f32 %v920, %v1019
      %v1072 = vsub.f32 %v924, %v1023
      %v1073 = vsub.f32 %v926, %v1023
      %v1074 = vsub.f32 %v928, %v1027
      %v1075 = vsub.f32 %v930, %v1027
      %v1076 = vmul.f32 %v1028, 1.442695
      %v1077 = vpow.pop %v1076
      %v1078 = vmul.f32 %v1029, 1.442695
      %v1079 = vpow.pop %v1078
      %v1080 = vmul.f32 %v1030, 1.442695
      %v1081 = vpow.pop %v1080
      %v1082 = vmul.f32 %v1031, 1.442695
      %v1083 = vpow.pop %v1082
      %v1084 = vmul.f32 %v1032, 1.442695
      %v1085 = vpow.pop %v1084
      %v1086 = vmul.f32 %v1033, 1.442695
      %v1087 = vpow.pop %v1086
      %v1088 = vmul.f32 %v1034, 1.442695
      %v1089 = vpow.pop %v1088
      %v1090 = vmul.f32 %v1035, 1.442695
      %v1091 = vpow.pop %v1090
      %v1092 = vmul.f32 %v1036, 1.442695
      %v1093 = vpow.pop %v1092
      %v1094 = vmul.f32 %v1037, 1.442695
      %v1095 = vpow.pop %v1094
      %v1096 = vmul.f32 %v1038, 1.442695
      %v1097 = vpow.pop %v1096
      %v1098 = vmul.f32 %v1039, 1.442695
      %v1099 = vpow.pop %v1098
      %v1100 = vmul.f32 %v1040, 1.442695
      %v1101 = vpow.pop %v1100
      %v1102 = vmul.f32 %v1041, 1.442695
      %v1103 = vpow.pop %v1102
      %v1104 = vmul.f32 %v1042, 1.442695
      %v1105 = vpow.pop %v1104
      %v1106 = vmul.f32 %v1043, 1.442695
      %v1107 = vpow.pop %v1106
      %v1108 = vmul.f32 %v1044, 1.442695
      %v1109 = vpow.pop %v1108
      %v1110 = vmul.f32 %v1045, 1.442695
      %v1111 = vpow.pop %v1110
      %v1112 = vmul.f32 %v1046, 1.442695
      %v1113 = vpow.pop %v1112
      %v1114 = vmul.f32 %v1047, 1.442695
      %v1115 = vpow.pop %v1114
      %v1116 = vmul.f32 %v1048, 1.442695
      %v1117 = vpow.pop %v1116
      %v1118 = vmul.f32 %v1049, 1.442695
      %v1119 = vpow.pop %v1118
      %v1120 = vmul.f32 %v1050, 1.442695
      %v1121 = vpow.pop %v1120
      %v1122 = vmul.f32 %v1051, 1.442695
      %v1123 = vpow.pop %v1122
      %v1124 = vmul.f32 %v1052, 1.442695
      %v1125 = vpow.pop %v1124
      %v1126 = vmul.f32 %v1053, 1.442695
      %v1127 = vpow.pop %v1126
      %v1128 = vmul.f32 %v1054, 1.442695
      %v1129 = vpow.pop %v1128
      %v1130 = vmul.f32 %v1055, 1.442695
      %v1131 = vpow.pop %v1130
      %v1132 = vmul.f32 %v1056, 1.442695
      %v1133 = vpow.pop %v1132
      %v1134 = vmul.f32 %v1057, 1.442695
      %v1135 = vpow.pop %v1134
      %v1136 = vmul.f32 %v1058, 1.442695
      %v1137 = vpow.pop %v1136
      %v1138 = vmul.f32 %v1059, 1.442695
      %v1139 = vpow.pop %v1138
      %v1140 = vmul.f32 %v1060, 1.442695
      %v1141 = vpow.pop %v1140
      %v1142 = vmul.f32 %v1061, 1.442695
      %v1143 = vpow.pop %v1142
      %v1144 = vmul.f32 %v1062, 1.442695
      %v1145 = vpow.pop %v1144
      %v1146 = vmul.f32 %v1063, 1.442695
      %v1147 = vpow.pop %v1146
      %v1148 = vmul.f32 %v1064, 1.442695
      %v1149 = vpow.pop %v1148
      %v1150 = vmul.f32 %v1065, 1.442695
      %v1151 = vpow.pop %v1150
      %v1152 = vmul.f32 %v1066, 1.442695
      %v1153 = vpow.pop %v1152
      %v1154 = vmul.f32 %v1067, 1.442695
      %v1155 = vpow.pop %v1154
      %v1156 = vmul.f32 %v1068, 1.442695
      %v1157 = vpow.pop %v1156
      %v1158 = vmul.f32 %v1069, 1.442695
      %v1159 = vpow.pop %v1158
      %v1160 = vmul.f32 %v1070, 1.442695
      %v1161 = vpow.pop %v1160
      %v1162 = vmul.f32 %v1071, 1.442695
      %v1163 = vpow.pop %v1162
      %v1164 = vmul.f32 %v1072, 1.442695
      %v1165 = vpow.pop %v1164
      %v1166 = vmul.f32 %v1073, 1.442695
      %v1167 = vpow.pop %v1166
      %v1168 = vmul.f32 %v1074, 1.442695
      %v1169 = vpow.pop %v1168
      %v1170 = vmul.f32 %v1075, 1.442695
      %v1171 = vpow.pop %v1170
      %v1172 = vsel %vm457, %v1079, 0.0
      %v1173 = vadd.f32 %v1077, %v1172
      %1174 = vadd.xlane.f32.xlu0 %v1173
      %v1175 = vpop.xlane.xlu0 %1174
      %v1176 = vsel %vm457, %v1083, 0.0
      %v1177 = vadd.f32 %v1081, %v1176
      %1178 = vadd.xlane.f32.xlu0 %v1177
      %v1179 = vpop.xlane.xlu0 %1178
      %v1180 = vsel %vm457, %v1087, 0.0
      %v1181 = vadd.f32 %v1085, %v1180
      %1182 = vadd.xlane.f32.xlu0 %v1181
      %v1183 = vpop.xlane.xlu0 %1182
      %v1184 = vsel %vm457, %v1091, 0.0
      %v1185 = vadd.f32 %v1089, %v1184
      %1186 = vadd.xlane.f32.xlu0 %v1185
      %v1187 = vpop.xlane.xlu0 %1186
      %v1188 = vsel %vm457, %v1095, 0.0
      %v1189 = vadd.f32 %v1093, %v1188
      %1190 = vadd.xlane.f32.xlu0 %v1189
      %v1191 = vpop.xlane.xlu0 %1190
      %v1192 = vsel %vm457, %v1099, 0.0
      %v1193 = vadd.f32 %v1097, %v1192
      %1194 = vadd.xlane.f32.xlu0 %v1193
      %v1195 = vpop.xlane.xlu0 %1194
      %v1196 = vsel %vm457, %v1103, 0.0
      %v1197 = vadd.f32 %v1101, %v1196
      %1198 = vadd.xlane.f32.xlu0 %v1197
      %v1199 = vpop.xlane.xlu0 %1198
      %v1200 = vsel %vm457, %v1107, 0.0
      %v1201 = vadd.f32 %v1105, %v1200
      %1202 = vadd.xlane.f32.xlu0 %v1201
      %v1203 = vpop.xlane.xlu0 %1202
      %v1204 = vsel %vm457, %v1111, 0.0
      %v1205 = vadd.f32 %v1109, %v1204
      %1206 = vadd.xlane.f32.xlu0 %v1205
      %v1207 = vpop.xlane.xlu0 %1206
      %v1208 = vsel %vm457, %v1115, 0.0
      %v1209 = vadd.f32 %v1113, %v1208
      %1210 = vadd.xlane.f32.xlu0 %v1209
      %v1211 = vpop.xlane.xlu0 %1210
      %v1212 = vsel %vm457, %v1119, 0.0
      %v1213 = vadd.f32 %v1117, %v1212
      %1214 = vadd.xlane.f32.xlu0 %v1213
      %v1215 = vpop.xlane.xlu0 %1214
      %v1216 = vsel %vm457, %v1123, 0.0
      %v1217 = vadd.f32 %v1121, %v1216
      %1218 = vadd.xlane.f32.xlu0 %v1217
      %v1219 = vpop.xlane.xlu0 %1218
      %v1220 = vsel %vm457, %v1127, 0.0
      %v1221 = vadd.f32 %v1125, %v1220
      %1222 = vadd.xlane.f32.xlu0 %v1221
      %v1223 = vpop.xlane.xlu0 %1222
      %v1224 = vsel %vm457, %v1131, 0.0
      %v1225 = vadd.f32 %v1129, %v1224
      %1226 = vadd.xlane.f32.xlu0 %v1225
      %v1227 = vpop.xlane.xlu0 %1226
      %v1228 = vsel %vm457, %v1135, 0.0
      %v1229 = vadd.f32 %v1133, %v1228
      %1230 = vadd.xlane.f32.xlu0 %v1229
      %v1231 = vpop.xlane.xlu0 %1230
      %v1232 = vsel %vm457, %v1139, 0.0
      %v1233 = vadd.f32 %v1137, %v1232
      %1234 = vadd.xlane.f32.xlu0 %v1233
      %v1235 = vpop.xlane.xlu0 %1234
      %v1236 = vsel %vm457, %v1143, 0.0
      %v1237 = vadd.f32 %v1141, %v1236
      %1238 = vadd.xlane.f32.xlu0 %v1237
      %v1239 = vpop.xlane.xlu0 %1238
      %v1240 = vsel %vm457, %v1147, 0.0
      %v1241 = vadd.f32 %v1145, %v1240
      %1242 = vadd.xlane.f32.xlu0 %v1241
      %v1243 = vpop.xlane.xlu0 %1242
      %v1244 = vsel %vm457, %v1151, 0.0
      %v1245 = vadd.f32 %v1149, %v1244
      %1246 = vadd.xlane.f32.xlu0 %v1245
      %v1247 = vpop.xlane.xlu0 %1246
      %v1248 = vsel %vm457, %v1155, 0.0
      %v1249 = vadd.f32 %v1153, %v1248
      %1250 = vadd.xlane.f32.xlu0 %v1249
      %v1251 = vpop.xlane.xlu0 %1250
      %v1252 = vsel %vm457, %v1159, 0.0
      %v1253 = vadd.f32 %v1157, %v1252
      %1254 = vadd.xlane.f32.xlu0 %v1253
      %v1255 = vpop.xlane.xlu0 %1254
      %v1256 = vsel %vm457, %v1163, 0.0
      %v1257 = vadd.f32 %v1161, %v1256
      %1258 = vadd.xlane.f32.xlu0 %v1257
      %v1259 = vpop.xlane.xlu0 %1258
      %v1260 = vsel %vm457, %v1167, 0.0
      %v1261 = vadd.f32 %v1165, %v1260
      %1262 = vadd.xlane.f32.xlu0 %v1261
      %v1263 = vpop.xlane.xlu0 %1262
      %v1264 = vsel %vm457, %v1171, 0.0
      %v1265 = vadd.f32 %v1169, %v1264
      %1266 = vadd.xlane.f32.xlu0 %v1265
      %v1267 = vpop.xlane.xlu0 %1266
      %v1268 = vrcp.pop %v1175
      %v1269 = vrcp.pop %v1179
      %v1270 = vrcp.pop %v1183
      %v1271 = vrcp.pop %v1187
      %v1272 = vrcp.pop %v1191
      %v1273 = vrcp.pop %v1195
      %v1274 = vrcp.pop %v1199
      %v1275 = vrcp.pop %v1203
      %v1276 = vrcp.pop %v1207
      %v1277 = vrcp.pop %v1211
      %v1278 = vrcp.pop %v1215
      %v1279 = vrcp.pop %v1219
      %v1280 = vrcp.pop %v1223
      %v1281 = vrcp.pop %v1227
      %v1282 = vrcp.pop %v1231
      %v1283 = vrcp.pop %v1235
      %v1284 = vrcp.pop %v1239
      %v1285 = vrcp.pop %v1243
      %v1286 = vrcp.pop %v1247
      %v1287 = vrcp.pop %v1251
      %v1288 = vrcp.pop %v1255
      %v1289 = vrcp.pop %v1259
      %v1290 = vrcp.pop %v1263
      %v1291 = vrcp.pop %v1267
      %v1292 = vmul.f32 %v1077, %v1268
      %v1293 = vmul.f32 %v1079, %v1268
      %v1294 = vmul.f32 %v1081, %v1269
      %v1295 = vmul.f32 %v1083, %v1269
      %v1296 = vmul.f32 %v1085, %v1270
      %v1297 = vmul.f32 %v1087, %v1270
      %v1298 = vmul.f32 %v1089, %v1271
      %v1299 = vmul.f32 %v1091, %v1271
      %v1300 = vmul.f32 %v1093, %v1272
      %v1301 = vmul.f32 %v1095, %v1272
      %v1302 = vmul.f32 %v1097, %v1273
      %v1303 = vmul.f32 %v1099, %v1273
      %v1304 = vmul.f32 %v1101, %v1274
      %v1305 = vmul.f32 %v1103, %v1274
      %v1306 = vmul.f32 %v1105, %v1275
      %v1307 = vmul.f32 %v1107, %v1275
      %v1308 = vmul.f32 %v1109, %v1276
      %v1309 = vmul.f32 %v1111, %v1276
      %v1310 = vmul.f32 %v1113, %v1277
      %v1311 = vmul.f32 %v1115, %v1277
      %v1312 = vmul.f32 %v1117, %v1278
      %v1313 = vmul.f32 %v1119, %v1278
      %v1314 = vmul.f32 %v1121, %v1279
      %v1315 = vmul.f32 %v1123, %v1279
      %v1316 = vmul.f32 %v1125, %v1280
      %v1317 = vmul.f32 %v1127, %v1280
      %v1318 = vmul.f32 %v1129, %v1281
      %v1319 = vmul.f32 %v1131, %v1281
      %v1320 = vmul.f32 %v1133, %v1282
      %v1321 = vmul.f32 %v1135, %v1282
      %v1322 = vmul.f32 %v1137, %v1283
      %v1323 = vmul.f32 %v1139, %v1283
      %v1324 = vmul.f32 %v1141, %v1284
      %v1325 = vmul.f32 %v1143, %v1284
      %v1326 = vmul.f32 %v1145, %v1285
      %v1327 = vmul.f32 %v1147, %v1285
      %v1328 = vmul.f32 %v1149, %v1286
      %v1329 = vmul.f32 %v1151, %v1286
      %v1330 = vmul.f32 %v1153, %v1287
      %v1331 = vmul.f32 %v1155, %v1287
      %v1332 = vmul.f32 %v1157, %v1288
      %v1333 = vmul.f32 %v1159, %v1288
      %v1334 = vmul.f32 %v1161, %v1289
      %v1335 = vmul.f32 %v1163, %v1289
      %v1336 = vmul.f32 %v1165, %v1290
      %v1337 = vmul.f32 %v1167, %v1290
      %v1338 = vmul.f32 %v1169, %v1291
      %v1339 = vmul.f32 %v1171, %v1291
      %v1340 = vpack.c.bf16 %v1294, %v1292
      %v1341 = vpack.c.bf16 %v1295, %v1293
      %v1342 = vpack.c.bf16 %v1298, %v1296
      %v1343 = vpack.c.bf16 %v1299, %v1297
      %v1344 = vpack.c.bf16 %v1302, %v1300
      %v1345 = vpack.c.bf16 %v1303, %v1301
      %v1346 = vpack.c.bf16 %v1306, %v1304
      %v1347 = vpack.c.bf16 %v1307, %v1305
      %v1348 = vpack.c.bf16 %v1310, %v1308
      %v1349 = vpack.c.bf16 %v1311, %v1309
      %v1350 = vpack.c.bf16 %v1314, %v1312
      %v1351 = vpack.c.bf16 %v1315, %v1313
      %v1352 = vpack.c.bf16 %v1318, %v1316
      %v1353 = vpack.c.bf16 %v1319, %v1317
      %v1354 = vpack.c.bf16 %v1322, %v1320
      %v1355 = vpack.c.bf16 %v1323, %v1321
      %v1356 = vpack.c.bf16 %v1326, %v1324
      %v1357 = vpack.c.bf16 %v1327, %v1325
      %v1358 = vpack.c.bf16 %v1330, %v1328
      %v1359 = vpack.c.bf16 %v1331, %v1329
      %v1360 = vpack.c.bf16 %v1334, %v1332
      %v1361 = vpack.c.bf16 %v1335, %v1333
      %v1362 = vpack.c.bf16 %v1338, %v1336
      %v1363 = vpack.c.bf16 %v1339, %v1337
      %v1365 = vsel %vm457, %v702, 0
      %v1368 = vsel %vm457, %v1341, 0
      %v1371 = vsel %vm457, %v1343, 0
      %v1374 = vsel %vm457, %v1345, 0
      %v1377 = vsel %vm457, %v1347, 0
      %v1380 = vsel %vm457, %v1349, 0
      %v1383 = vsel %vm457, %v1351, 0
      %v1386 = vsel %vm457, %v1353, 0
      %v1389 = vsel %vm457, %v1355, 0
      %v1392 = vsel %vm457, %v1357, 0
      %v1395 = vsel %vm457, %v1359, 0
      %v1398 = vsel %vm457, %v1361, 0
      %v1401 = vsel %vm457, %v1363, 0
      %1403 = vmatprep.subr.bf16.mxu0 %v1368
      %1404 = vmatpush1.bf16.xpose.msra.mxu0 %v1340
      %1405 = vmatprep.subr.bf16.mxu0 %v1371
      %1406 = vmatpush1.bf16.xpose.msra.mxu0 %v1342
      %1407 = vmatprep.subr.bf16.mxu0 %v1374
      %1408 = vmatpush1.bf16.xpose.msra.mxu0 %v1344
      %1409 = vmatprep.subr.bf16.mxu0 %v1377
      %1410 = vmatpush1.bf16.xpose.msra.mxu0 %v1346
      %1411 = vmatprep.subr.bf16.mxu0 %v1380
      %1412 = vmatpush1.bf16.xpose.msra.mxu0 %v1348
      %1413 = vmatprep.subr.bf16.mxu0 %v1383
      %1414 = vmatpush1.bf16.xpose.msra.mxu0 %v1350
      %1415 = vmatprep.subr.bf16.mxu0 %v1386
      %1416 = vmatpush1.bf16.xpose.msra.mxu0 %v1352
      %1417 = vmatprep.subr.bf16.mxu0 %v1389
      %1418 = vmatpush1.bf16.xpose.msra.mxu0 %v1354
      %1419 = vmatprep.subr.bf16.mxu0 %v1392
      %1420 = vmatpush1.bf16.xpose.msra.mxu0 %v1356
      %1421 = vmatprep.subr.bf16.mxu0 %v1395
      %1422 = vmatpush1.bf16.xpose.msra.mxu0 %v1358
      %1423 = vmatprep.subr.bf16.mxu0 %v1398
      %1424 = vmatpush1.bf16.xpose.msra.mxu0 %v1360
      %1425 = vmatprep.subr.bf16.mxu0 %v1401
      %1426 = vmatpush1.bf16.xpose.msra.mxu0 %v1362
      %1427 = vmatprep.subr.bf16.mxu0 0
      %1428 = vmatpush1.bf16.xpose.msra.mxu0 0
      %1429 = vmatprep.subr.bf16.mxu0 0
      %1430 = vmatpush1.bf16.xpose.msra.mxu0 0
      %1431 = vmatprep.subr.bf16.mxu0 0
      %1432 = vmatpush1.bf16.xpose.msra.mxu0 0
      %1433 = vmatprep.subr.bf16.mxu0 0
      %1434 = vmatpush1.bf16.xpose.msra.mxu0 0
      %1435 = vmatprep.mubr.bf16.mxu0 %v1365
      %1436 = vmatmul.mubr.bf16.gmra.mrb[0].mxu0 %v701
      %v1437 = vpop.f32.mrb[0].mxu0
      %v1438 = vadd.f32 0.0, %v1437
      %v1439 = vpop.f32.mrb[0].mxu0
      %v1440 = vadd.f32 0.0, %v1439
      %v1441 = vpop.f32.mrb[0].mxu0
      %v1442 = vpop.f32.mrb[0].mxu0
      %1443 = vdwg.mxu0
      %v1444 = vld [vmem:[%s4] sm:$0xf]
      %v1445 = vld [vmem:[%s4 + $0x4] sm:$0xf]
      %v1446 = vpack.c.bf16 %v1438, %v1438
      %v1447 = vpack.c.bf16 %v1440, %v1440
      %v1448 = vpack.c.bf16 %v673, %v673
      %v1449 = vpack.c.bf16 %v675, %v675
      %v1450 = vpack.c.bf16 %v683, %v683
      %v1451 = vpack.c.bf16 %v685, %v685
      %v1452 = vpack.c.bf16 %v693, %v693
      %v1453 = vpack.c.bf16 %v695, %v695
      %1454 = vxpose.xlu0.c.b16.start [1/8] %v1448, 128
      %1455 = vxpose.xlu0.c.b16.cont [2/8] 0, 128
      %1456 = vxpose.xlu0.c.b16.cont [3/8] 0, 128
      %1457 = vxpose.xlu0.c.b16.cont [4/8] 0, 128
      %1458 = vxpose.xlu0.c.b16.cont [5/8] 0, 128
      %1459 = vxpose.xlu0.c.b16.cont [6/8] 0, 128
      %1460 = vxpose.xlu0.c.b16.cont [7/8] 0, 128
      %1461 = vxpose.xlu0.c.b16.end [8/8] 0, 128
      %v1462 = vpop.trf.xlu0
      %v1463 = vpop.trf.xlu0
      %v1464 = vpop.trf.xlu0
      %v1465 = vpop.trf.xlu0
      %v1466 = vpop.trf.xlu0
      %v1467 = vpop.trf.xlu0
      %v1468 = vpop.trf.xlu0
      %v1469 = vpop.trf.xlu0
      %1470 = vxpose.xlu0.c.b16.start [1/8] %v1449, 128
      %1471 = vxpose.xlu0.c.b16.cont [2/8] 0, 128
      %1472 = vxpose.xlu0.c.b16.cont [3/8] 0, 128
      %1473 = vxpose.xlu0.c.b16.cont [4/8] 0, 128
      %1474 = vxpose.xlu0.c.b16.cont [5/8] 0, 128
      %1475 = vxpose.xlu0.c.b16.cont [6/8] 0, 128
      %1476 = vxpose.xlu0.c.b16.cont [7/8] 0, 128
      %1477 = vxpose.xlu0.c.b16.end [8/8] 0, 128
      %v1478 = vpop.trf.xlu0
      %v1479 = vpop.trf.xlu0
      %v1480 = vpop.trf.xlu0
      %v1481 = vpop.trf.xlu0
      %v1482 = vpop.trf.xlu0
      %v1483 = vpop.trf.xlu0
      %v1484 = vpop.trf.xlu0
      %v1485 = vpop.trf.xlu0
      %v1487 = vsel %vm735, %v1462, 0
      %v1490 = vsel %vm735, %v1463, 0
      %v1493 = vsel %vm735, %v1464, 0
      %v1496 = vsel %vm735, %v1465, 0
      %v1499 = vsel %vm735, %v1466, 0
      %v1502 = vsel %vm735, %v1467, 0
      %v1505 = vsel %vm735, %v1468, 0
      %v1508 = vsel %vm735, %v1469, 0
      %v1511 = vsel %vm735, %v1478, 0
      %v1514 = vsel %vm735, %v1479, 0
      %v1517 = vsel %vm735, %v1480, 0
      %v1520 = vsel %vm735, %v1481, 0
      %v1523 = vsel %vm772, %v1450, 0
      %v1526 = vsel %vm772, %v1451, 0
      %1528 = vmatprep.subr.bf16.mxu0 %v1526
      %1529 = vmatpush1.bf16.msra.mxu0 %v1523
      %1530 = vmatprep.subr.bf16.mxu0 0
      %1531 = vmatpush1.bf16.msra.mxu0 0
      %1532 = vmatprep.subr.bf16.mxu0 0
      %1533 = vmatpush1.bf16.msra.mxu0 0
      %1534 = vmatprep.subr.bf16.mxu0 0
      %1535 = vmatpush1.bf16.msra.mxu0 0
      %1536 = vmatprep.subr.bf16.mxu0 0
      %1537 = vmatpush1.bf16.msra.mxu0 0
      %1538 = vmatprep.subr.bf16.mxu0 0
      %1539 = vmatpush1.bf16.msra.mxu0 0
      %1540 = vmatprep.subr.bf16.mxu0 0
      %1541 = vmatpush1.bf16.msra.mxu0 0
      %1542 = vmatprep.subr.bf16.mxu0 0
      %1543 = vmatpush1.bf16.msra.mxu0 0
      %1544 = vmatprep.subr.bf16.mxu0 0
      %1545 = vmatpush1.bf16.msra.mxu0 0
      %1546 = vmatprep.subr.bf16.mxu0 0
      %1547 = vmatpush1.bf16.msra.mxu0 0
      %1548 = vmatprep.subr.bf16.mxu0 0
      %1549 = vmatpush1.bf16.msra.mxu0 0
      %1550 = vmatprep.subr.bf16.mxu0 0
      %1551 = vmatpush1.bf16.msra.mxu0 0
      %1552 = vmatprep.subr.bf16.mxu0 0
      %1553 = vmatpush1.bf16.msra.mxu0 0
      %1554 = vmatprep.subr.bf16.mxu0 0
      %1555 = vmatpush1.bf16.msra.mxu0 0
      %1556 = vmatprep.subr.bf16.mxu0 0
      %1557 = vmatpush1.bf16.msra.mxu0 0
      %1558 = vmatprep.subr.bf16.mxu0 0
      %1559 = vmatpush1.bf16.msra.mxu0 0
      %1560 = vmatprep.mubr.bf16.mxu0 0
      %1561 = vmatmul.mubr.bf16.gmra.mrb[0].mxu0 %v1487
      %v1562 = vpop.f32.mrb[0].mxu0
      %v1563 = vadd.f32 0.0, %v1562
      %v1564 = vpop.f32.mrb[0].mxu0
      %v1565 = vadd.f32 0.0, %v1564
      %v1566 = vpop.f32.mrb[0].mxu0
      %v1567 = vadd.f32 0.0, %v1566
      %v1568 = vpop.f32.mrb[0].mxu0
      %v1569 = vadd.f32 0.0, %v1568
      %1570 = vmatprep.mubr.bf16.mxu0 0
      %1571 = vmatmul.mubr.bf16.gmra.mrb[0].mxu0 %v1490
      %v1572 = vpop.f32.mrb[0].mxu0
      %v1573 = vadd.f32 0.0, %v1572
      %v1574 = vpop.f32.mrb[0].mxu0
      %v1575 = vadd.f32 0.0, %v1574
      %v1576 = vpop.f32.mrb[0].mxu0
      %v1577 = vadd.f32 0.0, %v1576
      %v1578 = vpop.f32.mrb[0].mxu0
      %v1579 = vadd.f32 0.0, %v1578
      %1580 = vmatprep.mubr.bf16.mxu0 0
      %1581 = vmatmul.mubr.bf16.gmra.mrb[0].mxu0 %v1493
      %v1582 = vpop.f32.mrb[0].mxu0
      %v1583 = vadd.f32 0.0, %v1582
      %v1584 = vpop.f32.mrb[0].mxu0
      %v1585 = vadd.f32 0.0, %v1584
      %v1586 = vpop.f32.mrb[0].mxu0
      %v1587 = vadd.f32 0.0, %v1586
      %v1588 = vpop.f32.mrb[0].mxu0
      %v1589 = vadd.f32 0.0, %v1588
      %1590 = vmatprep.mubr.bf16.mxu0 0
      %1591 = vmatmul.mubr.bf16.gmra.mrb[0].mxu0 %v1496
      %v1592 = vpop.f32.mrb[0].mxu0
      %v1593 = vadd.f32 0.0, %v1592
      %v1594 = vpop.f32.mrb[0].mxu0
      %v1595 = vadd.f32 0.0, %v1594
      %v1596 = vpop.f32.mrb[0].mxu0
      %v1597 = vadd.f32 0.0, %v1596
      %v1598 = vpop.f32.mrb[0].mxu0
      %v1599 = vadd.f32 0.0, %v1598
      %1600 = vmatprep.mubr.bf16.mxu0 0
      %1601 = vmatmul.mubr.bf16.gmra.mrb[0].mxu0 %v1499
      %v1602 = vpop.f32.mrb[0].mxu0
      %v1603 = vadd.f32 0.0, %v1602
      %v1604 = vpop.f32.mrb[0].mxu0
      %v1605 = vadd.f32 0.0, %v1604
      %v1606 = vpop.f32.mrb[0].mxu0
      %v1607 = vadd.f32 0.0, %v1606
      %v1608 = vpop.f32.mrb[0].mxu0
      %v1609 = vadd.f32 0.0, %v1608
      %1610 = vmatprep.mubr.bf16.mxu0 0
      %1611 = vmatmul.mubr.bf16.gmra.mrb[0].mxu0 %v1502
      %v1612 = vpop.f32.mrb[0].mxu0
      %v1613 = vadd.f32 0.0, %v1612
      %v1614 = vpop.f32.mrb[0].mxu0
      %v1615 = vadd.f32 0.0, %v1614
      %v1616 = vpop.f32.mrb[0].mxu0
      %v1617 = vadd.f32 0.0, %v1616
      %v1618 = vpop.f32.mrb[0].mxu0
      %v1619 = vadd.f32 0.0, %v1618
      %1620 = vmatprep.mubr.bf16.mxu0 0
      %1621 = vmatmul.mubr.bf16.gmra.mrb[0].mxu0 %v1505
      %v1622 = vpop.f32.mrb[0].mxu0
      %v1623 = vadd.f32 0.0, %v1622
      %v1624 = vpop.f32.mrb[0].mxu0
      %v1625 = vadd.f32 0.0, %v1624
      %v1626 = vpop.f32.mrb[0].mxu0
      %v1627 = vadd.f32 0.0, %v1626
      %v1628 = vpop.f32.mrb[0].mxu0
      %v1629 = vadd.f32 0.0, %v1628
      %1630 = vmatprep.mubr.bf16.mxu0 0
      %1631 = vmatmul.mubr.bf16.gmra.mrb[0].mxu0 %v1508
      %v1632 = vpop.f32.mrb[0].mxu0
      %v1633 = vadd.f32 0.0, %v1632
      %v1634 = vpop.f32.mrb[0].mxu0
      %v1635 = vadd.f32 0.0, %v1634
      %v1636 = vpop.f32.mrb[0].mxu0
      %v1637 = vadd.f32 0.0, %v1636
      %v1638 = vpop.f32.mrb[0].mxu0
      %v1639 = vadd.f32 0.0, %v1638
      %1640 = vmatprep.mubr.bf16.mxu0 0
      %1641 = vmatmul.mubr.bf16.gmra.mrb[0].mxu0 %v1511
      %v1642 = vpop.f32.mrb[0].mxu0
      %v1643 = vadd.f32 0.0, %v1642
      %v1644 = vpop.f32.mrb[0].mxu0
      %v1645 = vadd.f32 0.0, %v1644
      %v1646 = vpop.f32.mrb[0].mxu0
      %v1647 = vadd.f32 0.0, %v1646
      %v1648 = vpop.f32.mrb[0].mxu0
      %v1649 = vadd.f32 0.0, %v1648
      %1650 = vmatprep.mubr.bf16.mxu0 0
      %1651 = vmatmul.mubr.bf16.gmra.mrb[0].mxu0 %v1514
      %v1652 = vpop.f32.mrb[0].mxu0
      %v1653 = vadd.f32 0.0, %v1652
      %v1654 = vpop.f32.mrb[0].mxu0
      %v1655 = vadd.f32 0.0, %v1654
      %v1656 = vpop.f32.mrb[0].mxu0
      %v1657 = vadd.f32 0.0, %v1656
      %v1658 = vpop.f32.mrb[0].mxu0
      %v1659 = vadd.f32 0.0, %v1658
      %1660 = vmatprep.mubr.bf16.mxu0 0
      %1661 = vmatmul.mubr.bf16.gmra.mrb[0].mxu0 %v1517
      %v1662 = vpop.f32.mrb[0].mxu0
      %v1663 = vadd.f32 0.0, %v1662
      %v1664 = vpop.f32.mrb[0].mxu0
      %v1665 = vadd.f32 0.0, %v1664
      %v1666 = vpop.f32.mrb[0].mxu0
      %v1667 = vadd.f32 0.0, %v1666
      %v1668 = vpop.f32.mrb[0].mxu0
      %v1669 = vadd.f32 0.0, %v1668
      %1670 = vmatprep.mubr.bf16.mxu0 0
      %1671 = vmatmul.mubr.bf16.gmra.mrb[0].mxu0 %v1520
      %v1672 = vpop.f32.mrb[0].mxu0
      %v1673 = vadd.f32 0.0, %v1672
      %v1674 = vpop.f32.mrb[0].mxu0
      %v1675 = vadd.f32 0.0, %v1674
      %v1676 = vpop.f32.mrb[0].mxu0
      %v1677 = vadd.f32 0.0, %v1676
      %v1678 = vpop.f32.mrb[0].mxu0
      %v1679 = vadd.f32 0.0, %v1678
      %1680 = vdwg.mxu0
      %v1681 = vsel %vm457, %v1565, -inf
      %v1682 = vmax.f32 %v1563, %v1681
      %1683 = vmax.xlane.f32.xlu0 %v1682
      %v1684 = vpop.xlane.xlu0 %1683
      %v1685 = vsel %vm457, %v1569, -inf
      %v1686 = vmax.f32 %v1567, %v1685
      %1687 = vmax.xlane.f32.xlu0 %v1686
      %v1688 = vpop.xlane.xlu0 %1687
      %v1689 = vsel %vm457, %v1575, -inf
      %v1690 = vmax.f32 %v1573, %v1689
      %1691 = vmax.xlane.f32.xlu0 %v1690
      %v1692 = vpop.xlane.xlu0 %1691
      %v1693 = vsel %vm457, %v1579, -inf
      %v1694 = vmax.f32 %v1577, %v1693
      %1695 = vmax.xlane.f32.xlu0 %v1694
      %v1696 = vpop.xlane.xlu0 %1695
      %v1697 = vsel %vm457, %v1585, -inf
      %v1698 = vmax.f32 %v1583, %v1697
      %1699 = vmax.xlane.f32.xlu0 %v1698
      %v1700 = vpop.xlane.xlu0 %1699
      %v1701 = vsel %vm457, %v1589, -inf
      %v1702 = vmax.f32 %v1587, %v1701
      %1703 = vmax.xlane.f32.xlu0 %v1702
      %v1704 = vpop.xlane.xlu0 %1703
      %v1705 = vsel %vm457, %v1595, -inf
      %v1706 = vmax.f32 %v1593, %v1705
      %1707 = vmax.xlane.f32.xlu0 %v1706
      %v1708 = vpop.xlane.xlu0 %1707
      %v1709 = vsel %vm457, %v1599, -inf
      %v1710 = vmax.f32 %v1597, %v1709
      %1711 = vmax.xlane.f32.xlu0 %v1710
      %v1712 = vpop.xlane.xlu0 %1711
      %v1713 = vsel %vm457, %v1605, -inf
      %v1714 = vmax.f32 %v1603, %v1713
      %1715 = vmax.xlane.f32.xlu0 %v1714
      %v1716 = vpop.xlane.xlu0 %1715
      %v1717 = vsel %vm457, %v1609, -inf
      %v1718 = vmax.f32 %v1607, %v1717
      %1719 = vmax.xlane.f32.xlu0 %v1718
      %v1720 = vpop.xlane.xlu0 %1719
      %v1721 = vsel %vm457, %v1615, -inf
      %v1722 = vmax.f32 %v1613, %v1721
      %1723 = vmax.xlane.f32.xlu0 %v1722
      %v1724 = vpop.xlane.xlu0 %1723
      %v1725 = vsel %vm457, %v1619, -inf
      %v1726 = vmax.f32 %v1617, %v1725
      %1727 = vmax.xlane.f32.xlu0 %v1726
      %v1728 = vpop.xlane.xlu0 %1727
      %v1729 = vsel %vm457, %v1625, -inf
      %v1730 = vmax.f32 %v1623, %v1729
      %1731 = vmax.xlane.f32.xlu0 %v1730
      %v1732 = vpop.xlane.xlu0 %1731
      %v1733 = vsel %vm457, %v1629, -inf
      %v1734 = vmax.f32 %v1627, %v1733
      %1735 = vmax.xlane.f32.xlu0 %v1734
      %v1736 = vpop.xlane.xlu0 %1735
      %v1737 = vsel %vm457, %v1635, -inf
      %v1738 = vmax.f32 %v1633, %v1737
      %1739 = vmax.xlane.f32.xlu0 %v1738
      %v1740 = vpop.xlane.xlu0 %1739
      %v1741 = vsel %vm457, %v1639, -inf
      %v1742 = vmax.f32 %v1637, %v1741
      %1743 = vmax.xlane.f32.xlu0 %v1742
      %v1744 = vpop.xlane.xlu0 %1743
      %v1745 = vsel %vm457, %v1645, -inf
      %v1746 = vmax.f32 %v1643, %v1745
      %1747 = vmax.xlane.f32.xlu0 %v1746
      %v1748 = vpop.xlane.xlu0 %1747
      %v1749 = vsel %vm457, %v1649, -inf
      %v1750 = vmax.f32 %v1647, %v1749
      %1751 = vmax.xlane.f32.xlu0 %v1750
      %v1752 = vpop.xlane.xlu0 %1751
      %v1753 = vsel %vm457, %v1655, -inf
      %v1754 = vmax.f32 %v1653, %v1753
      %1755 = vmax.xlane.f32.xlu0 %v1754
      %v1756 = vpop.xlane.xlu0 %1755
      %v1757 = vsel %vm457, %v1659, -inf
      %v1758 = vmax.f32 %v1657, %v1757
      %1759 = vmax.xlane.f32.xlu0 %v1758
      %v1760 = vpop.xlane.xlu0 %1759
      %v1761 = vsel %vm457, %v1665, -inf
      %v1762 = vmax.f32 %v1663, %v1761
      %1763 = vmax.xlane.f32.xlu0 %v1762
      %v1764 = vpop.xlane.xlu0 %1763
      %v1765 = vsel %vm457, %v1669, -inf
      %v1766 = vmax.f32 %v1667, %v1765
      %1767 = vmax.xlane.f32.xlu0 %v1766
      %v1768 = vpop.xlane.xlu0 %1767
      %v1769 = vsel %vm457, %v1675, -inf
      %v1770 = vmax.f32 %v1673, %v1769
      %1771 = vmax.xlane.f32.xlu0 %v1770
      %v1772 = vpop.xlane.xlu0 %1771
      %v1773 = vsel %vm457, %v1679, -inf
      %v1774 = vmax.f32 %v1677, %v1773
      %1775 = vmax.xlane.f32.xlu0 %v1774
      %v1776 = vpop.xlane.xlu0 %1775
      %v1777 = vsub.f32 %v1563, %v1684
      %v1778 = vsub.f32 %v1565, %v1684
      %v1779 = vsub.f32 %v1567, %v1688
      %v1780 = vsub.f32 %v1569, %v1688
      %v1781 = vsub.f32 %v1573, %v1692
      %v1782 = vsub.f32 %v1575, %v1692
      %v1783 = vsub.f32 %v1577, %v1696
      %v1784 = vsub.f32 %v1579, %v1696
      %v1785 = vsub.f32 %v1583, %v1700
      %v1786 = vsub.f32 %v1585, %v1700
      %v1787 = vsub.f32 %v1587, %v1704
      %v1788 = vsub.f32 %v1589, %v1704
      %v1789 = vsub.f32 %v1593, %v1708
      %v1790 = vsub.f32 %v1595, %v1708
      %v1791 = vsub.f32 %v1597, %v1712
      %v1792 = vsub.f32 %v1599, %v1712
      %v1793 = vsub.f32 %v1603, %v1716
      %v1794 = vsub.f32 %v1605, %v1716
      %v1795 = vsub.f32 %v1607, %v1720
      %v1796 = vsub.f32 %v1609, %v1720
      %v1797 = vsub.f32 %v1613, %v1724
      %v1798 = vsub.f32 %v1615, %v1724
      %v1799 = vsub.f32 %v1617, %v1728
      %v1800 = vsub.f32 %v1619, %v1728
      %v1801 = vsub.f32 %v1623, %v1732
      %v1802 = vsub.f32 %v1625, %v1732
      %v1803 = vsub.f32 %v1627, %v1736
      %v1804 = vsub.f32 %v1629, %v1736
      %v1805 = vsub.f32 %v1633, %v1740
      %v1806 = vsub.f32 %v1635, %v1740
      %v1807 = vsub.f32 %v1637, %v1744
      %v1808 = vsub.f32 %v1639, %v1744
      %v1809 = vsub.f32 %v1643, %v1748
      %v1810 = vsub.f32 %v1645, %v1748
      %v1811 = vsub.f32 %v1647, %v1752
      %v1812 = vsub.f32 %v1649, %v1752
      %v1813 = vsub.f32 %v1653, %v1756
      %v1814 = vsub.f32 %v1655, %v1756
      %v1815 = vsub.f32 %v1657, %v1760
      %v1816 = vsub.f32 %v1659, %v1760
      %v1817 = vsub.f32 %v1663, %v1764
      %v1818 = vsub.f32 %v1665, %v1764
      %v1819 = vsub.f32 %v1667, %v1768
      %v1820 = vsub.f32 %v1669, %v1768
      %v1821 = vsub.f32 %v1673, %v1772
      %v1822 = vsub.f32 %v1675, %v1772
      %v1823 = vsub.f32 %v1677, %v1776
      %v1824 = vsub.f32 %v1679, %v1776
      %v1825 = vmul.f32 %v1777, 1.442695
      %v1826 = vpow.pop %v1825
      %v1827 = vmul.f32 %v1778, 1.442695
      %v1828 = vpow.pop %v1827
      %v1829 = vmul.f32 %v1779, 1.442695
      %v1830 = vpow.pop %v1829
      %v1831 = vmul.f32 %v1780, 1.442695
      %v1832 = vpow.pop %v1831
      %v1833 = vmul.f32 %v1781, 1.442695
      %v1834 = vpow.pop %v1833
      %v1835 = vmul.f32 %v1782, 1.442695
      %v1836 = vpow.pop %v1835
      %v1837 = vmul.f32 %v1783, 1.442695
      %v1838 = vpow.pop %v1837
      %v1839 = vmul.f32 %v1784, 1.442695
      %v1840 = vpow.pop %v1839
      %v1841 = vmul.f32 %v1785, 1.442695
      %v1842 = vpow.pop %v1841
      %v1843 = vmul.f32 %v1786, 1.442695
      %v1844 = vpow.pop %v1843
      %v1845 = vmul.f32 %v1787, 1.442695
      %v1846 = vpow.pop %v1845
      %v1847 = vmul.f32 %v1788, 1.442695
      %v1848 = vpow.pop %v1847
      %v1849 = vmul.f32 %v1789, 1.442695
      %v1850 = vpow.pop %v1849
      %v1851 = vmul.f32 %v1790, 1.442695
      %v1852 = vpow.pop %v1851
      %v1853 = vmul.f32 %v1791, 1.442695
      %v1854 = vpow.pop %v1853
      %v1855 = vmul.f32 %v1792, 1.442695
      %v1856 = vpow.pop %v1855
      %v1857 = vmul.f32 %v1793, 1.442695
      %v1858 = vpow.pop %v1857
      %v1859 = vmul.f32 %v1794, 1.442695
      %v1860 = vpow.pop %v1859
      %v1861 = vmul.f32 %v1795, 1.442695
      %v1862 = vpow.pop %v1861
      %v1863 = vmul.f32 %v1796, 1.442695
      %v1864 = vpow.pop %v1863
      %v1865 = vmul.f32 %v1797, 1.442695
      %v1866 = vpow.pop %v1865
      %v1867 = vmul.f32 %v1798, 1.442695
      %v1868 = vpow.pop %v1867
      %v1869 = vmul.f32 %v1799, 1.442695
      %v1870 = vpow.pop %v1869
      %v1871 = vmul.f32 %v1800, 1.442695
      %v1872 = vpow.pop %v1871
      %v1873 = vmul.f32 %v1801, 1.442695
      %v1874 = vpow.pop %v1873
      %v1875 = vmul.f32 %v1802, 1.442695
      %v1876 = vpow.pop %v1875
      %v1877 = vmul.f32 %v1803, 1.442695
      %v1878 = vpow.pop %v1877
      %v1879 = vmul.f32 %v1804, 1.442695
      %v1880 = vpow.pop %v1879
      %v1881 = vmul.f32 %v1805, 1.442695
      %v1882 = vpow.pop %v1881
      %v1883 = vmul.f32 %v1806, 1.442695
      %v1884 = vpow.pop %v1883
      %v1885 = vmul.f32 %v1807, 1.442695
      %v1886 = vpow.pop %v1885
      %v1887 = vmul.f32 %v1808, 1.442695
      %v1888 = vpow.pop %v1887
      %v1889 = vmul.f32 %v1809, 1.442695
      %v1890 = vpow.pop %v1889
      %v1891 = vmul.f32 %v1810, 1.442695
      %v1892 = vpow.pop %v1891
      %v1893 = vmul.f32 %v1811, 1.442695
      %v1894 = vpow.pop %v1893
      %v1895 = vmul.f32 %v1812, 1.442695
      %v1896 = vpow.pop %v1895
      %v1897 = vmul.f32 %v1813, 1.442695
      %v1898 = vpow.pop %v1897
      %v1899 = vmul.f32 %v1814, 1.442695
      %v1900 = vpow.pop %v1899
      %v1901 = vmul.f32 %v1815, 1.442695
      %v1902 = vpow.pop %v1901
      %v1903 = vmul.f32 %v1816, 1.442695
      %v1904 = vpow.pop %v1903
      %v1905 = vmul.f32 %v1817, 1.442695
      %v1906 = vpow.pop %v1905
      %v1907 = vmul.f32 %v1818, 1.442695
      %v1908 = vpow.pop %v1907
      %v1909 = vmul.f32 %v1819, 1.442695
      %v1910 = vpow.pop %v1909
      %v1911 = vmul.f32 %v1820, 1.442695
      %v1912 = vpow.pop %v1911
      %v1913 = vmul.f32 %v1821, 1.442695
      %v1914 = vpow.pop %v1913
      %v1915 = vmul.f32 %v1822, 1.442695
      %v1916 = vpow.pop %v1915
      %v1917 = vmul.f32 %v1823, 1.442695
      %v1918 = vpow.pop %v1917
      %v1919 = vmul.f32 %v1824, 1.442695
      %v1920 = vpow.pop %v1919
      %v1921 = vsel %vm457, %v1828, 0.0
      %v1922 = vadd.f32 %v1826, %v1921
      %1923 = vadd.xlane.f32.xlu0 %v1922
      %v1924 = vpop.xlane.xlu0 %1923
      %v1925 = vsel %vm457, %v1832, 0.0
      %v1926 = vadd.f32 %v1830, %v1925
      %1927 = vadd.xlane.f32.xlu0 %v1926
      %v1928 = vpop.xlane.xlu0 %1927
      %v1929 = vsel %vm457, %v1836, 0.0
      %v1930 = vadd.f32 %v1834, %v1929
      %1931 = vadd.xlane.f32.xlu0 %v1930
      %v1932 = vpop.xlane.xlu0 %1931
      %v1933 = vsel %vm457, %v1840, 0.0
      %v1934 = vadd.f32 %v1838, %v1933
      %1935 = vadd.xlane.f32.xlu0 %v1934
      %v1936 = vpop.xlane.xlu0 %1935
      %v1937 = vsel %vm457, %v1844, 0.0
      %v1938 = vadd.f32 %v1842, %v1937
      %1939 = vadd.xlane.f32.xlu0 %v1938
      %v1940 = vpop.xlane.xlu0 %1939
      %v1941 = vsel %vm457, %v1848, 0.0
      %v1942 = vadd.f32 %v1846, %v1941
      %1943 = vadd.xlane.f32.xlu0 %v1942
      %v1944 = vpop.xlane.xlu0 %1943
      %v1945 = vsel %vm457, %v1852, 0.0
      %v1946 = vadd.f32 %v1850, %v1945
      %1947 = vadd.xlane.f32.xlu0 %v1946
      %v1948 = vpop.xlane.xlu0 %1947
      %v1949 = vsel %vm457, %v1856, 0.0
      %v1950 = vadd.f32 %v1854, %v1949
      %1951 = vadd.xlane.f32.xlu0 %v1950
      %v1952 = vpop.xlane.xlu0 %1951
      %v1953 = vsel %vm457, %v1860, 0.0
      %v1954 = vadd.f32 %v1858, %v1953
      %1955 = vadd.xlane.f32.xlu0 %v1954
      %v1956 = vpop.xlane.xlu0 %1955
      %v1957 = vsel %vm457, %v1864, 0.0
      %v1958 = vadd.f32 %v1862, %v1957
      %1959 = vadd.xlane.f32.xlu0 %v1958
      %v1960 = vpop.xlane.xlu0 %1959
      %v1961 = vsel %vm457, %v1868, 0.0
      %v1962 = vadd.f32 %v1866, %v1961
      %1963 = vadd.xlane.f32.xlu0 %v1962
      %v1964 = vpop.xlane.xlu0 %1963
      %v1965 = vsel %vm457, %v1872, 0.0
      %v1966 = vadd.f32 %v1870, %v1965
      %1967 = vadd.xlane.f32.xlu0 %v1966
      %v1968 = vpop.xlane.xlu0 %1967
      %v1969 = vsel %vm457, %v1876, 0.0
      %v1970 = vadd.f32 %v1874, %v1969
      %1971 = vadd.xlane.f32.xlu0 %v1970
      %v1972 = vpop.xlane.xlu0 %1971
      %v1973 = vsel %vm457, %v1880, 0.0
      %v1974 = vadd.f32 %v1878, %v1973
      %1975 = vadd.xlane.f32.xlu0 %v1974
      %v1976 = vpop.xlane.xlu0 %1975
      %v1977 = vsel %vm457, %v1884, 0.0
      %v1978 = vadd.f32 %v1882, %v1977
      %1979 = vadd.xlane.f32.xlu0 %v1978
      %v1980 = vpop.xlane.xlu0 %1979
      %v1981 = vsel %vm457, %v1888, 0.0
      %v1982 = vadd.f32 %v1886, %v1981
      %1983 = vadd.xlane.f32.xlu0 %v1982
      %v1984 = vpop.xlane.xlu0 %1983
      %v1985 = vsel %vm457, %v1892, 0.0
      %v1986 = vadd.f32 %v1890, %v1985
      %1987 = vadd.xlane.f32.xlu0 %v1986
      %v1988 = vpop.xlane.xlu0 %1987
      %v1989 = vsel %vm457, %v1896, 0.0
      %v1990 = vadd.f32 %v1894, %v1989
      %1991 = vadd.xlane.f32.xlu0 %v1990
      %v1992 = vpop.xlane.xlu0 %1991
      %v1993 = vsel %vm457, %v1900, 0.0
      %v1994 = vadd.f32 %v1898, %v1993
      %1995 = vadd.xlane.f32.xlu0 %v1994
      %v1996 = vpop.xlane.xlu0 %1995
      %v1997 = vsel %vm457, %v1904, 0.0
      %v1998 = vadd.f32 %v1902, %v1997
      %1999 = vadd.xlane.f32.xlu0 %v1998
      %v2000 = vpop.xlane.xlu0 %1999
      %v2001 = vsel %vm457, %v1908, 0.0
      %v2002 = vadd.f32 %v1906, %v2001
      %2003 = vadd.xlane.f32.xlu0 %v2002
      %v2004 = vpop.xlane.xlu0 %2003
      %v2005 = vsel %vm457, %v1912, 0.0
      %v2006 = vadd.f32 %v1910, %v2005
      %2007 = vadd.xlane.f32.xlu0 %v2006
      %v2008 = vpop.xlane.xlu0 %2007
      %v2009 = vsel %vm457, %v1916, 0.0
      %v2010 = vadd.f32 %v1914, %v2009
      %2011 = vadd.xlane.f32.xlu0 %v2010
      %v2012 = vpop.xlane.xlu0 %2011
      %v2013 = vsel %vm457, %v1920, 0.0
      %v2014 = vadd.f32 %v1918, %v2013
      %2015 = vadd.xlane.f32.xlu0 %v2014
      %v2016 = vpop.xlane.xlu0 %2015
      %v2017 = vrcp.pop %v1924
      %v2018 = vrcp.pop %v1928
      %v2019 = vrcp.pop %v1932
      %v2020 = vrcp.pop %v1936
      %v2021 = vrcp.pop %v1940
      %v2022 = vrcp.pop %v1944
      %v2023 = vrcp.pop %v1948
      %v2024 = vrcp.pop %v1952
      %v2025 = vrcp.pop %v1956
      %v2026 = vrcp.pop %v1960
      %v2027 = vrcp.pop %v1964
      %v2028 = vrcp.pop %v1968
      %v2029 = vrcp.pop %v1972
      %v2030 = vrcp.pop %v1976
      %v2031 = vrcp.pop %v1980
      %v2032 = vrcp.pop %v1984
      %v2033 = vrcp.pop %v1988
      %v2034 = vrcp.pop %v1992
      %v2035 = vrcp.pop %v1996
      %v2036 = vrcp.pop %v2000
      %v2037 = vrcp.pop %v2004
      %v2038 = vrcp.pop %v2008
      %v2039 = vrcp.pop %v2012
      %v2040 = vrcp.pop %v2016
      %v2041 = vmul.f32 %v1826, %v2017
      %v2042 = vmul.f32 %v1828, %v2017
      %v2043 = vmul.f32 %v1830, %v2018
      %v2044 = vmul.f32 %v1832, %v2018
      %v2045 = vmul.f32 %v1834, %v2019
      %v2046 = vmul.f32 %v1836, %v2019
      %v2047 = vmul.f32 %v1838, %v2020
      %v2048 = vmul.f32 %v1840, %v2020
      %v2049 = vmul.f32 %v1842, %v2021
      %v2050 = vmul.f32 %v1844, %v2021
      %v2051 = vmul.f32 %v1846, %v2022
      %v2052 = vmul.f32 %v1848, %v2022
      %v2053 = vmul.f32 %v1850, %v2023
      %v2054 = vmul.f32 %v1852, %v2023
      %v2055 = vmul.f32 %v1854, %v2024
      %v2056 = vmul.f32 %v1856, %v2024
      %v2057 = vmul.f32 %v1858, %v2025
      %v2058 = vmul.f32 %v1860, %v2025
      %v2059 = vmul.f32 %v1862, %v2026
      %v2060 = vmul.f32 %v1864, %v2026
      %v2061 = vmul.f32 %v1866, %v2027
      %v2062 = vmul.f32 %v1868, %v2027
      %v2063 = vmul.f32 %v1870, %v2028
      %v2064 = vmul.f32 %v1872, %v2028
      %v2065 = vmul.f32 %v1874, %v2029
      %v2066 = vmul.f32 %v1876, %v2029
      %v2067 = vmul.f32 %v1878, %v2030
      %v2068 = vmul.f32 %v1880, %v2030
      %v2069 = vmul.f32 %v1882, %v2031
      %v2070 = vmul.f32 %v1884, %v2031
      %v2071 = vmul.f32 %v1886, %v2032
      %v2072 = vmul.f32 %v1888, %v2032
      %v2073 = vmul.f32 %v1890, %v2033
      %v2074 = vmul.f32 %v1892, %v2033
      %v2075 = vmul.f32 %v1894, %v2034
      %v2076 = vmul.f32 %v1896, %v2034
      %v2077 = vmul.f32 %v1898, %v2035
      %v2078 = vmul.f32 %v1900, %v2035
      %v2079 = vmul.f32 %v1902, %v2036
      %v2080 = vmul.f32 %v1904, %v2036
      %v2081 = vmul.f32 %v1906, %v2037
      %v2082 = vmul.f32 %v1908, %v2037
      %v2083 = vmul.f32 %v1910, %v2038
      %v2084 = vmul.f32 %v1912, %v2038
      %v2085 = vmul.f32 %v1914, %v2039
      %v2086 = vmul.f32 %v1916, %v2039
      %v2087 = vmul.f32 %v1918, %v2040
      %v2088 = vmul.f32 %v1920, %v2040
      %v2089 = vpack.c.bf16 %v2043, %v2041
      %v2090 = vpack.c.bf16 %v2044, %v2042
      %v2091 = vpack.c.bf16 %v2047, %v2045
      %v2092 = vpack.c.bf16 %v2048, %v2046
      %v2093 = vpack.c.bf16 %v2051, %v2049
      %v2094 = vpack.c.bf16 %v2052, %v2050
      %v2095 = vpack.c.bf16 %v2055, %v2053
      %v2096 = vpack.c.bf16 %v2056, %v2054
      %v2097 = vpack.c.bf16 %v2059, %v2057
      %v2098 = vpack.c.bf16 %v2060, %v2058
      %v2099 = vpack.c.bf16 %v2063, %v2061
      %v2100 = vpack.c.bf16 %v2064, %v2062
      %v2101 = vpack.c.bf16 %v2067, %v2065
      %v2102 = vpack.c.bf16 %v2068, %v2066
      %v2103 = vpack.c.bf16 %v2071, %v2069
      %v2104 = vpack.c.bf16 %v2072, %v2070
      %v2105 = vpack.c.bf16 %v2075, %v2073
      %v2106 = vpack.c.bf16 %v2076, %v2074
      %v2107 = vpack.c.bf16 %v2079, %v2077
      %v2108 = vpack.c.bf16 %v2080, %v2078
      %v2109 = vpack.c.bf16 %v2083, %v2081
      %v2110 = vpack.c.bf16 %v2084, %v2082
      %v2111 = vpack.c.bf16 %v2087, %v2085
      %v2112 = vpack.c.bf16 %v2088, %v2086
      %v2114 = vsel %vm457, %v1453, 0
      %v2117 = vsel %vm457, %v2090, 0
      %v2120 = vsel %vm457, %v2092, 0
      %v2123 = vsel %vm457, %v2094, 0
      %v2126 = vsel %vm457, %v2096, 0
      %v2129 = vsel %vm457, %v2098, 0
      %v2132 = vsel %vm457, %v2100, 0
      %v2135 = vsel %vm457, %v2102, 0
      %v2138 = vsel %vm457, %v2104, 0
      %v2141 = vsel %vm457, %v2106, 0
      %v2144 = vsel %vm457, %v2108, 0
      %v2147 = vsel %vm457, %v2110, 0
      %v2150 = vsel %vm457, %v2112, 0
      %2152 = vmatprep.subr.bf16.mxu0 %v2117
      %2153 = vmatpush1.bf16.xpose.msra.mxu0 %v2089
      %2154 = vmatprep.subr.bf16.mxu0 %v2120
      %2155 = vmatpush1.bf16.xpose.msra.mxu0 %v2091
      %2156 = vmatprep.subr.bf16.mxu0 %v2123
      %2157 = vmatpush1.bf16.xpose.msra.mxu0 %v2093
      %2158 = vmatprep.subr.bf16.mxu0 %v2126
      %2159 = vmatpush1.bf16.xpose.msra.mxu0 %v2095
      %2160 = vmatprep.subr.bf16.mxu0 %v2129
      %2161 = vmatpush1.bf16.xpose.msra.mxu0 %v2097
      %2162 = vmatprep.subr.bf16.mxu0 %v2132
      %2163 = vmatpush1.bf16.xpose.msra.mxu0 %v2099
      %2164 = vmatprep.subr.bf16.mxu0 %v2135
      %2165 = vmatpush1.bf16.xpose.msra.mxu0 %v2101
      %2166 = vmatprep.subr.bf16.mxu0 %v2138
      %2167 = vmatpush1.bf16.xpose.msra.mxu0 %v2103
      %2168 = vmatprep.subr.bf16.mxu0 %v2141
      %2169 = vmatpush1.bf16.xpose.msra.mxu0 %v2105
      %2170 = vmatprep.subr.bf16.mxu0 %v2144
      %2171 = vmatpush1.bf16.xpose.msra.mxu0 %v2107
      %2172 = vmatprep.subr.bf16.mxu0 %v2147
      %2173 = vmatpush1.bf16.xpose.msra.mxu0 %v2109
      %2174 = vmatprep.subr.bf16.mxu0 %v2150
      %2175 = vmatpush1.bf16.xpose.msra.mxu0 %v2111
      %2176 = vmatprep.subr.bf16.mxu0 0
      %2177 = vmatpush1.bf16.xpose.msra.mxu0 0
      %2178 = vmatprep.subr.bf16.mxu0 0
      %2179 = vmatpush1.bf16.xpose.msra.mxu0 0
      %2180 = vmatprep.subr.bf16.mxu0 0
      %2181 = vmatpush1.bf16.xpose.msra.mxu0 0
      %2182 = vmatprep.subr.bf16.mxu0 0
      %2183 = vmatpush1.bf16.xpose.msra.mxu0 0
      %2184 = vmatprep.mubr.bf16.mxu0 %v2114
      %2185 = vmatmul.mubr.bf16.gmra.mrb[0].mxu0 %v1452
      %v2186 = vpop.f32.mrb[0].mxu0
      %v2187 = vadd.f32 0.0, %v2186
      %v2188 = vpop.f32.mrb[0].mxu0
      %v2189 = vadd.f32 0.0, %v2188
      %v2190 = vpop.f32.mrb[0].mxu0
      %v2191 = vpop.f32.mrb[0].mxu0
      %2192 = vdwg.mxu0
      %s2193 = scalar_lea.vmem %s4, 8
      %v2194 = vld [vmem:[%s2193] sm:$0xf]
      %v2195 = vld [vmem:[%s2193 + $0x4] sm:$0xf]
      %v2196 = vpack.c.bf16 %v2187, %v2187
      %v2197 = vpack.c.bf16 %v2189, %v2189
      %v2200 = vunpack.c.l.b16 %v2194
      %v2201 = vunpack.c.l.b16 %v2195
      %v2202 = vpack.c.b16 %v2201, %v2200
      %v2204 = vsel %vm735, %v2202, 0
      %v2207 = vsel %vm772, %v2196, 0
      %v2210 = vsel %vm772, %v2197, 0
      %2212 = vmatprep.subr.bf16.mxu0 %v2210
      %2213 = vmatpush1.bf16.msra.mxu0 %v2207
      %2214 = vmatprep.subr.bf16.mxu0 0
      %2215 = vmatpush1.bf16.msra.mxu0 0
      %2216 = vmatprep.subr.bf16.mxu0 0
      %2217 = vmatpush1.bf16.msra.mxu0 0
      %2218 = vmatprep.subr.bf16.mxu0 0
      %2219 = vmatpush1.bf16.msra.mxu0 0
      %2220 = vmatprep.subr.bf16.mxu0 0
      %2221 = vmatpush1.bf16.msra.mxu0 0
      %2222 = vmatprep.subr.bf16.mxu0 0
      %2223 = vmatpush1.bf16.msra.mxu0 0
      %2224 = vmatprep.subr.bf16.mxu0 0
      %2225 = vmatpush1.bf16.msra.mxu0 0
      %2226 = vmatprep.subr.bf16.mxu0 0
      %2227 = vmatpush1.bf16.msra.mxu0 0
      %2228 = vmatprep.subr.bf16.mxu0 0
      %2229 = vmatpush1.bf16.msra.mxu0 0
      %2230 = vmatprep.subr.bf16.mxu0 0
      %2231 = vmatpush1.bf16.msra.mxu0 0
      %2232 = vmatprep.subr.bf16.mxu0 0
      %2233 = vmatpush1.bf16.msra.mxu0 0
      %2234 = vmatprep.subr.bf16.mxu0 0
      %2235 = vmatpush1.bf16.msra.mxu0 0
      %2236 = vmatprep.subr.bf16.mxu0 0
      %2237 = vmatpush1.bf16.msra.mxu0 0
      %2238 = vmatprep.subr.bf16.mxu0 0
      %2239 = vmatpush1.bf16.msra.mxu0 0
      %2240 = vmatprep.subr.bf16.mxu0 0
      %2241 = vmatpush1.bf16.msra.mxu0 0
      %2242 = vmatprep.subr.bf16.mxu0 0
      %2243 = vmatpush1.bf16.msra.mxu0 0
      %2244 = vmatprep.mubr.bf16.mxu0 0
      %2245 = vmatmul.mubr.bf16.gmra.mrb[0].mxu0 %v2204
      %v2246 = vpop.f32.mrb[0].mxu0
      %v2247 = vadd.f32 0.0, %v2246
      %v2248 = vpop.f32.mrb[0].mxu0
      %v2249 = vadd.f32 0.0, %v2248
      %v2250 = vpop.f32.mrb[0].mxu0
      %v2251 = vadd.f32 0.0, %v2250
      %v2252 = vpop.f32.mrb[0].mxu0
      %v2253 = vadd.f32 0.0, %v2252
      %2254 = vdwg.mxu0
      %v2257 = vunpack.c.l.b16 %v1444
      %v2258 = vunpack.c.l.b16 %v1445
      %v2259 = vpack.c.b16 %v2258, %v2257
      %v2261 = vsel %vm735, %v2259, 0
      %v2264 = vsel %vm772, %v1446, 0
      %v2267 = vsel %vm772, %v1447, 0
      %2269 = vmatprep.subr.bf16.mxu0 %v2267
      %2270 = vmatpush1.bf16.msra.mxu0 %v2264
      %2271 = vmatprep.subr.bf16.mxu0 0
      %2272 = vmatpush1.bf16.msra.mxu0 0
      %2273 = vmatprep.subr.bf16.mxu0 0
      %2274 = vmatpush1.bf16.msra.mxu0 0
      %2275 = vmatprep.subr.bf16.mxu0 0
      %2276 = vmatpush1.bf16.msra.mxu0 0
      %2277 = vmatprep.subr.bf16.mxu0 0
      %2278 = vmatpush1.bf16.msra.mxu0 0
      %2279 = vmatprep.subr.bf16.mxu0 0
      %2280 = vmatpush1.bf16.msra.mxu0 0
      %2281 = vmatprep.subr.bf16.mxu0 0
      %2282 = vmatpush1.bf16.msra.mxu0 0
      %2283 = vmatprep.subr.bf16.mxu0 0
      %2284 = vmatpush1.bf16.msra.mxu0 0
      %2285 = vmatprep.subr.bf16.mxu0 0
      %2286 = vmatpush1.bf16.msra.mxu0 0
      %2287 = vmatprep.subr.bf16.mxu0 0
      %2288 = vmatpush1.bf16.msra.mxu0 0
      %2289 = vmatprep.subr.bf16.mxu0 0
      %2290 = vmatpush1.bf16.msra.mxu0 0
      %2291 = vmatprep.subr.bf16.mxu0 0
      %2292 = vmatpush1.bf16.msra.mxu0 0
      %2293 = vmatprep.subr.bf16.mxu0 0
      %2294 = vmatpush1.bf16.msra.mxu0 0
      %2295 = vmatprep.subr.bf16.mxu0 0
      %2296 = vmatpush1.bf16.msra.mxu0 0
      %2297 = vmatprep.subr.bf16.mxu0 0
      %2298 = vmatpush1.bf16.msra.mxu0 0
      %2299 = vmatprep.subr.bf16.mxu0 0
      %2300 = vmatpush1.bf16.msra.mxu0 0
      %2301 = vmatprep.mubr.bf16.mxu0 0
      %2302 = vmatmul.mubr.bf16.gmra.mrb[0].mxu0 %v2261
      %v2303 = vpop.f32.mrb[0].mxu0
      %v2304 = vadd.f32 %v2247, %v2303
      %v2305 = vpop.f32.mrb[0].mxu0
      %v2306 = vadd.f32 %v2249, %v2305
      %v2307 = vpop.f32.mrb[0].mxu0
      %v2308 = vadd.f32 %v2251, %v2307
      %v2309 = vpop.f32.mrb[0].mxu0
      %v2310 = vadd.f32 %v2253, %v2309
      %2311 = vdwg.mxu0
      %v2312 = vadd.f32 %v496, %v2304
      %v2313 = vadd.f32 %v498, %v2306
      %v2314 = vadd.f32 %v500, %v2308
      %v2315 = vadd.f32 %v502, %v2310
      %2317 = vset.pattern.permute.xlu0 0
      %2318 = vperm.xlu0 %2317, %v508
      %v2319 = vpop.permute.xlu0 %2318
      %2322 = vset.pattern.permute.xlu0 0
      %2323 = vperm.xlu0 %2322, %v509
      %v2324 = vpop.permute.xlu0 %2323
      %v2326 = vadd.f32 %v2312, %v2319
      %v2327 = vadd.f32 %v2313, %v2319
      %v2328 = vadd.f32 %v2314, %v2324
      %v2329 = vadd.f32 %v2315, %v2324
      %v2330 = vadd.f32 %v2326, %v2328
      %v2331 = vrot.slane %v2330, 4
      %v2332 = vadd.f32 %v2330, %v2331
      %v2333 = vrot.slane %v2332, 2
      %v2334 = vadd.f32 %v2332, %v2333
      %v2335 = vrot.slane %v2334, 1
      %v2336 = vadd.f32 %v2334, %v2335
      %v2337 = vsel %vm457, %v2327, 0.0
      %v2338 = vsel %vm457, %v2329, 0.0
      %v2339 = vadd.f32 %v2337, %v2338
      %v2340 = vrot.slane %v2339, 4
      %v2341 = vadd.f32 %v2339, %v2340
      %v2342 = vrot.slane %v2341, 2
      %v2343 = vadd.f32 %v2341, %v2342
      %v2344 = vrot.slane %v2343, 1
      %v2345 = vadd.f32 %v2343, %v2344
      %v2346 = vmul.f32 %v2336, %v536
      %v2347 = vmul.f32 %v2345, %v536
      %v2348 = vsub.f32 %v2326, %v2346
      %v2349 = vsub.f32 %v2327, %v2347
      %v2350 = vsub.f32 %v2328, %v2346
      %v2351 = vsub.f32 %v2329, %v2347
      %v2352 = vmul.f32 %v2348, %v2348
      %v2353 = vmul.f32 %v2349, %v2349
      %v2354 = vmul.f32 %v2350, %v2350
      %v2355 = vmul.f32 %v2351, %v2351
      %v2356 = vadd.f32 %v2352, %v2354
      %v2357 = vrot.slane %v2356, 4
      %v2358 = vadd.f32 %v2356, %v2357
      %v2359 = vrot.slane %v2358, 2
      %v2360 = vadd.f32 %v2358, %v2359
      %v2361 = vrot.slane %v2360, 1
      %v2362 = vadd.f32 %v2360, %v2361
      %v2363 = vsel %vm457, %v2353, 0.0
      %v2364 = vsel %vm457, %v2355, 0.0
      %v2365 = vadd.f32 %v2363, %v2364
      %v2366 = vrot.slane %v2365, 4
      %v2367 = vadd.f32 %v2365, %v2366
      %v2368 = vrot.slane %v2367, 2
      %v2369 = vadd.f32 %v2367, %v2368
      %v2370 = vrot.slane %v2369, 1
      %v2371 = vadd.f32 %v2369, %v2370
      %v2372 = vmul.f32 %v2362, %v536
      %v2373 = vmul.f32 %v2371, %v536
      %v2374 = vadd.f32 %v2372, 1e-05
      %v2375 = vadd.f32 %v2373, 1e-05
      %v2376 = vrsqrt.pop %v2374
      %v2377 = vrsqrt.pop %v2375
      %v2378 = vmul.f32 %v2348, %v2376
      %v2379 = vmul.f32 %v2349, %v2377
      %v2380 = vmul.f32 %v2350, %v2376
      %v2381 = vmul.f32 %v2351, %v2377
      %2383 = vset.pattern.permute.xlu0 0
      %2384 = vperm.xlu0 %2383, %v510
      %v2385 = vpop.permute.xlu0 %2384
      %2388 = vset.pattern.permute.xlu0 0
      %2389 = vperm.xlu0 %2388, %v511
      %v2390 = vpop.permute.xlu0 %2389
      %v2392 = vmul.f32 %v2378, %v2385
      %v2393 = vmul.f32 %v2379, %v2385
      %v2394 = vmul.f32 %v2380, %v2390
      %v2395 = vmul.f32 %v2381, %v2390
      %2397 = vset.pattern.permute.xlu0 0
      %2398 = vperm.xlu0 %2397, %v512
      %v2399 = vpop.permute.xlu0 %2398
      %2402 = vset.pattern.permute.xlu0 0
      %2403 = vperm.xlu0 %2402, %v513
      %v2404 = vpop.permute.xlu0 %2403
      %v2406 = vadd.f32 %v2392, %v2399
      %v2407 = vadd.f32 %v2393, %v2399
      %v2408 = vadd.f32 %v2394, %v2404
      %v2409 = vadd.f32 %v2395, %v2404
      %v2410 = vld [vmem:[%s5] sm:$0xf]
      %v2411 = vld [vmem:[%s5 + $0x4] sm:$0xf]
      %v2412 = vld [vmem:[%s5 + $0x8] sm:$0xf]
      %v2413 = vld [vmem:[%s5 + $0xc] sm:$0xf]
      %v2414 = vpack.c.bf16 %v2408, %v2406
      %v2415 = vpack.c.bf16 %v2409, %v2407
      %2417 = vset.pattern.permute.xlu0 0
      %2418 = vperm.xlu0 %2417, %v516
      %v2419 = vpop.permute.xlu0 %2418
      %2422 = vset.pattern.permute.xlu0 0
      %2423 = vperm.xlu0 %2422, %v517
      %v2424 = vpop.permute.xlu0 %2423
      %2427 = vset.pattern.permute.xlu0 0
      %2428 = vperm.xlu0 %2427, %v518
      %v2429 = vpop.permute.xlu0 %2428
      %2432 = vset.pattern.permute.xlu0 0
      %2433 = vperm.xlu0 %2432, %v519
      %v2434 = vpop.permute.xlu0 %2433
      %v2440 = vunpack.c.l.b16 %v2410
      %v2441 = vunpack.c.l.b16 %v2411
      %v2442 = vunpack.c.l.b16 %v2412
      %v2443 = vunpack.c.l.b16 %v2413
      %v2444 = vpack.c.b16 %v2441, %v2440
      %v2445 = vpack.c.b16 %v2443, %v2442
      %v2447 = vsel %vm624, %v2444, 0
      %v2450 = vsel %vm624, %v2445, 0
      %2452 = vmatprep.subr.bf16.mxu0 %v2415
      %2453 = vmatpush1.bf16.msra.mxu0 %v2414
      %2454 = vmatprep.subr.bf16.mxu0 0
      %2455 = vmatpush1.bf16.msra.mxu0 0
      %2456 = vmatprep.subr.bf16.mxu0 0
      %2457 = vmatpush1.bf16.msra.mxu0 0
      %2458 = vmatprep.subr.bf16.mxu0 0
      %2459 = vmatpush1.bf16.msra.mxu0 0
      %2460 = vmatprep.subr.bf16.mxu0 0
      %2461 = vmatpush1.bf16.msra.mxu0 0
      %2462 = vmatprep.subr.bf16.mxu0 0
      %2463 = vmatpush1.bf16.msra.mxu0 0
      %2464 = vmatprep.subr.bf16.mxu0 0
      %2465 = vmatpush1.bf16.msra.mxu0 0
      %2466 = vmatprep.subr.bf16.mxu0 0
      %2467 = vmatpush1.bf16.msra.mxu0 0
      %2468 = vmatprep.subr.bf16.mxu0 0
      %2469 = vmatpush1.bf16.msra.mxu0 0
      %2470 = vmatprep.subr.bf16.mxu0 0
      %2471 = vmatpush1.bf16.msra.mxu0 0
      %2472 = vmatprep.subr.bf16.mxu0 0
      %2473 = vmatpush1.bf16.msra.mxu0 0
      %2474 = vmatprep.subr.bf16.mxu0 0
      %2475 = vmatpush1.bf16.msra.mxu0 0
      %2476 = vmatprep.subr.bf16.mxu0 0
      %2477 = vmatpush1.bf16.msra.mxu0 0
      %2478 = vmatprep.subr.bf16.mxu0 0
      %2479 = vmatpush1.bf16.msra.mxu0 0
      %2480 = vmatprep.subr.bf16.mxu0 0
      %2481 = vmatpush1.bf16.msra.mxu0 0
      %2482 = vmatprep.subr.bf16.mxu0 0
      %2483 = vmatpush1.bf16.msra.mxu0 0
      %2484 = vmatprep.mubr.bf16.mxu0 0
      %2485 = vmatmul.mubr.bf16.gmra.mrb[0].mxu0 %v2447
      %v2486 = vpop.f32.mrb[0].mxu0
      %v2487 = vadd.f32 %v2419, %v2486
      %v2488 = vpop.f32.mrb[0].mxu0
      %v2489 = vadd.f32 %v2419, %v2488
      %v2490 = vpop.f32.mrb[0].mxu0
      %v2491 = vadd.f32 %v2424, %v2490
      %v2492 = vpop.f32.mrb[0].mxu0
      %v2493 = vadd.f32 %v2424, %v2492
      %2494 = vmatprep.mubr.bf16.mxu0 0
      %2495 = vmatmul.mubr.bf16.gmra.mrb[0].mxu0 %v2450
      %v2496 = vpop.f32.mrb[0].mxu0
      %v2497 = vadd.f32 %v2429, %v2496
      %v2498 = vpop.f32.mrb[0].mxu0
      %v2499 = vadd.f32 %v2429, %v2498
      %v2500 = vpop.f32.mrb[0].mxu0
      %v2501 = vadd.f32 %v2434, %v2500
      %v2502 = vpop.f32.mrb[0].mxu0
      %v2503 = vadd.f32 %v2434, %v2502
      %2504 = vdwg.mxu0
      %v2505 = vmul.f32 %v2487, 0.5
      %v2506 = vmul.f32 %v2489, 0.5
      %v2507 = vmul.f32 %v2491, 0.5
      %v2508 = vmul.f32 %v2493, 0.5
      %v2509 = vmul.f32 %v2497, 0.5
      %v2510 = vmul.f32 %v2499, 0.5
      %v2511 = vmul.f32 %v2501, 0.5
      %v2512 = vmul.f32 %v2503, 0.5
      %v2513 = vmul.f32 %v2487, 0.70710677
      %v2514 = vmul.f32 %v2489, 0.70710677
      %v2515 = vmul.f32 %v2491, 0.70710677
      %v2516 = vmul.f32 %v2493, 0.70710677
      %v2517 = vmul.f32 %v2497, 0.70710677
      %v2518 = vmul.f32 %v2499, 0.70710677
      %v2519 = vmul.f32 %v2501, 0.70710677
      %v2520 = vmul.f32 %v2503, 0.70710677
      %vm2521 = vcmp.ge.f32.partialorder %v2513, 0.0
      %vm2522 = vcmp.ge.f32.partialorder %v2514, 0.0
      %vm2523 = vcmp.ge.f32.partialorder %v2515, 0.0
      %vm2524 = vcmp.ge.f32.partialorder %v2516, 0.0
      %vm2525 = vcmp.ge.f32.partialorder %v2517, 0.0
      %vm2526 = vcmp.ge.f32.partialorder %v2518, 0.0
      %vm2527 = vcmp.ge.f32.partialorder %v2519, 0.0
      %vm2528 = vcmp.ge.f32.partialorder %v2520, 0.0
      %v2529 = vsel %vm2521, 1.0, -1.0
      %v2530 = vsel %vm2522, 1.0, -1.0
      %v2531 = vsel %vm2523, 1.0, -1.0
      %v2532 = vsel %vm2524, 1.0, -1.0
      %v2533 = vsel %vm2525, 1.0, -1.0
      %v2534 = vsel %vm2526, 1.0, -1.0
      %v2535 = vsel %vm2527, 1.0, -1.0
      %v2536 = vsel %vm2528, 1.0, -1.0
      %v2537 = vand.u32 2147483647, %v2513
      %v2538 = vand.u32 2147483647, %v2514
      %v2539 = vand.u32 2147483647, %v2515
      %v2540 = vand.u32 2147483647, %v2516
      %v2541 = vand.u32 2147483647, %v2517
      %v2542 = vand.u32 2147483647, %v2518
      %v2543 = vand.u32 2147483647, %v2519
      %v2544 = vand.u32 2147483647, %v2520
      %v2545 = vmul.f32 %v2537, 0.3275911
      %v2546 = vmul.f32 %v2538, 0.3275911
      %v2547 = vmul.f32 %v2539, 0.3275911
      %v2548 = vmul.f32 %v2540, 0.3275911
      %v2549 = vmul.f32 %v2541, 0.3275911
      %v2550 = vmul.f32 %v2542, 0.3275911
      %v2551 = vmul.f32 %v2543, 0.3275911
      %v2552 = vmul.f32 %v2544, 0.3275911
      %v2553 = vadd.f32 %v2545, 1.0
      %v2554 = vadd.f32 %v2546, 1.0
      %v2555 = vadd.f32 %v2547, 1.0
      %v2556 = vadd.f32 %v2548, 1.0
      %v2557 = vadd.f32 %v2549, 1.0
      %v2558 = vadd.f32 %v2550, 1.0
      %v2559 = vadd.f32 %v2551, 1.0
      %v2560 = vadd.f32 %v2552, 1.0
      %v2561 = vrcp.pop %v2553
      %v2562 = vmul.f32 1.0, %v2561
      %v2563 = vrcp.pop %v2554
      %v2564 = vmul.f32 1.0, %v2563
      %v2565 = vrcp.pop %v2555
      %v2566 = vmul.f32 1.0, %v2565
      %v2567 = vrcp.pop %v2556
      %v2568 = vmul.f32 1.0, %v2567
      %v2569 = vrcp.pop %v2557
      %v2570 = vmul.f32 1.0, %v2569
      %v2571 = vrcp.pop %v2558
      %v2572 = vmul.f32 1.0, %v2571
      %v2573 = vrcp.pop %v2559
      %v2574 = vmul.f32 1.0, %v2573
      %v2575 = vrcp.pop %v2560
      %v2576 = vmul.f32 1.0, %v2575
      %v2577 = vmul.f32 %v2562, 1.0614054
      %v2578 = vmul.f32 %v2564, 1.0614054
      %v2579 = vmul.f32 %v2566, 1.0614054
      %v2580 = vmul.f32 %v2568, 1.0614054
      %v2581 = vmul.f32 %v2570, 1.0614054
      %v2582 = vmul.f32 %v2572, 1.0614054
      %v2583 = vmul.f32 %v2574, 1.0614054
      %v2584 = vmul.f32 %v2576, 1.0614054
      %v2585 = vadd.f32 %v2577, -1.4531521
      %v2586 = vadd.f32 %v2578, -1.4531521
      %v2587 = vadd.f32 %v2579, -1.4531521
      %v2588 = vadd.f32 %v2580, -1.4531521
      %v2589 = vadd.f32 %v2581, -1.4531521
      %v2590 = vadd.f32 %v2582, -1.4531521
      %v2591 = vadd.f32 %v2583, -1.4531521
      %v2592 = vadd.f32 %v2584, -1.4531521
      %v2593 = vmul.f32 %v2585, %v2562
      %v2594 = vmul.f32 %v2586, %v2564
      %v2595 = vmul.f32 %v2587, %v2566
      %v2596 = vmul.f32 %v2588, %v2568
      %v2597 = vmul.f32 %v2589, %v2570
      %v2598 = vmul.f32 %v2590, %v2572
      %v2599 = vmul.f32 %v2591, %v2574
      %v2600 = vmul.f32 %v2592, %v2576
      %v2601 = vadd.f32 %v2593, 1.4214138
      %v2602 = vadd.f32 %v2594, 1.4214138
      %v2603 = vadd.f32 %v2595, 1.4214138
      %v2604 = vadd.f32 %v2596, 1.4214138
      %v2605 = vadd.f32 %v2597, 1.4214138
      %v2606 = vadd.f32 %v2598, 1.4214138
      %v2607 = vadd.f32 %v2599, 1.4214138
      %v2608 = vadd.f32 %v2600, 1.4214138
      %v2609 = vmul.f32 %v2601, %v2562
      %v2610 = vmul.f32 %v2602, %v2564
      %v2611 = vmul.f32 %v2603, %v2566
      %v2612 = vmul.f32 %v2604, %v2568
      %v2613 = vmul.f32 %v2605, %v2570
      %v2614 = vmul.f32 %v2606, %v2572
      %v2615 = vmul.f32 %v2607, %v2574
      %v2616 = vmul.f32 %v2608, %v2576
      %v2617 = vadd.f32 %v2609, -0.28449672
      %v2618 = vadd.f32 %v2610, -0.28449672
      %v2619 = vadd.f32 %v2611, -0.28449672
      %v2620 = vadd.f32 %v2612, -0.28449672
      %v2621 = vadd.f32 %v2613, -0.28449672
      %v2622 = vadd.f32 %v2614, -0.28449672
      %v2623 = vadd.f32 %v2615, -0.28449672
      %v2624 = vadd.f32 %v2616, -0.28449672
      %v2625 = vmul.f32 %v2617, %v2562
      %v2626 = vmul.f32 %v2618, %v2564
      %v2627 = vmul.f32 %v2619, %v2566
      %v2628 = vmul.f32 %v2620, %v2568
      %v2629 = vmul.f32 %v2621, %v2570
      %v2630 = vmul.f32 %v2622, %v2572
      %v2631 = vmul.f32 %v2623, %v2574
      %v2632 = vmul.f32 %v2624, %v2576
      %v2633 = vadd.f32 %v2625, 0.2548296
      %v2634 = vadd.f32 %v2626, 0.2548296
      %v2635 = vadd.f32 %v2627, 0.2548296
      %v2636 = vadd.f32 %v2628, 0.2548296
      %v2637 = vadd.f32 %v2629, 0.2548296
      %v2638 = vadd.f32 %v2630, 0.2548296
      %v2639 = vadd.f32 %v2631, 0.2548296
      %v2640 = vadd.f32 %v2632, 0.2548296
      %v2641 = vmul.f32 %v2633, %v2562
      %v2642 = vmul.f32 %v2634, %v2564
      %v2643 = vmul.f32 %v2635, %v2566
      %v2644 = vmul.f32 %v2636, %v2568
      %v2645 = vmul.f32 %v2637, %v2570
      %v2646 = vmul.f32 %v2638, %v2572
      %v2647 = vmul.f32 %v2639, %v2574
      %v2648 = vmul.f32 %v2640, %v2576
      %v2649 = vsub.f32 0.0, %v2537
      %v2650 = vsub.f32 0.0, %v2538
      %v2651 = vsub.f32 0.0, %v2539
      %v2652 = vsub.f32 0.0, %v2540
      %v2653 = vsub.f32 0.0, %v2541
      %v2654 = vsub.f32 0.0, %v2542
      %v2655 = vsub.f32 0.0, %v2543
      %v2656 = vsub.f32 0.0, %v2544
      %v2657 = vmul.f32 %v2649, %v2537
      %v2658 = vmul.f32 %v2650, %v2538
      %v2659 = vmul.f32 %v2651, %v2539
      %v2660 = vmul.f32 %v2652, %v2540
      %v2661 = vmul.f32 %v2653, %v2541
      %v2662 = vmul.f32 %v2654, %v2542
      %v2663 = vmul.f32 %v2655, %v2543
      %v2664 = vmul.f32 %v2656, %v2544
      %v2665 = vmul.f32 %v2657, 1.442695
      %v2666 = vpow.pop %v2665
      %v2667 = vmul.f32 %v2658, 1.442695
      %v2668 = vpow.pop %v2667
      %v2669 = vmul.f32 %v2659, 1.442695
      %v2670 = vpow.pop %v2669
      %v2671 = vmul.f32 %v2660, 1.442695
      %v2672 = vpow.pop %v2671
      %v2673 = vmul.f32 %v2661, 1.442695
      %v2674 = vpow.pop %v2673
      %v2675 = vmul.f32 %v2662, 1.442695
      %v2676 = vpow.pop %v2675
      %v2677 = vmul.f32 %v2663, 1.442695
      %v2678 = vpow.pop %v2677
      %v2679 = vmul.f32 %v2664, 1.442695
      %v2680 = vpow.pop %v2679
      %v2681 = vmul.f32 %v2641, %v2666
      %v2682 = vmul.f32 %v2642, %v2668
      %v2683 = vmul.f32 %v2643, %v2670
      %v2684 = vmul.f32 %v2644, %v2672
      %v2685 = vmul.f32 %v2645, %v2674
      %v2686 = vmul.f32 %v2646, %v2676
      %v2687 = vmul.f32 %v2647, %v2678
      %v2688 = vmul.f32 %v2648, %v2680
      %v2689 = vsub.f32 1.0, %v2681
      %v2690 = vsub.f32 1.0, %v2682
      %v2691 = vsub.f32 1.0, %v2683
      %v2692 = vsub.f32 1.0, %v2684
      %v2693 = vsub.f32 1.0, %v2685
      %v2694 = vsub.f32 1.0, %v2686
      %v2695 = vsub.f32 1.0, %v2687
      %v2696 = vsub.f32 1.0, %v2688
      %v2697 = vmul.f32 %v2529, %v2689
      %v2698 = vmul.f32 %v2530, %v2690
      %v2699 = vmul.f32 %v2531, %v2691
      %v2700 = vmul.f32 %v2532, %v2692
      %v2701 = vmul.f32 %v2533, %v2693
      %v2702 = vmul.f32 %v2534, %v2694
      %v2703 = vmul.f32 %v2535, %v2695
      %v2704 = vmul.f32 %v2536, %v2696
      %v2705 = vadd.f32 %v2697, 1.0
      %v2706 = vadd.f32 %v2698, 1.0
      %v2707 = vadd.f32 %v2699, 1.0
      %v2708 = vadd.f32 %v2700, 1.0
      %v2709 = vadd.f32 %v2701, 1.0
      %v2710 = vadd.f32 %v2702, 1.0
      %v2711 = vadd.f32 %v2703, 1.0
      %v2712 = vadd.f32 %v2704, 1.0
      %v2713 = vmul.f32 %v2505, %v2705
      %v2714 = vmul.f32 %v2506, %v2706
      %v2715 = vmul.f32 %v2507, %v2707
      %v2716 = vmul.f32 %v2508, %v2708
      %v2717 = vmul.f32 %v2509, %v2709
      %v2718 = vmul.f32 %v2510, %v2710
      %v2719 = vmul.f32 %v2511, %v2711
      %v2720 = vmul.f32 %v2512, %v2712
      %v2721 = vld [vmem:[%s6] sm:$0xf]
      %v2722 = vld [vmem:[%s6 + $0x4] sm:$0xf]
      %v2723 = vpack.c.bf16 %v2715, %v2713
      %v2724 = vpack.c.bf16 %v2716, %v2714
      %v2725 = vpack.c.bf16 %v2719, %v2717
      %v2726 = vpack.c.bf16 %v2720, %v2718
      %v2729 = vunpack.c.l.b16 %v2721
      %v2730 = vunpack.c.l.b16 %v2722
      %v2731 = vpack.c.b16 %v2730, %v2729
      %vm2732 = vcmask 261120
      %v2734 = vsel %vm2732, %v2731, 0
      %2736 = vmatprep.subr.bf16.mxu0 %v2724
      %2737 = vmatpush1.bf16.msra.mxu0 %v2723
      %2738 = vmatprep.subr.bf16.mxu0 %v2726
      %2739 = vmatpush1.bf16.msra.mxu0 %v2725
      %2740 = vmatprep.subr.bf16.mxu0 0
      %2741 = vmatpush1.bf16.msra.mxu0 0
      %2742 = vmatprep.subr.bf16.mxu0 0
      %2743 = vmatpush1.bf16.msra.mxu0 0
      %2744 = vmatprep.subr.bf16.mxu0 0
      %2745 = vmatpush1.bf16.msra.mxu0 0
      %2746 = vmatprep.subr.bf16.mxu0 0
      %2747 = vmatpush1.bf16.msra.mxu0 0
      %2748 = vmatprep.subr.bf16.mxu0 0
      %2749 = vmatpush1.bf16.msra.mxu0 0
      %2750 = vmatprep.subr.bf16.mxu0 0
      %2751 = vmatpush1.bf16.msra.mxu0 0
      %2752 = vmatprep.subr.bf16.mxu0 0
      %2753 = vmatpush1.bf16.msra.mxu0 0
      %2754 = vmatprep.subr.bf16.mxu0 0
      %2755 = vmatpush1.bf16.msra.mxu0 0
      %2756 = vmatprep.subr.bf16.mxu0 0
      %2757 = vmatpush1.bf16.msra.mxu0 0
      %2758 = vmatprep.subr.bf16.mxu0 0
      %2759 = vmatpush1.bf16.msra.mxu0 0
      %2760 = vmatprep.subr.bf16.mxu0 0
      %2761 = vmatpush1.bf16.msra.mxu0 0
      %2762 = vmatprep.subr.bf16.mxu0 0
      %2763 = vmatpush1.bf16.msra.mxu0 0
      %2764 = vmatprep.subr.bf16.mxu0 0
      %2765 = vmatpush1.bf16.msra.mxu0 0
      %2766 = vmatprep.subr.bf16.mxu0 0
      %2767 = vmatpush1.bf16.msra.mxu0 0
      %2768 = vmatprep.mubr.bf16.mxu0 0
      %2769 = vmatmul.mubr.bf16.gmra.mrb[0].mxu0 %v2734
      %v2770 = vpop.f32.mrb[0].mxu0
      %v2771 = vadd.f32 0.0, %v2770
      %v2772 = vpop.f32.mrb[0].mxu0
      %v2773 = vadd.f32 0.0, %v2772
      %v2774 = vpop.f32.mrb[0].mxu0
      %v2775 = vadd.f32 0.0, %v2774
      %v2776 = vpop.f32.mrb[0].mxu0
      %v2777 = vadd.f32 0.0, %v2776
      %2778 = vdwg.mxu0
      %v2779 = vadd.f32 %v2326, %v2771
      %v2780 = vadd.f32 %v2327, %v2773
      %v2781 = vadd.f32 %v2328, %v2775
      %v2782 = vadd.f32 %v2329, %v2777
      %2784 = vset.pattern.permute.xlu0 0
      %2785 = vperm.xlu0 %2784, %v514
      %v2786 = vpop.permute.xlu0 %2785
      %2789 = vset.pattern.permute.xlu0 0
      %2790 = vperm.xlu0 %2789, %v515
      %v2791 = vpop.permute.xlu0 %2790
      %v2793 = vadd.f32 %v2779, %v2786
      %v2794 = vadd.f32 %v2780, %v2786
      %v2795 = vadd.f32 %v2781, %v2791
      %v2796 = vadd.f32 %v2782, %v2791
      %s2797 = scalar_lea.vmem %s7, 128
      %v2798 = vld [vmem:[%s2797] sm:$0xff]
      %v2799 = vld [vmem:[%s2797 + $0x8] sm:$0xff]
      %v2800 = vld [vmem:[%s2797 + $0x10] sm:$0xff]
      %v2801 = vld [vmem:[%s2797 + $0x18] sm:$0xff]
      %v2802 = vld [vmem:[%s2797 + $0x20] sm:$0xff]
      %v2803 = vld [vmem:[%s2797 + $0x28] sm:$0xff]
      %v2804 = vld [vmem:[%s2797 + $0x30] sm:$0xff]
      %v2805 = vld [vmem:[%s2797 + $0x38] sm:$0xff]
      %v2806 = vld [vmem:[%s2797 + $0x40] sm:$0xff]
      %v2807 = vld [vmem:[%s2797 + $0x48] sm:$0xff]
      %v2808 = vld [vmem:[%s2797 + $0x50] sm:$0xff]
      %v2809 = vld [vmem:[%s2797 + $0x58] sm:$0xff]
      %v2810 = vld [vmem:[%s2797 + $0x60] sm:$0xff]
      %v2811 = vld [vmem:[%s2797 + $0x68] sm:$0xff]
      %v2812 = vld [vmem:[%s2797 + $0x70] sm:$0xff]
      %v2813 = vld [vmem:[%s2797 + $0x78] sm:$0xff]
      %v2814 = vadd.f32 %v2793, %v2795
      %v2815 = vrot.slane %v2814, 4
      %v2816 = vadd.f32 %v2814, %v2815
      %v2817 = vrot.slane %v2816, 2
      %v2818 = vadd.f32 %v2816, %v2817
      %v2819 = vrot.slane %v2818, 1
      %v2820 = vadd.f32 %v2818, %v2819
      %v2821 = vsel %vm457, %v2794, 0.0
      %v2822 = vsel %vm457, %v2796, 0.0
      %v2823 = vadd.f32 %v2821, %v2822
      %v2824 = vrot.slane %v2823, 4
      %v2825 = vadd.f32 %v2823, %v2824
      %v2826 = vrot.slane %v2825, 2
      %v2827 = vadd.f32 %v2825, %v2826
      %v2828 = vrot.slane %v2827, 1
      %v2829 = vadd.f32 %v2827, %v2828
      %v2830 = vmul.f32 %v2820, %v536
      %v2831 = vmul.f32 %v2829, %v536
      %v2832 = vsub.f32 %v2793, %v2830
      %v2833 = vsub.f32 %v2794, %v2831
      %v2834 = vsub.f32 %v2795, %v2830
      %v2835 = vsub.f32 %v2796, %v2831
      %v2836 = vmul.f32 %v2832, %v2832
      %v2837 = vmul.f32 %v2833, %v2833
      %v2838 = vmul.f32 %v2834, %v2834
      %v2839 = vmul.f32 %v2835, %v2835
      %v2840 = vadd.f32 %v2836, %v2838
      %v2841 = vrot.slane %v2840, 4
      %v2842 = vadd.f32 %v2840, %v2841
      %v2843 = vrot.slane %v2842, 2
      %v2844 = vadd.f32 %v2842, %v2843
      %v2845 = vrot.slane %v2844, 1
      %v2846 = vadd.f32 %v2844, %v2845
      %v2847 = vsel %vm457, %v2837, 0.0
      %v2848 = vsel %vm457, %v2839, 0.0
      %v2849 = vadd.f32 %v2847, %v2848
      %v2850 = vrot.slane %v2849, 4
      %v2851 = vadd.f32 %v2849, %v2850
      %v2852 = vrot.slane %v2851, 2
      %v2853 = vadd.f32 %v2851, %v2852
      %v2854 = vrot.slane %v2853, 1
      %v2855 = vadd.f32 %v2853, %v2854
      %v2856 = vmul.f32 %v2846, %v536
      %v2857 = vmul.f32 %v2855, %v536
      %v2858 = vadd.f32 %v2856, 1e-05
      %v2859 = vadd.f32 %v2857, 1e-05
      %v2860 = vrsqrt.pop %v2858
      %v2861 = vrsqrt.pop %v2859
      %v2862 = vmul.f32 %v2832, %v2860
      %v2863 = vmul.f32 %v2833, %v2861
      %v2864 = vmul.f32 %v2834, %v2860
      %v2865 = vmul.f32 %v2835, %v2861
      %2867 = vset.pattern.permute.xlu0 0
      %2868 = vperm.xlu0 %2867, %v2798
      %v2869 = vpop.permute.xlu0 %2868
      %2872 = vset.pattern.permute.xlu0 0
      %2873 = vperm.xlu0 %2872, %v2799
      %v2874 = vpop.permute.xlu0 %2873
      %v2876 = vmul.f32 %v2862, %v2869
      %v2877 = vmul.f32 %v2863, %v2869
      %v2878 = vmul.f32 %v2864, %v2874
      %v2879 = vmul.f32 %v2865, %v2874
      %2881 = vset.pattern.permute.xlu0 0
      %2882 = vperm.xlu0 %2881, %v2800
      %v2883 = vpop.permute.xlu0 %2882
      %2886 = vset.pattern.permute.xlu0 0
      %2887 = vperm.xlu0 %2886, %v2801
      %v2888 = vpop.permute.xlu0 %2887
      %v2890 = vadd.f32 %v2876, %v2883
      %v2891 = vadd.f32 %v2877, %v2883
      %v2892 = vadd.f32 %v2878, %v2888
      %v2893 = vadd.f32 %v2879, %v2888
      %s2894 = scalar_lea.vmem %s3, 24
      %v2895 = vld [vmem:[%s2894] sm:$0xf]
      %v2896 = vld [vmem:[%s2894 + $0x4] sm:$0xf]
      %v2897 = vld [vmem:[%s2894 + $0x8] sm:$0xf]
      %v2898 = vld [vmem:[%s2894 + $0xc] sm:$0xf]
      %v2899 = vld [vmem:[%s2894 + $0x10] sm:$0xf]
      %v2900 = vld [vmem:[%s2894 + $0x14] sm:$0xf]
      %v2901 = vpack.c.bf16 %v2892, %v2890
      %v2902 = vpack.c.bf16 %v2893, %v2891
      %v2909 = vunpack.c.l.b16 %v2895
      %v2910 = vunpack.c.l.b16 %v2896
      %v2911 = vunpack.c.l.b16 %v2897
      %v2912 = vunpack.c.l.b16 %v2898
      %v2913 = vunpack.c.l.b16 %v2899
      %v2914 = vunpack.c.l.b16 %v2900
      %v2915 = vpack.c.b16 %v2910, %v2909
      %v2916 = vpack.c.b16 %v2912, %v2911
      %v2917 = vpack.c.b16 %v2914, %v2913
      %v2919 = vsel %vm624, %v2915, 0
      %v2922 = vsel %vm624, %v2916, 0
      %v2925 = vsel %vm624, %v2917, 0
      %2927 = vmatprep.subr.bf16.mxu0 %v2902
      %2928 = vmatpush1.bf16.msra.mxu0 %v2901
      %2929 = vmatprep.subr.bf16.mxu0 0
      %2930 = vmatpush1.bf16.msra.mxu0 0
      %2931 = vmatprep.subr.bf16.mxu0 0
      %2932 = vmatpush1.bf16.msra.mxu0 0
      %2933 = vmatprep.subr.bf16.mxu0 0
      %2934 = vmatpush1.bf16.msra.mxu0 0
      %2935 = vmatprep.subr.bf16.mxu0 0
      %2936 = vmatpush1.bf16.msra.mxu0 0
      %2937 = vmatprep.subr.bf16.mxu0 0
      %2938 = vmatpush1.bf16.msra.mxu0 0
      %2939 = vmatprep.subr.bf16.mxu0 0
      %2940 = vmatpush1.bf16.msra.mxu0 0
      %2941 = vmatprep.subr.bf16.mxu0 0
      %2942 = vmatpush1.bf16.msra.mxu0 0
      %2943 = vmatprep.subr.bf16.mxu0 0
      %2944 = vmatpush1.bf16.msra.mxu0 0
      %2945 = vmatprep.subr.bf16.mxu0 0
      %2946 = vmatpush1.bf16.msra.mxu0 0
      %2947 = vmatprep.subr.bf16.mxu0 0
      %2948 = vmatpush1.bf16.msra.mxu0 0
      %2949 = vmatprep.subr.bf16.mxu0 0
      %2950 = vmatpush1.bf16.msra.mxu0 0
      %2951 = vmatprep.subr.bf16.mxu0 0
      %2952 = vmatpush1.bf16.msra.mxu0 0
      %2953 = vmatprep.subr.bf16.mxu0 0
      %2954 = vmatpush1.bf16.msra.mxu0 0
      %2955 = vmatprep.subr.bf16.mxu0 0
      %2956 = vmatpush1.bf16.msra.mxu0 0
      %2957 = vmatprep.subr.bf16.mxu0 0
      %2958 = vmatpush1.bf16.msra.mxu0 0
      %2959 = vmatprep.mubr.bf16.mxu0 0
      %2960 = vmatmul.mubr.bf16.gmra.mrb[0].mxu0 %v2919
      %v2961 = vpop.f32.mrb[0].mxu0
      %v2962 = vadd.f32 0.0, %v2961
      %v2963 = vpop.f32.mrb[0].mxu0
      %v2964 = vadd.f32 0.0, %v2963
      %v2965 = vpop.f32.mrb[0].mxu0
      %v2966 = vadd.f32 0.0, %v2965
      %v2967 = vpop.f32.mrb[0].mxu0
      %v2968 = vadd.f32 0.0, %v2967
      %2969 = vmatprep.mubr.bf16.mxu0 0
      %2970 = vmatmul.mubr.bf16.gmra.mrb[0].mxu0 %v2922
      %v2971 = vpop.f32.mrb[0].mxu0
      %v2972 = vadd.f32 0.0, %v2971
      %v2973 = vpop.f32.mrb[0].mxu0
      %v2974 = vadd.f32 0.0, %v2973
      %v2975 = vpop.f32.mrb[0].mxu0
      %v2976 = vadd.f32 0.0, %v2975
      %v2977 = vpop.f32.mrb[0].mxu0
      %v2978 = vadd.f32 0.0, %v2977
      %2979 = vmatprep.mubr.bf16.mxu0 0
      %2980 = vmatmul.mubr.bf16.gmra.mrb[0].mxu0 %v2925
      %v2981 = vpop.f32.mrb[0].mxu0
      %v2982 = vadd.f32 0.0, %v2981
      %v2983 = vpop.f32.mrb[0].mxu0
      %v2984 = vadd.f32 0.0, %v2983
      %v2985 = vpop.f32.mrb[0].mxu0
      %v2986 = vadd.f32 0.0, %v2985
      %v2987 = vpop.f32.mrb[0].mxu0
      %v2988 = vadd.f32 0.0, %v2987
      %2989 = vdwg.mxu0
      %v2990 = vpack.c.bf16 %v2962, %v2962
      %v2991 = vpack.c.bf16 %v2964, %v2964
      %v2992 = vpack.c.bf16 %v2972, %v2972
      %v2993 = vpack.c.bf16 %v2974, %v2974
      %v2994 = vpack.c.bf16 %v2982, %v2982
      %v2995 = vpack.c.bf16 %v2984, %v2984
      %2996 = vxpose.xlu0.c.b16.start [1/8] %v2990, 128
      %2997 = vxpose.xlu0.c.b16.cont [2/8] 0, 128
      %2998 = vxpose.xlu0.c.b16.cont [3/8] 0, 128
      %2999 = vxpose.xlu0.c.b16.cont [4/8] 0, 128
      %3000 = vxpose.xlu0.c.b16.cont [5/8] 0, 128
      %3001 = vxpose.xlu0.c.b16.cont [6/8] 0, 128
      %3002 = vxpose.xlu0.c.b16.cont [7/8] 0, 128
      %3003 = vxpose.xlu0.c.b16.end [8/8] 0, 128
      %v3004 = vpop.trf.xlu0
      %v3005 = vpop.trf.xlu0
      %v3006 = vpop.trf.xlu0
      %v3007 = vpop.trf.xlu0
      %v3008 = vpop.trf.xlu0
      %v3009 = vpop.trf.xlu0
      %v3010 = vpop.trf.xlu0
      %v3011 = vpop.trf.xlu0
      %3012 = vxpose.xlu0.c.b16.start [1/8] %v2991, 128
      %3013 = vxpose.xlu0.c.b16.cont [2/8] 0, 128
      %3014 = vxpose.xlu0.c.b16.cont [3/8] 0, 128
      %3015 = vxpose.xlu0.c.b16.cont [4/8] 0, 128
      %3016 = vxpose.xlu0.c.b16.cont [5/8] 0, 128
      %3017 = vxpose.xlu0.c.b16.cont [6/8] 0, 128
      %3018 = vxpose.xlu0.c.b16.cont [7/8] 0, 128
      %3019 = vxpose.xlu0.c.b16.end [8/8] 0, 128
      %v3020 = vpop.trf.xlu0
      %v3021 = vpop.trf.xlu0
      %v3022 = vpop.trf.xlu0
      %v3023 = vpop.trf.xlu0
      %v3024 = vpop.trf.xlu0
      %v3025 = vpop.trf.xlu0
      %v3026 = vpop.trf.xlu0
      %v3027 = vpop.trf.xlu0
      %v3029 = vsel %vm735, %v3004, 0
      %v3032 = vsel %vm735, %v3005, 0
      %v3035 = vsel %vm735, %v3006, 0
      %v3038 = vsel %vm735, %v3007, 0
      %v3041 = vsel %vm735, %v3008, 0
      %v3044 = vsel %vm735, %v3009, 0
      %v3047 = vsel %vm735, %v3010, 0
      %v3050 = vsel %vm735, %v3011, 0
      %v3053 = vsel %vm735, %v3020, 0
      %v3056 = vsel %vm735, %v3021, 0
      %v3059 = vsel %vm735, %v3022, 0
      %v3062 = vsel %vm735, %v3023, 0
      %v3065 = vsel %vm772, %v2992, 0
      %v3068 = vsel %vm772, %v2993, 0
      %3070 = vmatprep.subr.bf16.mxu0 %v3068
      %3071 = vmatpush1.bf16.msra.mxu0 %v3065
      %3072 = vmatprep.subr.bf16.mxu0 0
      %3073 = vmatpush1.bf16.msra.mxu0 0
      %3074 = vmatprep.subr.bf16.mxu0 0
      %3075 = vmatpush1.bf16.msra.mxu0 0
      %3076 = vmatprep.subr.bf16.mxu0 0
      %3077 = vmatpush1.bf16.msra.mxu0 0
      %3078 = vmatprep.subr.bf16.mxu0 0
      %3079 = vmatpush1.bf16.msra.mxu0 0
      %3080 = vmatprep.subr.bf16.mxu0 0
      %3081 = vmatpush1.bf16.msra.mxu0 0
      %3082 = vmatprep.subr.bf16.mxu0 0
      %3083 = vmatpush1.bf16.msra.mxu0 0
      %3084 = vmatprep.subr.bf16.mxu0 0
      %3085 = vmatpush1.bf16.msra.mxu0 0
      %3086 = vmatprep.subr.bf16.mxu0 0
      %3087 = vmatpush1.bf16.msra.mxu0 0
      %3088 = vmatprep.subr.bf16.mxu0 0
      %3089 = vmatpush1.bf16.msra.mxu0 0
      %3090 = vmatprep.subr.bf16.mxu0 0
      %3091 = vmatpush1.bf16.msra.mxu0 0
      %3092 = vmatprep.subr.bf16.mxu0 0
      %3093 = vmatpush1.bf16.msra.mxu0 0
      %3094 = vmatprep.subr.bf16.mxu0 0
      %3095 = vmatpush1.bf16.msra.mxu0 0
      %3096 = vmatprep.subr.bf16.mxu0 0
      %3097 = vmatpush1.bf16.msra.mxu0 0
      %3098 = vmatprep.subr.bf16.mxu0 0
      %3099 = vmatpush1.bf16.msra.mxu0 0
      %3100 = vmatprep.subr.bf16.mxu0 0
      %3101 = vmatpush1.bf16.msra.mxu0 0
      %3102 = vmatprep.mubr.bf16.mxu0 0
      %3103 = vmatmul.mubr.bf16.gmra.mrb[0].mxu0 %v3029
      %v3104 = vpop.f32.mrb[0].mxu0
      %v3105 = vadd.f32 0.0, %v3104
      %v3106 = vpop.f32.mrb[0].mxu0
      %v3107 = vadd.f32 0.0, %v3106
      %v3108 = vpop.f32.mrb[0].mxu0
      %v3109 = vadd.f32 0.0, %v3108
      %v3110 = vpop.f32.mrb[0].mxu0
      %v3111 = vadd.f32 0.0, %v3110
      %3112 = vmatprep.mubr.bf16.mxu0 0
      %3113 = vmatmul.mubr.bf16.gmra.mrb[0].mxu0 %v3032
      %v3114 = vpop.f32.mrb[0].mxu0
      %v3115 = vadd.f32 0.0, %v3114
      %v3116 = vpop.f32.mrb[0].mxu0
      %v3117 = vadd.f32 0.0, %v3116
      %v3118 = vpop.f32.mrb[0].mxu0
      %v3119 = vadd.f32 0.0, %v3118
      %v3120 = vpop.f32.mrb[0].mxu0
      %v3121 = vadd.f32 0.0, %v3120
      %3122 = vmatprep.mubr.bf16.mxu0 0
      %3123 = vmatmul.mubr.bf16.gmra.mrb[0].mxu0 %v3035
      %v3124 = vpop.f32.mrb[0].mxu0
      %v3125 = vadd.f32 0.0, %v3124
      %v3126 = vpop.f32.mrb[0].mxu0
      %v3127 = vadd.f32 0.0, %v3126
      %v3128 = vpop.f32.mrb[0].mxu0
      %v3129 = vadd.f32 0.0, %v3128
      %v3130 = vpop.f32.mrb[0].mxu0
      %v3131 = vadd.f32 0.0, %v3130
      %3132 = vmatprep.mubr.bf16.mxu0 0
      %3133 = vmatmul.mubr.bf16.gmra.mrb[0].mxu0 %v3038
      %v3134 = vpop.f32.mrb[0].mxu0
      %v3135 = vadd.f32 0.0, %v3134
      %v3136 = vpop.f32.mrb[0].mxu0
      %v3137 = vadd.f32 0.0, %v3136
      %v3138 = vpop.f32.mrb[0].mxu0
      %v3139 = vadd.f32 0.0, %v3138
      %v3140 = vpop.f32.mrb[0].mxu0
      %v3141 = vadd.f32 0.0, %v3140
      %3142 = vmatprep.mubr.bf16.mxu0 0
      %3143 = vmatmul.mubr.bf16.gmra.mrb[0].mxu0 %v3041
      %v3144 = vpop.f32.mrb[0].mxu0
      %v3145 = vadd.f32 0.0, %v3144
      %v3146 = vpop.f32.mrb[0].mxu0
      %v3147 = vadd.f32 0.0, %v3146
      %v3148 = vpop.f32.mrb[0].mxu0
      %v3149 = vadd.f32 0.0, %v3148
      %v3150 = vpop.f32.mrb[0].mxu0
      %v3151 = vadd.f32 0.0, %v3150
      %3152 = vmatprep.mubr.bf16.mxu0 0
      %3153 = vmatmul.mubr.bf16.gmra.mrb[0].mxu0 %v3044
      %v3154 = vpop.f32.mrb[0].mxu0
      %v3155 = vadd.f32 0.0, %v3154
      %v3156 = vpop.f32.mrb[0].mxu0
      %v3157 = vadd.f32 0.0, %v3156
      %v3158 = vpop.f32.mrb[0].mxu0
      %v3159 = vadd.f32 0.0, %v3158
      %v3160 = vpop.f32.mrb[0].mxu0
      %v3161 = vadd.f32 0.0, %v3160
      %3162 = vmatprep.mubr.bf16.mxu0 0
      %3163 = vmatmul.mubr.bf16.gmra.mrb[0].mxu0 %v3047
      %v3164 = vpop.f32.mrb[0].mxu0
      %v3165 = vadd.f32 0.0, %v3164
      %v3166 = vpop.f32.mrb[0].mxu0
      %v3167 = vadd.f32 0.0, %v3166
      %v3168 = vpop.f32.mrb[0].mxu0
      %v3169 = vadd.f32 0.0, %v3168
      %v3170 = vpop.f32.mrb[0].mxu0
      %v3171 = vadd.f32 0.0, %v3170
      %3172 = vmatprep.mubr.bf16.mxu0 0
      %3173 = vmatmul.mubr.bf16.gmra.mrb[0].mxu0 %v3050
      %v3174 = vpop.f32.mrb[0].mxu0
      %v3175 = vadd.f32 0.0, %v3174
      %v3176 = vpop.f32.mrb[0].mxu0
      %v3177 = vadd.f32 0.0, %v3176
      %v3178 = vpop.f32.mrb[0].mxu0
      %v3179 = vadd.f32 0.0, %v3178
      %v3180 = vpop.f32.mrb[0].mxu0
      %v3181 = vadd.f32 0.0, %v3180
      %3182 = vmatprep.mubr.bf16.mxu0 0
      %3183 = vmatmul.mubr.bf16.gmra.mrb[0].mxu0 %v3053
      %v3184 = vpop.f32.mrb[0].mxu0
      %v3185 = vadd.f32 0.0, %v3184
      %v3186 = vpop.f32.mrb[0].mxu0
      %v3187 = vadd.f32 0.0, %v3186
      %v3188 = vpop.f32.mrb[0].mxu0
      %v3189 = vadd.f32 0.0, %v3188
      %v3190 = vpop.f32.mrb[0].mxu0
      %v3191 = vadd.f32 0.0, %v3190
      %3192 = vmatprep.mubr.bf16.mxu0 0
      %3193 = vmatmul.mubr.bf16.gmra.mrb[0].mxu0 %v3056
      %v3194 = vpop.f32.mrb[0].mxu0
      %v3195 = vadd.f32 0.0, %v3194
      %v3196 = vpop.f32.mrb[0].mxu0
      %v3197 = vadd.f32 0.0, %v3196
      %v3198 = vpop.f32.mrb[0].mxu0
      %v3199 = vadd.f32 0.0, %v3198
      %v3200 = vpop.f32.mrb[0].mxu0
      %v3201 = vadd.f32 0.0, %v3200
      %3202 = vmatprep.mubr.bf16.mxu0 0
      %3203 = vmatmul.mubr.bf16.gmra.mrb[0].mxu0 %v3059
      %v3204 = vpop.f32.mrb[0].mxu0
      %v3205 = vadd.f32 0.0, %v3204
      %v3206 = vpop.f32.mrb[0].mxu0
      %v3207 = vadd.f32 0.0, %v3206
      %v3208 = vpop.f32.mrb[0].mxu0
      %v3209 = vadd.f32 0.0, %v3208
      %v3210 = vpop.f32.mrb[0].mxu0
      %v3211 = vadd.f32 0.0, %v3210
      %3212 = vmatprep.mubr.bf16.mxu0 0
      %3213 = vmatmul.mubr.bf16.gmra.mrb[0].mxu0 %v3062
      %v3214 = vpop.f32.mrb[0].mxu0
      %v3215 = vadd.f32 0.0, %v3214
      %v3216 = vpop.f32.mrb[0].mxu0
      %v3217 = vadd.f32 0.0, %v3216
      %v3218 = vpop.f32.mrb[0].mxu0
      %v3219 = vadd.f32 0.0, %v3218
      %v3220 = vpop.f32.mrb[0].mxu0
      %v3221 = vadd.f32 0.0, %v3220
      %3222 = vdwg.mxu0
      %v3223 = vsel %vm457, %v3107, -inf
      %v3224 = vmax.f32 %v3105, %v3223
      %3225 = vmax.xlane.f32.xlu0 %v3224
      %v3226 = vpop.xlane.xlu0 %3225
      %v3227 = vsel %vm457, %v3111, -inf
      %v3228 = vmax.f32 %v3109, %v3227
      %3229 = vmax.xlane.f32.xlu0 %v3228
      %v3230 = vpop.xlane.xlu0 %3229
      %v3231 = vsel %vm457, %v3117, -inf
      %v3232 = vmax.f32 %v3115, %v3231
      %3233 = vmax.xlane.f32.xlu0 %v3232
      %v3234 = vpop.xlane.xlu0 %3233
      %v3235 = vsel %vm457, %v3121, -inf
      %v3236 = vmax.f32 %v3119, %v3235
      %3237 = vmax.xlane.f32.xlu0 %v3236
      %v3238 = vpop.xlane.xlu0 %3237
      %v3239 = vsel %vm457, %v3127, -inf
      %v3240 = vmax.f32 %v3125, %v3239
      %3241 = vmax.xlane.f32.xlu0 %v3240
      %v3242 = vpop.xlane.xlu0 %3241
      %v3243 = vsel %vm457, %v3131, -inf
      %v3244 = vmax.f32 %v3129, %v3243
      %3245 = vmax.xlane.f32.xlu0 %v3244
      %v3246 = vpop.xlane.xlu0 %3245
      %v3247 = vsel %vm457, %v3137, -inf
      %v3248 = vmax.f32 %v3135, %v3247
      %3249 = vmax.xlane.f32.xlu0 %v3248
      %v3250 = vpop.xlane.xlu0 %3249
      %v3251 = vsel %vm457, %v3141, -inf
      %v3252 = vmax.f32 %v3139, %v3251
      %3253 = vmax.xlane.f32.xlu0 %v3252
      %v3254 = vpop.xlane.xlu0 %3253
      %v3255 = vsel %vm457, %v3147, -inf
      %v3256 = vmax.f32 %v3145, %v3255
      %3257 = vmax.xlane.f32.xlu0 %v3256
      %v3258 = vpop.xlane.xlu0 %3257
      %v3259 = vsel %vm457, %v3151, -inf
      %v3260 = vmax.f32 %v3149, %v3259
      %3261 = vmax.xlane.f32.xlu0 %v3260
      %v3262 = vpop.xlane.xlu0 %3261
      %v3263 = vsel %vm457, %v3157, -inf
      %v3264 = vmax.f32 %v3155, %v3263
      %3265 = vmax.xlane.f32.xlu0 %v3264
      %v3266 = vpop.xlane.xlu0 %3265
      %v3267 = vsel %vm457, %v3161, -inf
      %v3268 = vmax.f32 %v3159, %v3267
      %3269 = vmax.xlane.f32.xlu0 %v3268
      %v3270 = vpop.xlane.xlu0 %3269
      %v3271 = vsel %vm457, %v3167, -inf
      %v3272 = vmax.f32 %v3165, %v3271
      %3273 = vmax.xlane.f32.xlu0 %v3272
      %v3274 = vpop.xlane.xlu0 %3273
      %v3275 = vsel %vm457, %v3171, -inf
      %v3276 = vmax.f32 %v3169, %v3275
      %3277 = vmax.xlane.f32.xlu0 %v3276
      %v3278 = vpop.xlane.xlu0 %3277
      %v3279 = vsel %vm457, %v3177, -inf
      %v3280 = vmax.f32 %v3175, %v3279
      %3281 = vmax.xlane.f32.xlu0 %v3280
      %v3282 = vpop.xlane.xlu0 %3281
      %v3283 = vsel %vm457, %v3181, -inf
      %v3284 = vmax.f32 %v3179, %v3283
      %3285 = vmax.xlane.f32.xlu0 %v3284
      %v3286 = vpop.xlane.xlu0 %3285
      %v3287 = vsel %vm457, %v3187, -inf
      %v3288 = vmax.f32 %v3185, %v3287
      %3289 = vmax.xlane.f32.xlu0 %v3288
      %v3290 = vpop.xlane.xlu0 %3289
      %v3291 = vsel %vm457, %v3191, -inf
      %v3292 = vmax.f32 %v3189, %v3291
      %3293 = vmax.xlane.f32.xlu0 %v3292
      %v3294 = vpop.xlane.xlu0 %3293
      %v3295 = vsel %vm457, %v3197, -inf
      %v3296 = vmax.f32 %v3195, %v3295
      %3297 = vmax.xlane.f32.xlu0 %v3296
      %v3298 = vpop.xlane.xlu0 %3297
      %v3299 = vsel %vm457, %v3201, -inf
      %v3300 = vmax.f32 %v3199, %v3299
      %3301 = vmax.xlane.f32.xlu0 %v3300
      %v3302 = vpop.xlane.xlu0 %3301
      %v3303 = vsel %vm457, %v3207, -inf
      %v3304 = vmax.f32 %v3205, %v3303
      %3305 = vmax.xlane.f32.xlu0 %v3304
      %v3306 = vpop.xlane.xlu0 %3305
      %v3307 = vsel %vm457, %v3211, -inf
      %v3308 = vmax.f32 %v3209, %v3307
      %3309 = vmax.xlane.f32.xlu0 %v3308
      %v3310 = vpop.xlane.xlu0 %3309
      %v3311 = vsel %vm457, %v3217, -inf
      %v3312 = vmax.f32 %v3215, %v3311
      %3313 = vmax.xlane.f32.xlu0 %v3312
      %v3314 = vpop.xlane.xlu0 %3313
      %v3315 = vsel %vm457, %v3221, -inf
      %v3316 = vmax.f32 %v3219, %v3315
      %3317 = vmax.xlane.f32.xlu0 %v3316
      %v3318 = vpop.xlane.xlu0 %3317
      %v3319 = vsub.f32 %v3105, %v3226
      %v3320 = vsub.f32 %v3107, %v3226
      %v3321 = vsub.f32 %v3109, %v3230
      %v3322 = vsub.f32 %v3111, %v3230
      %v3323 = vsub.f32 %v3115, %v3234
      %v3324 = vsub.f32 %v3117, %v3234
      %v3325 = vsub.f32 %v3119, %v3238
      %v3326 = vsub.f32 %v3121, %v3238
      %v3327 = vsub.f32 %v3125, %v3242
      %v3328 = vsub.f32 %v3127, %v3242
      %v3329 = vsub.f32 %v3129, %v3246
      %v3330 = vsub.f32 %v3131, %v3246
      %v3331 = vsub.f32 %v3135, %v3250
      %v3332 = vsub.f32 %v3137, %v3250
      %v3333 = vsub.f32 %v3139, %v3254
      %v3334 = vsub.f32 %v3141, %v3254
      %v3335 = vsub.f32 %v3145, %v3258
      %v3336 = vsub.f32 %v3147, %v3258
      %v3337 = vsub.f32 %v3149, %v3262
      %v3338 = vsub.f32 %v3151, %v3262
      %v3339 = vsub.f32 %v3155, %v3266
      %v3340 = vsub.f32 %v3157, %v3266
      %v3341 = vsub.f32 %v3159, %v3270
      %v3342 = vsub.f32 %v3161, %v3270
      %v3343 = vsub.f32 %v3165, %v3274
      %v3344 = vsub.f32 %v3167, %v3274
      %v3345 = vsub.f32 %v3169, %v3278
      %v3346 = vsub.f32 %v3171, %v3278
      %v3347 = vsub.f32 %v3175, %v3282
      %v3348 = vsub.f32 %v3177, %v3282
      %v3349 = vsub.f32 %v3179, %v3286
      %v3350 = vsub.f32 %v3181, %v3286
      %v3351 = vsub.f32 %v3185, %v3290
      %v3352 = vsub.f32 %v3187, %v3290
      %v3353 = vsub.f32 %v3189, %v3294
      %v3354 = vsub.f32 %v3191, %v3294
      %v3355 = vsub.f32 %v3195, %v3298
      %v3356 = vsub.f32 %v3197, %v3298
      %v3357 = vsub.f32 %v3199, %v3302
      %v3358 = vsub.f32 %v3201, %v3302
      %v3359 = vsub.f32 %v3205, %v3306
      %v3360 = vsub.f32 %v3207, %v3306
      %v3361 = vsub.f32 %v3209, %v3310
      %v3362 = vsub.f32 %v3211, %v3310
      %v3363 = vsub.f32 %v3215, %v3314
      %v3364 = vsub.f32 %v3217, %v3314
      %v3365 = vsub.f32 %v3219, %v3318
      %v3366 = vsub.f32 %v3221, %v3318
      %v3367 = vmul.f32 %v3319, 1.442695
      %v3368 = vpow.pop %v3367
      %v3369 = vmul.f32 %v3320, 1.442695
      %v3370 = vpow.pop %v3369
      %v3371 = vmul.f32 %v3321, 1.442695
      %v3372 = vpow.pop %v3371
      %v3373 = vmul.f32 %v3322, 1.442695
      %v3374 = vpow.pop %v3373
      %v3375 = vmul.f32 %v3323, 1.442695
      %v3376 = vpow.pop %v3375
      %v3377 = vmul.f32 %v3324, 1.442695
      %v3378 = vpow.pop %v3377
      %v3379 = vmul.f32 %v3325, 1.442695
      %v3380 = vpow.pop %v3379
      %v3381 = vmul.f32 %v3326, 1.442695
      %v3382 = vpow.pop %v3381
      %v3383 = vmul.f32 %v3327, 1.442695
      %v3384 = vpow.pop %v3383
      %v3385 = vmul.f32 %v3328, 1.442695
      %v3386 = vpow.pop %v3385
      %v3387 = vmul.f32 %v3329, 1.442695
      %v3388 = vpow.pop %v3387
      %v3389 = vmul.f32 %v3330, 1.442695
      %v3390 = vpow.pop %v3389
      %v3391 = vmul.f32 %v3331, 1.442695
      %v3392 = vpow.pop %v3391
      %v3393 = vmul.f32 %v3332, 1.442695
      %v3394 = vpow.pop %v3393
      %v3395 = vmul.f32 %v3333, 1.442695
      %v3396 = vpow.pop %v3395
      %v3397 = vmul.f32 %v3334, 1.442695
      %v3398 = vpow.pop %v3397
      %v3399 = vmul.f32 %v3335, 1.442695
      %v3400 = vpow.pop %v3399
      %v3401 = vmul.f32 %v3336, 1.442695
      %v3402 = vpow.pop %v3401
      %v3403 = vmul.f32 %v3337, 1.442695
      %v3404 = vpow.pop %v3403
      %v3405 = vmul.f32 %v3338, 1.442695
      %v3406 = vpow.pop %v3405
      %v3407 = vmul.f32 %v3339, 1.442695
      %v3408 = vpow.pop %v3407
      %v3409 = vmul.f32 %v3340, 1.442695
      %v3410 = vpow.pop %v3409
      %v3411 = vmul.f32 %v3341, 1.442695
      %v3412 = vpow.pop %v3411
      %v3413 = vmul.f32 %v3342, 1.442695
      %v3414 = vpow.pop %v3413
      %v3415 = vmul.f32 %v3343, 1.442695
      %v3416 = vpow.pop %v3415
      %v3417 = vmul.f32 %v3344, 1.442695
      %v3418 = vpow.pop %v3417
      %v3419 = vmul.f32 %v3345, 1.442695
      %v3420 = vpow.pop %v3419
      %v3421 = vmul.f32 %v3346, 1.442695
      %v3422 = vpow.pop %v3421
      %v3423 = vmul.f32 %v3347, 1.442695
      %v3424 = vpow.pop %v3423
      %v3425 = vmul.f32 %v3348, 1.442695
      %v3426 = vpow.pop %v3425
      %v3427 = vmul.f32 %v3349, 1.442695
      %v3428 = vpow.pop %v3427
      %v3429 = vmul.f32 %v3350, 1.442695
      %v3430 = vpow.pop %v3429
      %v3431 = vmul.f32 %v3351, 1.442695
      %v3432 = vpow.pop %v3431
      %v3433 = vmul.f32 %v3352, 1.442695
      %v3434 = vpow.pop %v3433
      %v3435 = vmul.f32 %v3353, 1.442695
      %v3436 = vpow.pop %v3435
      %v3437 = vmul.f32 %v3354, 1.442695
      %v3438 = vpow.pop %v3437
      %v3439 = vmul.f32 %v3355, 1.442695
      %v3440 = vpow.pop %v3439
      %v3441 = vmul.f32 %v3356, 1.442695
      %v3442 = vpow.pop %v3441
      %v3443 = vmul.f32 %v3357, 1.442695
      %v3444 = vpow.pop %v3443
      %v3445 = vmul.f32 %v3358, 1.442695
      %v3446 = vpow.pop %v3445
      %v3447 = vmul.f32 %v3359, 1.442695
      %v3448 = vpow.pop %v3447
      %v3449 = vmul.f32 %v3360, 1.442695
      %v3450 = vpow.pop %v3449
      %v3451 = vmul.f32 %v3361, 1.442695
      %v3452 = vpow.pop %v3451
      %v3453 = vmul.f32 %v3362, 1.442695
      %v3454 = vpow.pop %v3453
      %v3455 = vmul.f32 %v3363, 1.442695
      %v3456 = vpow.pop %v3455
      %v3457 = vmul.f32 %v3364, 1.442695
      %v3458 = vpow.pop %v3457
      %v3459 = vmul.f32 %v3365, 1.442695
      %v3460 = vpow.pop %v3459
      %v3461 = vmul.f32 %v3366, 1.442695
      %v3462 = vpow.pop %v3461
      %v3463 = vsel %vm457, %v3370, 0.0
      %v3464 = vadd.f32 %v3368, %v3463
      %3465 = vadd.xlane.f32.xlu0 %v3464
      %v3466 = vpop.xlane.xlu0 %3465
      %v3467 = vsel %vm457, %v3374, 0.0
      %v3468 = vadd.f32 %v3372, %v3467
      %3469 = vadd.xlane.f32.xlu0 %v3468
      %v3470 = vpop.xlane.xlu0 %3469
      %v3471 = vsel %vm457, %v3378, 0.0
      %v3472 = vadd.f32 %v3376, %v3471
      %3473 = vadd.xlane.f32.xlu0 %v3472
      %v3474 = vpop.xlane.xlu0 %3473
      %v3475 = vsel %vm457, %v3382, 0.0
      %v3476 = vadd.f32 %v3380, %v3475
      %3477 = vadd.xlane.f32.xlu0 %v3476
      %v3478 = vpop.xlane.xlu0 %3477
      %v3479 = vsel %vm457, %v3386, 0.0
      %v3480 = vadd.f32 %v3384, %v3479
      %3481 = vadd.xlane.f32.xlu0 %v3480
      %v3482 = vpop.xlane.xlu0 %3481
      %v3483 = vsel %vm457, %v3390, 0.0
      %v3484 = vadd.f32 %v3388, %v3483
      %3485 = vadd.xlane.f32.xlu0 %v3484
      %v3486 = vpop.xlane.xlu0 %3485
      %v3487 = vsel %vm457, %v3394, 0.0
      %v3488 = vadd.f32 %v3392, %v3487
      %3489 = vadd.xlane.f32.xlu0 %v3488
      %v3490 = vpop.xlane.xlu0 %3489
      %v3491 = vsel %vm457, %v3398, 0.0
      %v3492 = vadd.f32 %v3396, %v3491
      %3493 = vadd.xlane.f32.xlu0 %v3492
      %v3494 = vpop.xlane.xlu0 %3493
      %v3495 = vsel %vm457, %v3402, 0.0
      %v3496 = vadd.f32 %v3400, %v3495
      %3497 = vadd.xlane.f32.xlu0 %v3496
      %v3498 = vpop.xlane.xlu0 %3497
      %v3499 = vsel %vm457, %v3406, 0.0
      %v3500 = vadd.f32 %v3404, %v3499
      %3501 = vadd.xlane.f32.xlu0 %v3500
      %v3502 = vpop.xlane.xlu0 %3501
      %v3503 = vsel %vm457, %v3410, 0.0
      %v3504 = vadd.f32 %v3408, %v3503
      %3505 = vadd.xlane.f32.xlu0 %v3504
      %v3506 = vpop.xlane.xlu0 %3505
      %v3507 = vsel %vm457, %v3414, 0.0
      %v3508 = vadd.f32 %v3412, %v3507
      %3509 = vadd.xlane.f32.xlu0 %v3508
      %v3510 = vpop.xlane.xlu0 %3509
      %v3511 = vsel %vm457, %v3418, 0.0
      %v3512 = vadd.f32 %v3416, %v3511
      %3513 = vadd.xlane.f32.xlu0 %v3512
      %v3514 = vpop.xlane.xlu0 %3513
      %v3515 = vsel %vm457, %v3422, 0.0
      %v3516 = vadd.f32 %v3420, %v3515
      %3517 = vadd.xlane.f32.xlu0 %v3516
      %v3518 = vpop.xlane.xlu0 %3517
      %v3519 = vsel %vm457, %v3426, 0.0
      %v3520 = vadd.f32 %v3424, %v3519
      %3521 = vadd.xlane.f32.xlu0 %v3520
      %v3522 = vpop.xlane.xlu0 %3521
      %v3523 = vsel %vm457, %v3430, 0.0
      %v3524 = vadd.f32 %v3428, %v3523
      %3525 = vadd.xlane.f32.xlu0 %v3524
      %v3526 = vpop.xlane.xlu0 %3525
      %v3527 = vsel %vm457, %v3434, 0.0
      %v3528 = vadd.f32 %v3432, %v3527
      %3529 = vadd.xlane.f32.xlu0 %v3528
      %v3530 = vpop.xlane.xlu0 %3529
      %v3531 = vsel %vm457, %v3438, 0.0
      %v3532 = vadd.f32 %v3436, %v3531
      %3533 = vadd.xlane.f32.xlu0 %v3532
      %v3534 = vpop.xlane.xlu0 %3533
      %v3535 = vsel %vm457, %v3442, 0.0
      %v3536 = vadd.f32 %v3440, %v3535
      %3537 = vadd.xlane.f32.xlu0 %v3536
      %v3538 = vpop.xlane.xlu0 %3537
      %v3539 = vsel %vm457, %v3446, 0.0
      %v3540 = vadd.f32 %v3444, %v3539
      %3541 = vadd.xlane.f32.xlu0 %v3540
      %v3542 = vpop.xlane.xlu0 %3541
      %v3543 = vsel %vm457, %v3450, 0.0
      %v3544 = vadd.f32 %v3448, %v3543
      %3545 = vadd.xlane.f32.xlu0 %v3544
      %v3546 = vpop.xlane.xlu0 %3545
      %v3547 = vsel %vm457, %v3454, 0.0
      %v3548 = vadd.f32 %v3452, %v3547
      %3549 = vadd.xlane.f32.xlu0 %v3548
      %v3550 = vpop.xlane.xlu0 %3549
      %v3551 = vsel %vm457, %v3458, 0.0
      %v3552 = vadd.f32 %v3456, %v3551
      %3553 = vadd.xlane.f32.xlu0 %v3552
      %v3554 = vpop.xlane.xlu0 %3553
      %v3555 = vsel %vm457, %v3462, 0.0
      %v3556 = vadd.f32 %v3460, %v3555
      %3557 = vadd.xlane.f32.xlu0 %v3556
      %v3558 = vpop.xlane.xlu0 %3557
      %v3559 = vrcp.pop %v3466
      %v3560 = vrcp.pop %v3470
      %v3561 = vrcp.pop %v3474
      %v3562 = vrcp.pop %v3478
      %v3563 = vrcp.pop %v3482
      %v3564 = vrcp.pop %v3486
      %v3565 = vrcp.pop %v3490
      %v3566 = vrcp.pop %v3494
      %v3567 = vrcp.pop %v3498
      %v3568 = vrcp.pop %v3502
      %v3569 = vrcp.pop %v3506
      %v3570 = vrcp.pop %v3510
      %v3571 = vrcp.pop %v3514
      %v3572 = vrcp.pop %v3518
      %v3573 = vrcp.pop %v3522
      %v3574 = vrcp.pop %v3526
      %v3575 = vrcp.pop %v3530
      %v3576 = vrcp.pop %v3534
      %v3577 = vrcp.pop %v3538
      %v3578 = vrcp.pop %v3542
      %v3579 = vrcp.pop %v3546
      %v3580 = vrcp.pop %v3550
      %v3581 = vrcp.pop %v3554
      %v3582 = vrcp.pop %v3558
      %v3583 = vmul.f32 %v3368, %v3559
      %v3584 = vmul.f32 %v3370, %v3559
      %v3585 = vmul.f32 %v3372, %v3560
      %v3586 = vmul.f32 %v3374, %v3560
      %v3587 = vmul.f32 %v3376, %v3561
      %v3588 = vmul.f32 %v3378, %v3561
      %v3589 = vmul.f32 %v3380, %v3562
      %v3590 = vmul.f32 %v3382, %v3562
      %v3591 = vmul.f32 %v3384, %v3563
      %v3592 = vmul.f32 %v3386, %v3563
      %v3593 = vmul.f32 %v3388, %v3564
      %v3594 = vmul.f32 %v3390, %v3564
      %v3595 = vmul.f32 %v3392, %v3565
      %v3596 = vmul.f32 %v3394, %v3565
      %v3597 = vmul.f32 %v3396, %v3566
      %v3598 = vmul.f32 %v3398, %v3566
      %v3599 = vmul.f32 %v3400, %v3567
      %v3600 = vmul.f32 %v3402, %v3567
      %v3601 = vmul.f32 %v3404, %v3568
      %v3602 = vmul.f32 %v3406, %v3568
      %v3603 = vmul.f32 %v3408, %v3569
      %v3604 = vmul.f32 %v3410, %v3569
      %v3605 = vmul.f32 %v3412, %v3570
      %v3606 = vmul.f32 %v3414, %v3570
      %v3607 = vmul.f32 %v3416, %v3571
      %v3608 = vmul.f32 %v3418, %v3571
      %v3609 = vmul.f32 %v3420, %v3572
      %v3610 = vmul.f32 %v3422, %v3572
      %v3611 = vmul.f32 %v3424, %v3573
      %v3612 = vmul.f32 %v3426, %v3573
      %v3613 = vmul.f32 %v3428, %v3574
      %v3614 = vmul.f32 %v3430, %v3574
      %v3615 = vmul.f32 %v3432, %v3575
      %v3616 = vmul.f32 %v3434, %v3575
      %v3617 = vmul.f32 %v3436, %v3576
      %v3618 = vmul.f32 %v3438, %v3576
      %v3619 = vmul.f32 %v3440, %v3577
      %v3620 = vmul.f32 %v3442, %v3577
      %v3621 = vmul.f32 %v3444, %v3578
      %v3622 = vmul.f32 %v3446, %v3578
      %v3623 = vmul.f32 %v3448, %v3579
      %v3624 = vmul.f32 %v3450, %v3579
      %v3625 = vmul.f32 %v3452, %v3580
      %v3626 = vmul.f32 %v3454, %v3580
      %v3627 = vmul.f32 %v3456, %v3581
      %v3628 = vmul.f32 %v3458, %v3581
      %v3629 = vmul.f32 %v3460, %v3582
      %v3630 = vmul.f32 %v3462, %v3582
      %v3631 = vpack.c.bf16 %v3585, %v3583
      %v3632 = vpack.c.bf16 %v3586, %v3584
      %v3633 = vpack.c.bf16 %v3589, %v3587
      %v3634 = vpack.c.bf16 %v3590, %v3588
      %v3635 = vpack.c.bf16 %v3593, %v3591
      %v3636 = vpack.c.bf16 %v3594, %v3592
      %v3637 = vpack.c.bf16 %v3597, %v3595
      %v3638 = vpack.c.bf16 %v3598, %v3596
      %v3639 = vpack.c.bf16 %v3601, %v3599
      %v3640 = vpack.c.bf16 %v3602, %v3600
      %v3641 = vpack.c.bf16 %v3605, %v3603
      %v3642 = vpack.c.bf16 %v3606, %v3604
      %v3643 = vpack.c.bf16 %v3609, %v3607
      %v3644 = vpack.c.bf16 %v3610, %v3608
      %v3645 = vpack.c.bf16 %v3613, %v3611
      %v3646 = vpack.c.bf16 %v3614, %v3612
      %v3647 = vpack.c.bf16 %v3617, %v3615
      %v3648 = vpack.c.bf16 %v3618, %v3616
      %v3649 = vpack.c.bf16 %v3621, %v3619
      %v3650 = vpack.c.bf16 %v3622, %v3620
      %v3651 = vpack.c.bf16 %v3625, %v3623
      %v3652 = vpack.c.bf16 %v3626, %v3624
      %v3653 = vpack.c.bf16 %v3629, %v3627
      %v3654 = vpack.c.bf16 %v3630, %v3628
      %v3656 = vsel %vm457, %v2995, 0
      %v3659 = vsel %vm457, %v3632, 0
      %v3662 = vsel %vm457, %v3634, 0
      %v3665 = vsel %vm457, %v3636, 0
      %v3668 = vsel %vm457, %v3638, 0
      %v3671 = vsel %vm457, %v3640, 0
      %v3674 = vsel %vm457, %v3642, 0
      %v3677 = vsel %vm457, %v3644, 0
      %v3680 = vsel %vm457, %v3646, 0
      %v3683 = vsel %vm457, %v3648, 0
      %v3686 = vsel %vm457, %v3650, 0
      %v3689 = vsel %vm457, %v3652, 0
      %v3692 = vsel %vm457, %v3654, 0
      %3694 = vmatprep.subr.bf16.mxu0 %v3659
      %3695 = vmatpush1.bf16.xpose.msra.mxu0 %v3631
      %3696 = vmatprep.subr.bf16.mxu0 %v3662
      %3697 = vmatpush1.bf16.xpose.msra.mxu0 %v3633
      %3698 = vmatprep.subr.bf16.mxu0 %v3665
      %3699 = vmatpush1.bf16.xpose.msra.mxu0 %v3635
      %3700 = vmatprep.subr.bf16.mxu0 %v3668
      %3701 = vmatpush1.bf16.xpose.msra.mxu0 %v3637
      %3702 = vmatprep.subr.bf16.mxu0 %v3671
      %3703 = vmatpush1.bf16.xpose.msra.mxu0 %v3639
      %3704 = vmatprep.subr.bf16.mxu0 %v3674
      %3705 = vmatpush1.bf16.xpose.msra.mxu0 %v3641
      %3706 = vmatprep.subr.bf16.mxu0 %v3677
      %3707 = vmatpush1.bf16.xpose.msra.mxu0 %v3643
      %3708 = vmatprep.subr.bf16.mxu0 %v3680
      %3709 = vmatpush1.bf16.xpose.msra.mxu0 %v3645
      %3710 = vmatprep.subr.bf16.mxu0 %v3683
      %3711 = vmatpush1.bf16.xpose.msra.mxu0 %v3647
      %3712 = vmatprep.subr.bf16.mxu0 %v3686
      %3713 = vmatpush1.bf16.xpose.msra.mxu0 %v3649
      %3714 = vmatprep.subr.bf16.mxu0 %v3689
      %3715 = vmatpush1.bf16.xpose.msra.mxu0 %v3651
      %3716 = vmatprep.subr.bf16.mxu0 %v3692
      %3717 = vmatpush1.bf16.xpose.msra.mxu0 %v3653
      %3718 = vmatprep.subr.bf16.mxu0 0
      %3719 = vmatpush1.bf16.xpose.msra.mxu0 0
      %3720 = vmatprep.subr.bf16.mxu0 0
      %3721 = vmatpush1.bf16.xpose.msra.mxu0 0
      %3722 = vmatprep.subr.bf16.mxu0 0
      %3723 = vmatpush1.bf16.xpose.msra.mxu0 0
      %3724 = vmatprep.subr.bf16.mxu0 0
      %3725 = vmatpush1.bf16.xpose.msra.mxu0 0
      %3726 = vmatprep.mubr.bf16.mxu0 %v3656
      %3727 = vmatmul.mubr.bf16.gmra.mrb[0].mxu0 %v2994
      %v3728 = vpop.f32.mrb[0].mxu0
      %v3729 = vadd.f32 0.0, %v3728
      %v3730 = vpop.f32.mrb[0].mxu0
      %v3731 = vadd.f32 0.0, %v3730
      %v3732 = vpop.f32.mrb[0].mxu0
      %v3733 = vpop.f32.mrb[0].mxu0
      %3734 = vdwg.mxu0
      %s3735 = scalar_lea.vmem %s4, 16
      %v3736 = vld [vmem:[%s3735] sm:$0xf]
      %v3737 = vld [vmem:[%s3735 + $0x4] sm:$0xf]
      %v3738 = vpack.c.bf16 %v3729, %v3729
      %v3739 = vpack.c.bf16 %v3731, %v3731
      %v3740 = vpack.c.bf16 %v2966, %v2966
      %v3741 = vpack.c.bf16 %v2968, %v2968
      %v3742 = vpack.c.bf16 %v2976, %v2976
      %v3743 = vpack.c.bf16 %v2978, %v2978
      %v3744 = vpack.c.bf16 %v2986, %v2986
      %v3745 = vpack.c.bf16 %v2988, %v2988
      %3746 = vxpose.xlu0.c.b16.start [1/8] %v3740, 128
      %3747 = vxpose.xlu0.c.b16.cont [2/8] 0, 128
      %3748 = vxpose.xlu0.c.b16.cont [3/8] 0, 128
      %3749 = vxpose.xlu0.c.b16.cont [4/8] 0, 128
      %3750 = vxpose.xlu0.c.b16.cont [5/8] 0, 128
      %3751 = vxpose.xlu0.c.b16.cont [6/8] 0, 128
      %3752 = vxpose.xlu0.c.b16.cont [7/8] 0, 128
      %3753 = vxpose.xlu0.c.b16.end [8/8] 0, 128
      %v3754 = vpop.trf.xlu0
      %v3755 = vpop.trf.xlu0
      %v3756 = vpop.trf.xlu0
      %v3757 = vpop.trf.xlu0
      %v3758 = vpop.trf.xlu0
      %v3759 = vpop.trf.xlu0
      %v3760 = vpop.trf.xlu0
      %v3761 = vpop.trf.xlu0
      %3762 = vxpose.xlu0.c.b16.start [1/8] %v3741, 128
      %3763 = vxpose.xlu0.c.b16.cont [2/8] 0, 128
      %3764 = vxpose.xlu0.c.b16.cont [3/8] 0, 128
      %3765 = vxpose.xlu0.c.b16.cont [4/8] 0, 128
      %3766 = vxpose.xlu0.c.b16.cont [5/8] 0, 128
      %3767 = vxpose.xlu0.c.b16.cont [6/8] 0, 128
      %3768 = vxpose.xlu0.c.b16.cont [7/8] 0, 128
      %3769 = vxpose.xlu0.c.b16.end [8/8] 0, 128
      %v3770 = vpop.trf.xlu0
      %v3771 = vpop.trf.xlu0
      %v3772 = vpop.trf.xlu0
      %v3773 = vpop.trf.xlu0
      %v3774 = vpop.trf.xlu0
      %v3775 = vpop.trf.xlu0
      %v3776 = vpop.trf.xlu0
      %v3777 = vpop.trf.xlu0
      %v3779 = vsel %vm735, %v3754, 0
      %v3782 = vsel %vm735, %v3755, 0
      %v3785 = vsel %vm735, %v3756, 0
      %v3788 = vsel %vm735, %v3757, 0
      %v3791 = vsel %vm735, %v3758, 0
      %v3794 = vsel %vm735, %v3759, 0
      %v3797 = vsel %vm735, %v3760, 0
      %v3800 = vsel %vm735, %v3761, 0
      %v3803 = vsel %vm735, %v3770, 0
      %v3806 = vsel %vm735, %v3771, 0
      %v3809 = vsel %vm735, %v3772, 0
      %v3812 = vsel %vm735, %v3773, 0
      %v3815 = vsel %vm772, %v3742, 0
      %v3818 = vsel %vm772, %v3743, 0
      %3820 = vmatprep.subr.bf16.mxu0 %v3818
      %3821 = vmatpush1.bf16.msra.mxu0 %v3815
      %3822 = vmatprep.subr.bf16.mxu0 0
      %3823 = vmatpush1.bf16.msra.mxu0 0
      %3824 = vmatprep.subr.bf16.mxu0 0
      %3825 = vmatpush1.bf16.msra.mxu0 0
      %3826 = vmatprep.subr.bf16.mxu0 0
      %3827 = vmatpush1.bf16.msra.mxu0 0
      %3828 = vmatprep.subr.bf16.mxu0 0
      %3829 = vmatpush1.bf16.msra.mxu0 0
      %3830 = vmatprep.subr.bf16.mxu0 0
      %3831 = vmatpush1.bf16.msra.mxu0 0
      %3832 = vmatprep.subr.bf16.mxu0 0
      %3833 = vmatpush1.bf16.msra.mxu0 0
      %3834 = vmatprep.subr.bf16.mxu0 0
      %3835 = vmatpush1.bf16.msra.mxu0 0
      %3836 = vmatprep.subr.bf16.mxu0 0
      %3837 = vmatpush1.bf16.msra.mxu0 0
      %3838 = vmatprep.subr.bf16.mxu0 0
      %3839 = vmatpush1.bf16.msra.mxu0 0
      %3840 = vmatprep.subr.bf16.mxu0 0
      %3841 = vmatpush1.bf16.msra.mxu0 0
      %3842 = vmatprep.subr.bf16.mxu0 0
      %3843 = vmatpush1.bf16.msra.mxu0 0
      %3844 = vmatprep.subr.bf16.mxu0 0
      %3845 = vmatpush1.bf16.msra.mxu0 0
      %3846 = vmatprep.subr.bf16.mxu0 0
      %3847 = vmatpush1.bf16.msra.mxu0 0
      %3848 = vmatprep.subr.bf16.mxu0 0
      %3849 = vmatpush1.bf16.msra.mxu0 0
      %3850 = vmatprep.subr.bf16.mxu0 0
      %3851 = vmatpush1.bf16.msra.mxu0 0
      %3852 = vmatprep.mubr.bf16.mxu0 0
      %3853 = vmatmul.mubr.bf16.gmra.mrb[0].mxu0 %v3779
      %v3854 = vpop.f32.mrb[0].mxu0
      %v3855 = vadd.f32 0.0, %v3854
      %v3856 = vpop.f32.mrb[0].mxu0
      %v3857 = vadd.f32 0.0, %v3856
      %v3858 = vpop.f32.mrb[0].mxu0
      %v3859 = vadd.f32 0.0, %v3858
      %v3860 = vpop.f32.mrb[0].mxu0
      %v3861 = vadd.f32 0.0, %v3860
      %3862 = vmatprep.mubr.bf16.mxu0 0
      %3863 = vmatmul.mubr.bf16.gmra.mrb[0].mxu0 %v3782
      %v3864 = vpop.f32.mrb[0].mxu0
      %v3865 = vadd.f32 0.0, %v3864
      %v3866 = vpop.f32.mrb[0].mxu0
      %v3867 = vadd.f32 0.0, %v3866
      %v3868 = vpop.f32.mrb[0].mxu0
      %v3869 = vadd.f32 0.0, %v3868
      %v3870 = vpop.f32.mrb[0].mxu0
      %v3871 = vadd.f32 0.0, %v3870
      %3872 = vmatprep.mubr.bf16.mxu0 0
      %3873 = vmatmul.mubr.bf16.gmra.mrb[0].mxu0 %v3785
      %v3874 = vpop.f32.mrb[0].mxu0
      %v3875 = vadd.f32 0.0, %v3874
      %v3876 = vpop.f32.mrb[0].mxu0
      %v3877 = vadd.f32 0.0, %v3876
      %v3878 = vpop.f32.mrb[0].mxu0
      %v3879 = vadd.f32 0.0, %v3878
      %v3880 = vpop.f32.mrb[0].mxu0
      %v3881 = vadd.f32 0.0, %v3880
      %3882 = vmatprep.mubr.bf16.mxu0 0
      %3883 = vmatmul.mubr.bf16.gmra.mrb[0].mxu0 %v3788
      %v3884 = vpop.f32.mrb[0].mxu0
      %v3885 = vadd.f32 0.0, %v3884
      %v3886 = vpop.f32.mrb[0].mxu0
      %v3887 = vadd.f32 0.0, %v3886
      %v3888 = vpop.f32.mrb[0].mxu0
      %v3889 = vadd.f32 0.0, %v3888
      %v3890 = vpop.f32.mrb[0].mxu0
      %v3891 = vadd.f32 0.0, %v3890
      %3892 = vmatprep.mubr.bf16.mxu0 0
      %3893 = vmatmul.mubr.bf16.gmra.mrb[0].mxu0 %v3791
      %v3894 = vpop.f32.mrb[0].mxu0
      %v3895 = vadd.f32 0.0, %v3894
      %v3896 = vpop.f32.mrb[0].mxu0
      %v3897 = vadd.f32 0.0, %v3896
      %v3898 = vpop.f32.mrb[0].mxu0
      %v3899 = vadd.f32 0.0, %v3898
      %v3900 = vpop.f32.mrb[0].mxu0
      %v3901 = vadd.f32 0.0, %v3900
      %3902 = vmatprep.mubr.bf16.mxu0 0
      %3903 = vmatmul.mubr.bf16.gmra.mrb[0].mxu0 %v3794
      %v3904 = vpop.f32.mrb[0].mxu0
      %v3905 = vadd.f32 0.0, %v3904
      %v3906 = vpop.f32.mrb[0].mxu0
      %v3907 = vadd.f32 0.0, %v3906
      %v3908 = vpop.f32.mrb[0].mxu0
      %v3909 = vadd.f32 0.0, %v3908
      %v3910 = vpop.f32.mrb[0].mxu0
      %v3911 = vadd.f32 0.0, %v3910
      %3912 = vmatprep.mubr.bf16.mxu0 0
      %3913 = vmatmul.mubr.bf16.gmra.mrb[0].mxu0 %v3797
      %v3914 = vpop.f32.mrb[0].mxu0
      %v3915 = vadd.f32 0.0, %v3914
      %v3916 = vpop.f32.mrb[0].mxu0
      %v3917 = vadd.f32 0.0, %v3916
      %v3918 = vpop.f32.mrb[0].mxu0
      %v3919 = vadd.f32 0.0, %v3918
      %v3920 = vpop.f32.mrb[0].mxu0
      %v3921 = vadd.f32 0.0, %v3920
      %3922 = vmatprep.mubr.bf16.mxu0 0
      %3923 = vmatmul.mubr.bf16.gmra.mrb[0].mxu0 %v3800
      %v3924 = vpop.f32.mrb[0].mxu0
      %v3925 = vadd.f32 0.0, %v3924
      %v3926 = vpop.f32.mrb[0].mxu0
      %v3927 = vadd.f32 0.0, %v3926
      %v3928 = vpop.f32.mrb[0].mxu0
      %v3929 = vadd.f32 0.0, %v3928
      %v3930 = vpop.f32.mrb[0].mxu0
      %v3931 = vadd.f32 0.0, %v3930
      %3932 = vmatprep.mubr.bf16.mxu0 0
      %3933 = vmatmul.mubr.bf16.gmra.mrb[0].mxu0 %v3803
      %v3934 = vpop.f32.mrb[0].mxu0
      %v3935 = vadd.f32 0.0, %v3934
      %v3936 = vpop.f32.mrb[0].mxu0
      %v3937 = vadd.f32 0.0, %v3936
      %v3938 = vpop.f32.mrb[0].mxu0
      %v3939 = vadd.f32 0.0, %v3938
      %v3940 = vpop.f32.mrb[0].mxu0
      %v3941 = vadd.f32 0.0, %v3940
      %3942 = vmatprep.mubr.bf16.mxu0 0
      %3943 = vmatmul.mubr.bf16.gmra.mrb[0].mxu0 %v3806
      %v3944 = vpop.f32.mrb[0].mxu0
      %v3945 = vadd.f32 0.0, %v3944
      %v3946 = vpop.f32.mrb[0].mxu0
      %v3947 = vadd.f32 0.0, %v3946
      %v3948 = vpop.f32.mrb[0].mxu0
      %v3949 = vadd.f32 0.0, %v3948
      %v3950 = vpop.f32.mrb[0].mxu0
      %v3951 = vadd.f32 0.0, %v3950
      %3952 = vmatprep.mubr.bf16.mxu0 0
      %3953 = vmatmul.mubr.bf16.gmra.mrb[0].mxu0 %v3809
      %v3954 = vpop.f32.mrb[0].mxu0
      %v3955 = vadd.f32 0.0, %v3954
      %v3956 = vpop.f32.mrb[0].mxu0
      %v3957 = vadd.f32 0.0, %v3956
      %v3958 = vpop.f32.mrb[0].mxu0
      %v3959 = vadd.f32 0.0, %v3958
      %v3960 = vpop.f32.mrb[0].mxu0
      %v3961 = vadd.f32 0.0, %v3960
      %3962 = vmatprep.mubr.bf16.mxu0 0
      %3963 = vmatmul.mubr.bf16.gmra.mrb[0].mxu0 %v3812
      %v3964 = vpop.f32.mrb[0].mxu0
      %v3965 = vadd.f32 0.0, %v3964
      %v3966 = vpop.f32.mrb[0].mxu0
      %v3967 = vadd.f32 0.0, %v3966
      %v3968 = vpop.f32.mrb[0].mxu0
      %v3969 = vadd.f32 0.0, %v3968
      %v3970 = vpop.f32.mrb[0].mxu0
      %v3971 = vadd.f32 0.0, %v3970
      %3972 = vdwg.mxu0
      %v3973 = vsel %vm457, %v3857, -inf
      %v3974 = vmax.f32 %v3855, %v3973
      %3975 = vmax.xlane.f32.xlu0 %v3974
      %v3976 = vpop.xlane.xlu0 %3975
      %v3977 = vsel %vm457, %v3861, -inf
      %v3978 = vmax.f32 %v3859, %v3977
      %3979 = vmax.xlane.f32.xlu0 %v3978
      %v3980 = vpop.xlane.xlu0 %3979
      %v3981 = vsel %vm457, %v3867, -inf
      %v3982 = vmax.f32 %v3865, %v3981
      %3983 = vmax.xlane.f32.xlu0 %v3982
      %v3984 = vpop.xlane.xlu0 %3983
      %v3985 = vsel %vm457, %v3871, -inf
      %v3986 = vmax.f32 %v3869, %v3985
      %3987 = vmax.xlane.f32.xlu0 %v3986
      %v3988 = vpop.xlane.xlu0 %3987
      %v3989 = vsel %vm457, %v3877, -inf
      %v3990 = vmax.f32 %v3875, %v3989
      %3991 = vmax.xlane.f32.xlu0 %v3990
      %v3992 = vpop.xlane.xlu0 %3991
      %v3993 = vsel %vm457, %v3881, -inf
      %v3994 = vmax.f32 %v3879, %v3993
      %3995 = vmax.xlane.f32.xlu0 %v3994
      %v3996 = vpop.xlane.xlu0 %3995
      %v3997 = vsel %vm457, %v3887, -inf
      %v3998 = vmax.f32 %v3885, %v3997
      %3999 = vmax.xlane.f32.xlu0 %v3998
      %v4000 = vpop.xlane.xlu0 %3999
      %v4001 = vsel %vm457, %v3891, -inf
      %v4002 = vmax.f32 %v3889, %v4001
      %4003 = vmax.xlane.f32.xlu0 %v4002
      %v4004 = vpop.xlane.xlu0 %4003
      %v4005 = vsel %vm457, %v3897, -inf
      %v4006 = vmax.f32 %v3895, %v4005
      %4007 = vmax.xlane.f32.xlu0 %v4006
      %v4008 = vpop.xlane.xlu0 %4007
      %v4009 = vsel %vm457, %v3901, -inf
      %v4010 = vmax.f32 %v3899, %v4009
      %4011 = vmax.xlane.f32.xlu0 %v4010
      %v4012 = vpop.xlane.xlu0 %4011
      %v4013 = vsel %vm457, %v3907, -inf
      %v4014 = vmax.f32 %v3905, %v4013
      %4015 = vmax.xlane.f32.xlu0 %v4014
      %v4016 = vpop.xlane.xlu0 %4015
      %v4017 = vsel %vm457, %v3911, -inf
      %v4018 = vmax.f32 %v3909, %v4017
      %4019 = vmax.xlane.f32.xlu0 %v4018
      %v4020 = vpop.xlane.xlu0 %4019
      %v4021 = vsel %vm457, %v3917, -inf
      %v4022 = vmax.f32 %v3915, %v4021
      %4023 = vmax.xlane.f32.xlu0 %v4022
      %v4024 = vpop.xlane.xlu0 %4023
      %v4025 = vsel %vm457, %v3921, -inf
      %v4026 = vmax.f32 %v3919, %v4025
      %4027 = vmax.xlane.f32.xlu0 %v4026
      %v4028 = vpop.xlane.xlu0 %4027
      %v4029 = vsel %vm457, %v3927, -inf
      %v4030 = vmax.f32 %v3925, %v4029
      %4031 = vmax.xlane.f32.xlu0 %v4030
      %v4032 = vpop.xlane.xlu0 %4031
      %v4033 = vsel %vm457, %v3931, -inf
      %v4034 = vmax.f32 %v3929, %v4033
      %4035 = vmax.xlane.f32.xlu0 %v4034
      %v4036 = vpop.xlane.xlu0 %4035
      %v4037 = vsel %vm457, %v3937, -inf
      %v4038 = vmax.f32 %v3935, %v4037
      %4039 = vmax.xlane.f32.xlu0 %v4038
      %v4040 = vpop.xlane.xlu0 %4039
      %v4041 = vsel %vm457, %v3941, -inf
      %v4042 = vmax.f32 %v3939, %v4041
      %4043 = vmax.xlane.f32.xlu0 %v4042
      %v4044 = vpop.xlane.xlu0 %4043
      %v4045 = vsel %vm457, %v3947, -inf
      %v4046 = vmax.f32 %v3945, %v4045
      %4047 = vmax.xlane.f32.xlu0 %v4046
      %v4048 = vpop.xlane.xlu0 %4047
      %v4049 = vsel %vm457, %v3951, -inf
      %v4050 = vmax.f32 %v3949, %v4049
      %4051 = vmax.xlane.f32.xlu0 %v4050
      %v4052 = vpop.xlane.xlu0 %4051
      %v4053 = vsel %vm457, %v3957, -inf
      %v4054 = vmax.f32 %v3955, %v4053
      %4055 = vmax.xlane.f32.xlu0 %v4054
      %v4056 = vpop.xlane.xlu0 %4055
      %v4057 = vsel %vm457, %v3961, -inf
      %v4058 = vmax.f32 %v3959, %v4057
      %4059 = vmax.xlane.f32.xlu0 %v4058
      %v4060 = vpop.xlane.xlu0 %4059
      %v4061 = vsel %vm457, %v3967, -inf
      %v4062 = vmax.f32 %v3965, %v4061
      %4063 = vmax.xlane.f32.xlu0 %v4062
      %v4064 = vpop.xlane.xlu0 %4063
      %v4065 = vsel %vm457, %v3971, -inf
      %v4066 = vmax.f32 %v3969, %v4065
      %4067 = vmax.xlane.f32.xlu0 %v4066
      %v4068 = vpop.xlane.xlu0 %4067
      %v4069 = vsub.f32 %v3855, %v3976
      %v4070 = vsub.f32 %v3857, %v3976
      %v4071 = vsub.f32 %v3859, %v3980
      %v4072 = vsub.f32 %v3861, %v3980
      %v4073 = vsub.f32 %v3865, %v3984
      %v4074 = vsub.f32 %v3867, %v3984
      %v4075 = vsub.f32 %v3869, %v3988
      %v4076 = vsub.f32 %v3871, %v3988
      %v4077 = vsub.f32 %v3875, %v3992
      %v4078 = vsub.f32 %v3877, %v3992
      %v4079 = vsub.f32 %v3879, %v3996
      %v4080 = vsub.f32 %v3881, %v3996
      %v4081 = vsub.f32 %v3885, %v4000
      %v4082 = vsub.f32 %v3887, %v4000
      %v4083 = vsub.f32 %v3889, %v4004
      %v4084 = vsub.f32 %v3891, %v4004
      %v4085 = vsub.f32 %v3895, %v4008
      %v4086 = vsub.f32 %v3897, %v4008
      %v4087 = vsub.f32 %v3899, %v4012
      %v4088 = vsub.f32 %v3901, %v4012
      %v4089 = vsub.f32 %v3905, %v4016
      %v4090 = vsub.f32 %v3907, %v4016
      %v4091 = vsub.f32 %v3909, %v4020
      %v4092 = vsub.f32 %v3911, %v4020
      %v4093 = vsub.f32 %v3915, %v4024
      %v4094 = vsub.f32 %v3917, %v4024
      %v4095 = vsub.f32 %v3919, %v4028
      %v4096 = vsub.f32 %v3921, %v4028
      %v4097 = vsub.f32 %v3925, %v4032
      %v4098 = vsub.f32 %v3927, %v4032
      %v4099 = vsub.f32 %v3929, %v4036
      %v4100 = vsub.f32 %v3931, %v4036
      %v4101 = vsub.f32 %v3935, %v4040
      %v4102 = vsub.f32 %v3937, %v4040
      %v4103 = vsub.f32 %v3939, %v4044
      %v4104 = vsub.f32 %v3941, %v4044
      %v4105 = vsub.f32 %v3945, %v4048
      %v4106 = vsub.f32 %v3947, %v4048
      %v4107 = vsub.f32 %v3949, %v4052
      %v4108 = vsub.f32 %v3951, %v4052
      %v4109 = vsub.f32 %v3955, %v4056
      %v4110 = vsub.f32 %v3957, %v4056
      %v4111 = vsub.f32 %v3959, %v4060
      %v4112 = vsub.f32 %v3961, %v4060
      %v4113 = vsub.f32 %v3965, %v4064
      %v4114 = vsub.f32 %v3967, %v4064
      %v4115 = vsub.f32 %v3969, %v4068
      %v4116 = vsub.f32 %v3971, %v4068
      %v4117 = vmul.f32 %v4069, 1.442695
      %v4118 = vpow.pop %v4117
      %v4119 = vmul.f32 %v4070, 1.442695
      %v4120 = vpow.pop %v4119
      %v4121 = vmul.f32 %v4071, 1.442695
      %v4122 = vpow.pop %v4121
      %v4123 = vmul.f32 %v4072, 1.442695
      %v4124 = vpow.pop %v4123
      %v4125 = vmul.f32 %v4073, 1.442695
      %v4126 = vpow.pop %v4125
      %v4127 = vmul.f32 %v4074, 1.442695
      %v4128 = vpow.pop %v4127
      %v4129 = vmul.f32 %v4075, 1.442695
      %v4130 = vpow.pop %v4129
      %v4131 = vmul.f32 %v4076, 1.442695
      %v4132 = vpow.pop %v4131
      %v4133 = vmul.f32 %v4077, 1.442695
      %v4134 = vpow.pop %v4133
      %v4135 = vmul.f32 %v4078, 1.442695
      %v4136 = vpow.pop %v4135
      %v4137 = vmul.f32 %v4079, 1.442695
      %v4138 = vpow.pop %v4137
      %v4139 = vmul.f32 %v4080, 1.442695
      %v4140 = vpow.pop %v4139
      %v4141 = vmul.f32 %v4081, 1.442695
      %v4142 = vpow.pop %v4141
      %v4143 = vmul.f32 %v4082, 1.442695
      %v4144 = vpow.pop %v4143
      %v4145 = vmul.f32 %v4083, 1.442695
      %v4146 = vpow.pop %v4145
      %v4147 = vmul.f32 %v4084, 1.442695
      %v4148 = vpow.pop %v4147
      %v4149 = vmul.f32 %v4085, 1.442695
      %v4150 = vpow.pop %v4149
      %v4151 = vmul.f32 %v4086, 1.442695
      %v4152 = vpow.pop %v4151
      %v4153 = vmul.f32 %v4087, 1.442695
      %v4154 = vpow.pop %v4153
      %v4155 = vmul.f32 %v4088, 1.442695
      %v4156 = vpow.pop %v4155
      %v4157 = vmul.f32 %v4089, 1.442695
      %v4158 = vpow.pop %v4157
      %v4159 = vmul.f32 %v4090, 1.442695
      %v4160 = vpow.pop %v4159
      %v4161 = vmul.f32 %v4091, 1.442695
      %v4162 = vpow.pop %v4161
      %v4163 = vmul.f32 %v4092, 1.442695
      %v4164 = vpow.pop %v4163
      %v4165 = vmul.f32 %v4093, 1.442695
      %v4166 = vpow.pop %v4165
      %v4167 = vmul.f32 %v4094, 1.442695
      %v4168 = vpow.pop %v4167
      %v4169 = vmul.f32 %v4095, 1.442695
      %v4170 = vpow.pop %v4169
      %v4171 = vmul.f32 %v4096, 1.442695
      %v4172 = vpow.pop %v4171
      %v4173 = vmul.f32 %v4097, 1.442695
      %v4174 = vpow.pop %v4173
      %v4175 = vmul.f32 %v4098, 1.442695
      %v4176 = vpow.pop %v4175
      %v4177 = vmul.f32 %v4099, 1.442695
      %v4178 = vpow.pop %v4177
      %v4179 = vmul.f32 %v4100, 1.442695
      %v4180 = vpow.pop %v4179
      %v4181 = vmul.f32 %v4101, 1.442695
      %v4182 = vpow.pop %v4181
      %v4183 = vmul.f32 %v4102, 1.442695
      %v4184 = vpow.pop %v4183
      %v4185 = vmul.f32 %v4103, 1.442695
      %v4186 = vpow.pop %v4185
      %v4187 = vmul.f32 %v4104, 1.442695
      %v4188 = vpow.pop %v4187
      %v4189 = vmul.f32 %v4105, 1.442695
      %v4190 = vpow.pop %v4189
      %v4191 = vmul.f32 %v4106, 1.442695
      %v4192 = vpow.pop %v4191
      %v4193 = vmul.f32 %v4107, 1.442695
      %v4194 = vpow.pop %v4193
      %v4195 = vmul.f32 %v4108, 1.442695
      %v4196 = vpow.pop %v4195
      %v4197 = vmul.f32 %v4109, 1.442695
      %v4198 = vpow.pop %v4197
      %v4199 = vmul.f32 %v4110, 1.442695
      %v4200 = vpow.pop %v4199
      %v4201 = vmul.f32 %v4111, 1.442695
      %v4202 = vpow.pop %v4201
      %v4203 = vmul.f32 %v4112, 1.442695
      %v4204 = vpow.pop %v4203
      %v4205 = vmul.f32 %v4113, 1.442695
      %v4206 = vpow.pop %v4205
      %v4207 = vmul.f32 %v4114, 1.442695
      %v4208 = vpow.pop %v4207
      %v4209 = vmul.f32 %v4115, 1.442695
      %v4210 = vpow.pop %v4209
      %v4211 = vmul.f32 %v4116, 1.442695
      %v4212 = vpow.pop %v4211
      %v4213 = vsel %vm457, %v4120, 0.0
      %v4214 = vadd.f32 %v4118, %v4213
      %4215 = vadd.xlane.f32.xlu0 %v4214
      %v4216 = vpop.xlane.xlu0 %4215
      %v4217 = vsel %vm457, %v4124, 0.0
      %v4218 = vadd.f32 %v4122, %v4217
      %4219 = vadd.xlane.f32.xlu0 %v4218
      %v4220 = vpop.xlane.xlu0 %4219
      %v4221 = vsel %vm457, %v4128, 0.0
      %v4222 = vadd.f32 %v4126, %v4221
      %4223 = vadd.xlane.f32.xlu0 %v4222
      %v4224 = vpop.xlane.xlu0 %4223
      %v4225 = vsel %vm457, %v4132, 0.0
      %v4226 = vadd.f32 %v4130, %v4225
      %4227 = vadd.xlane.f32.xlu0 %v4226
      %v4228 = vpop.xlane.xlu0 %4227
      %v4229 = vsel %vm457, %v4136, 0.0
      %v4230 = vadd.f32 %v4134, %v4229
      %4231 = vadd.xlane.f32.xlu0 %v4230
      %v4232 = vpop.xlane.xlu0 %4231
      %v4233 = vsel %vm457, %v4140, 0.0
      %v4234 = vadd.f32 %v4138, %v4233
      %4235 = vadd.xlane.f32.xlu0 %v4234
      %v4236 = vpop.xlane.xlu0 %4235
      %v4237 = vsel %vm457, %v4144, 0.0
      %v4238 = vadd.f32 %v4142, %v4237
      %4239 = vadd.xlane.f32.xlu0 %v4238
      %v4240 = vpop.xlane.xlu0 %4239
      %v4241 = vsel %vm457, %v4148, 0.0
      %v4242 = vadd.f32 %v4146, %v4241
      %4243 = vadd.xlane.f32.xlu0 %v4242
      %v4244 = vpop.xlane.xlu0 %4243
      %v4245 = vsel %vm457, %v4152, 0.0
      %v4246 = vadd.f32 %v4150, %v4245
      %4247 = vadd.xlane.f32.xlu0 %v4246
      %v4248 = vpop.xlane.xlu0 %4247
      %v4249 = vsel %vm457, %v4156, 0.0
      %v4250 = vadd.f32 %v4154, %v4249
      %4251 = vadd.xlane.f32.xlu0 %v4250
      %v4252 = vpop.xlane.xlu0 %4251
      %v4253 = vsel %vm457, %v4160, 0.0
      %v4254 = vadd.f32 %v4158, %v4253
      %4255 = vadd.xlane.f32.xlu0 %v4254
      %v4256 = vpop.xlane.xlu0 %4255
      %v4257 = vsel %vm457, %v4164, 0.0
      %v4258 = vadd.f32 %v4162, %v4257
      %4259 = vadd.xlane.f32.xlu0 %v4258
      %v4260 = vpop.xlane.xlu0 %4259
      %v4261 = vsel %vm457, %v4168, 0.0
      %v4262 = vadd.f32 %v4166, %v4261
      %4263 = vadd.xlane.f32.xlu0 %v4262
      %v4264 = vpop.xlane.xlu0 %4263
      %v4265 = vsel %vm457, %v4172, 0.0
      %v4266 = vadd.f32 %v4170, %v4265
      %4267 = vadd.xlane.f32.xlu0 %v4266
      %v4268 = vpop.xlane.xlu0 %4267
      %v4269 = vsel %vm457, %v4176, 0.0
      %v4270 = vadd.f32 %v4174, %v4269
      %4271 = vadd.xlane.f32.xlu0 %v4270
      %v4272 = vpop.xlane.xlu0 %4271
      %v4273 = vsel %vm457, %v4180, 0.0
      %v4274 = vadd.f32 %v4178, %v4273
      %4275 = vadd.xlane.f32.xlu0 %v4274
      %v4276 = vpop.xlane.xlu0 %4275
      %v4277 = vsel %vm457, %v4184, 0.0
      %v4278 = vadd.f32 %v4182, %v4277
      %4279 = vadd.xlane.f32.xlu0 %v4278
      %v4280 = vpop.xlane.xlu0 %4279
      %v4281 = vsel %vm457, %v4188, 0.0
      %v4282 = vadd.f32 %v4186, %v4281
      %4283 = vadd.xlane.f32.xlu0 %v4282
      %v4284 = vpop.xlane.xlu0 %4283
      %v4285 = vsel %vm457, %v4192, 0.0
      %v4286 = vadd.f32 %v4190, %v4285
      %4287 = vadd.xlane.f32.xlu0 %v4286
      %v4288 = vpop.xlane.xlu0 %4287
      %v4289 = vsel %vm457, %v4196, 0.0
      %v4290 = vadd.f32 %v4194, %v4289
      %4291 = vadd.xlane.f32.xlu0 %v4290
      %v4292 = vpop.xlane.xlu0 %4291
      %v4293 = vsel %vm457, %v4200, 0.0
      %v4294 = vadd.f32 %v4198, %v4293
      %4295 = vadd.xlane.f32.xlu0 %v4294
      %v4296 = vpop.xlane.xlu0 %4295
      %v4297 = vsel %vm457, %v4204, 0.0
      %v4298 = vadd.f32 %v4202, %v4297
      %4299 = vadd.xlane.f32.xlu0 %v4298
      %v4300 = vpop.xlane.xlu0 %4299
      %v4301 = vsel %vm457, %v4208, 0.0
      %v4302 = vadd.f32 %v4206, %v4301
      %4303 = vadd.xlane.f32.xlu0 %v4302
      %v4304 = vpop.xlane.xlu0 %4303
      %v4305 = vsel %vm457, %v4212, 0.0
      %v4306 = vadd.f32 %v4210, %v4305
      %4307 = vadd.xlane.f32.xlu0 %v4306
      %v4308 = vpop.xlane.xlu0 %4307
      %v4309 = vrcp.pop %v4216
      %v4310 = vrcp.pop %v4220
      %v4311 = vrcp.pop %v4224
      %v4312 = vrcp.pop %v4228
      %v4313 = vrcp.pop %v4232
      %v4314 = vrcp.pop %v4236
      %v4315 = vrcp.pop %v4240
      %v4316 = vrcp.pop %v4244
      %v4317 = vrcp.pop %v4248
      %v4318 = vrcp.pop %v4252
      %v4319 = vrcp.pop %v4256
      %v4320 = vrcp.pop %v4260
      %v4321 = vrcp.pop %v4264
      %v4322 = vrcp.pop %v4268
      %v4323 = vrcp.pop %v4272
      %v4324 = vrcp.pop %v4276
      %v4325 = vrcp.pop %v4280
      %v4326 = vrcp.pop %v4284
      %v4327 = vrcp.pop %v4288
      %v4328 = vrcp.pop %v4292
      %v4329 = vrcp.pop %v4296
      %v4330 = vrcp.pop %v4300
      %v4331 = vrcp.pop %v4304
      %v4332 = vrcp.pop %v4308
      %v4333 = vmul.f32 %v4118, %v4309
      %v4334 = vmul.f32 %v4120, %v4309
      %v4335 = vmul.f32 %v4122, %v4310
      %v4336 = vmul.f32 %v4124, %v4310
      %v4337 = vmul.f32 %v4126, %v4311
      %v4338 = vmul.f32 %v4128, %v4311
      %v4339 = vmul.f32 %v4130, %v4312
      %v4340 = vmul.f32 %v4132, %v4312
      %v4341 = vmul.f32 %v4134, %v4313
      %v4342 = vmul.f32 %v4136, %v4313
      %v4343 = vmul.f32 %v4138, %v4314
      %v4344 = vmul.f32 %v4140, %v4314
      %v4345 = vmul.f32 %v4142, %v4315
      %v4346 = vmul.f32 %v4144, %v4315
      %v4347 = vmul.f32 %v4146, %v4316
      %v4348 = vmul.f32 %v4148, %v4316
      %v4349 = vmul.f32 %v4150, %v4317
      %v4350 = vmul.f32 %v4152, %v4317
      %v4351 = vmul.f32 %v4154, %v4318
      %v4352 = vmul.f32 %v4156, %v4318
      %v4353 = vmul.f32 %v4158, %v4319
      %v4354 = vmul.f32 %v4160, %v4319
      %v4355 = vmul.f32 %v4162, %v4320
      %v4356 = vmul.f32 %v4164, %v4320
      %v4357 = vmul.f32 %v4166, %v4321
      %v4358 = vmul.f32 %v4168, %v4321
      %v4359 = vmul.f32 %v4170, %v4322
      %v4360 = vmul.f32 %v4172, %v4322
      %v4361 = vmul.f32 %v4174, %v4323
      %v4362 = vmul.f32 %v4176, %v4323
      %v4363 = vmul.f32 %v4178, %v4324
      %v4364 = vmul.f32 %v4180, %v4324
      %v4365 = vmul.f32 %v4182, %v4325
      %v4366 = vmul.f32 %v4184, %v4325
      %v4367 = vmul.f32 %v4186, %v4326
      %v4368 = vmul.f32 %v4188, %v4326
      %v4369 = vmul.f32 %v4190, %v4327
      %v4370 = vmul.f32 %v4192, %v4327
      %v4371 = vmul.f32 %v4194, %v4328
      %v4372 = vmul.f32 %v4196, %v4328
      %v4373 = vmul.f32 %v4198, %v4329
      %v4374 = vmul.f32 %v4200, %v4329
      %v4375 = vmul.f32 %v4202, %v4330
      %v4376 = vmul.f32 %v4204, %v4330
      %v4377 = vmul.f32 %v4206, %v4331
      %v4378 = vmul.f32 %v4208, %v4331
      %v4379 = vmul.f32 %v4210, %v4332
      %v4380 = vmul.f32 %v4212, %v4332
      %v4381 = vpack.c.bf16 %v4335, %v4333
      %v4382 = vpack.c.bf16 %v4336, %v4334
      %v4383 = vpack.c.bf16 %v4339, %v4337
      %v4384 = vpack.c.bf16 %v4340, %v4338
      %v4385 = vpack.c.bf16 %v4343, %v4341
      %v4386 = vpack.c.bf16 %v4344, %v4342
      %v4387 = vpack.c.bf16 %v4347, %v4345
      %v4388 = vpack.c.bf16 %v4348, %v4346
      %v4389 = vpack.c.bf16 %v4351, %v4349
      %v4390 = vpack.c.bf16 %v4352, %v4350
      %v4391 = vpack.c.bf16 %v4355, %v4353
      %v4392 = vpack.c.bf16 %v4356, %v4354
      %v4393 = vpack.c.bf16 %v4359, %v4357
      %v4394 = vpack.c.bf16 %v4360, %v4358
      %v4395 = vpack.c.bf16 %v4363, %v4361
      %v4396 = vpack.c.bf16 %v4364, %v4362
      %v4397 = vpack.c.bf16 %v4367, %v4365
      %v4398 = vpack.c.bf16 %v4368, %v4366
      %v4399 = vpack.c.bf16 %v4371, %v4369
      %v4400 = vpack.c.bf16 %v4372, %v4370
      %v4401 = vpack.c.bf16 %v4375, %v4373
      %v4402 = vpack.c.bf16 %v4376, %v4374
      %v4403 = vpack.c.bf16 %v4379, %v4377
      %v4404 = vpack.c.bf16 %v4380, %v4378
      %v4406 = vsel %vm457, %v3745, 0
      %v4409 = vsel %vm457, %v4382, 0
      %v4412 = vsel %vm457, %v4384, 0
      %v4415 = vsel %vm457, %v4386, 0
      %v4418 = vsel %vm457, %v4388, 0
      %v4421 = vsel %vm457, %v4390, 0
      %v4424 = vsel %vm457, %v4392, 0
      %v4427 = vsel %vm457, %v4394, 0
      %v4430 = vsel %vm457, %v4396, 0
      %v4433 = vsel %vm457, %v4398, 0
      %v4436 = vsel %vm457, %v4400, 0
      %v4439 = vsel %vm457, %v4402, 0
      %v4442 = vsel %vm457, %v4404, 0
      %4444 = vmatprep.subr.bf16.mxu0 %v4409
      %4445 = vmatpush1.bf16.xpose.msra.mxu0 %v4381
      %4446 = vmatprep.subr.bf16.mxu0 %v4412
      %4447 = vmatpush1.bf16.xpose.msra.mxu0 %v4383
      %4448 = vmatprep.subr.bf16.mxu0 %v4415
      %4449 = vmatpush1.bf16.xpose.msra.mxu0 %v4385
      %4450 = vmatprep.subr.bf16.mxu0 %v4418
      %4451 = vmatpush1.bf16.xpose.msra.mxu0 %v4387
      %4452 = vmatprep.subr.bf16.mxu0 %v4421
      %4453 = vmatpush1.bf16.xpose.msra.mxu0 %v4389
      %4454 = vmatprep.subr.bf16.mxu0 %v4424
      %4455 = vmatpush1.bf16.xpose.msra.mxu0 %v4391
      %4456 = vmatprep.subr.bf16.mxu0 %v4427
      %4457 = vmatpush1.bf16.xpose.msra.mxu0 %v4393
      %4458 = vmatprep.subr.bf16.mxu0 %v4430
      %4459 = vmatpush1.bf16.xpose.msra.mxu0 %v4395
      %4460 = vmatprep.subr.bf16.mxu0 %v4433
      %4461 = vmatpush1.bf16.xpose.msra.mxu0 %v4397
      %4462 = vmatprep.subr.bf16.mxu0 %v4436
      %4463 = vmatpush1.bf16.xpose.msra.mxu0 %v4399
      %4464 = vmatprep.subr.bf16.mxu0 %v4439
      %4465 = vmatpush1.bf16.xpose.msra.mxu0 %v4401
      %4466 = vmatprep.subr.bf16.mxu0 %v4442
      %4467 = vmatpush1.bf16.xpose.msra.mxu0 %v4403
      %4468 = vmatprep.subr.bf16.mxu0 0
      %4469 = vmatpush1.bf16.xpose.msra.mxu0 0
      %4470 = vmatprep.subr.bf16.mxu0 0
      %4471 = vmatpush1.bf16.xpose.msra.mxu0 0
      %4472 = vmatprep.subr.bf16.mxu0 0
      %4473 = vmatpush1.bf16.xpose.msra.mxu0 0
      %4474 = vmatprep.subr.bf16.mxu0 0
      %4475 = vmatpush1.bf16.xpose.msra.mxu0 0
      %4476 = vmatprep.mubr.bf16.mxu0 %v4406
      %4477 = vmatmul.mubr.bf16.gmra.mrb[0].mxu0 %v3744
      %v4478 = vpop.f32.mrb[0].mxu0
      %v4479 = vadd.f32 0.0, %v4478
      %v4480 = vpop.f32.mrb[0].mxu0
      %v4481 = vadd.f32 0.0, %v4480
      %v4482 = vpop.f32.mrb[0].mxu0
      %v4483 = vpop.f32.mrb[0].mxu0
      %4484 = vdwg.mxu0
      %s4485 = scalar_lea.vmem %s4, 24
      %v4486 = vld [vmem:[%s4485] sm:$0xf]
      %v4487 = vld [vmem:[%s4485 + $0x4] sm:$0xf]
      %v4488 = vpack.c.bf16 %v4479, %v4479
      %v4489 = vpack.c.bf16 %v4481, %v4481
      %v4492 = vunpack.c.l.b16 %v4486
      %v4493 = vunpack.c.l.b16 %v4487
      %v4494 = vpack.c.b16 %v4493, %v4492
      %v4496 = vsel %vm735, %v4494, 0
      %v4499 = vsel %vm772, %v4488, 0
      %v4502 = vsel %vm772, %v4489, 0
      %4504 = vmatprep.subr.bf16.mxu0 %v4502
      %4505 = vmatpush1.bf16.msra.mxu0 %v4499
      %4506 = vmatprep.subr.bf16.mxu0 0
      %4507 = vmatpush1.bf16.msra.mxu0 0
      %4508 = vmatprep.subr.bf16.mxu0 0
      %4509 = vmatpush1.bf16.msra.mxu0 0
      %4510 = vmatprep.subr.bf16.mxu0 0
      %4511 = vmatpush1.bf16.msra.mxu0 0
      %4512 = vmatprep.subr.bf16.mxu0 0
      %4513 = vmatpush1.bf16.msra.mxu0 0
      %4514 = vmatprep.subr.bf16.mxu0 0
      %4515 = vmatpush1.bf16.msra.mxu0 0
      %4516 = vmatprep.subr.bf16.mxu0 0
      %4517 = vmatpush1.bf16.msra.mxu0 0
      %4518 = vmatprep.subr.bf16.mxu0 0
      %4519 = vmatpush1.bf16.msra.mxu0 0
      %4520 = vmatprep.subr.bf16.mxu0 0
      %4521 = vmatpush1.bf16.msra.mxu0 0
      %4522 = vmatprep.subr.bf16.mxu0 0
      %4523 = vmatpush1.bf16.msra.mxu0 0
      %4524 = vmatprep.subr.bf16.mxu0 0
      %4525 = vmatpush1.bf16.msra.mxu0 0
      %4526 = vmatprep.subr.bf16.mxu0 0
      %4527 = vmatpush1.bf16.msra.mxu0 0
      %4528 = vmatprep.subr.bf16.mxu0 0
      %4529 = vmatpush1.bf16.msra.mxu0 0
      %4530 = vmatprep.subr.bf16.mxu0 0
      %4531 = vmatpush1.bf16.msra.mxu0 0
      %4532 = vmatprep.subr.bf16.mxu0 0
      %4533 = vmatpush1.bf16.msra.mxu0 0
      %4534 = vmatprep.subr.bf16.mxu0 0
      %4535 = vmatpush1.bf16.msra.mxu0 0
      %4536 = vmatprep.mubr.bf16.mxu0 0
      %4537 = vmatmul.mubr.bf16.gmra.mrb[0].mxu0 %v4496
      %v4538 = vpop.f32.mrb[0].mxu0
      %v4539 = vadd.f32 0.0, %v4538
      %v4540 = vpop.f32.mrb[0].mxu0
      %v4541 = vadd.f32 0.0, %v4540
      %v4542 = vpop.f32.mrb[0].mxu0
      %v4543 = vadd.f32 0.0, %v4542
      %v4544 = vpop.f32.mrb[0].mxu0
      %v4545 = vadd.f32 0.0, %v4544
      %4546 = vdwg.mxu0
      %v4549 = vunpack.c.l.b16 %v3736
      %v4550 = vunpack.c.l.b16 %v3737
      %v4551 = vpack.c.b16 %v4550, %v4549
      %v4553 = vsel %vm735, %v4551, 0
      %v4556 = vsel %vm772, %v3738, 0
      %v4559 = vsel %vm772, %v3739, 0
      %4561 = vmatprep.subr.bf16.mxu0 %v4559
      %4562 = vmatpush1.bf16.msra.mxu0 %v4556
      %4563 = vmatprep.subr.bf16.mxu0 0
      %4564 = vmatpush1.bf16.msra.mxu0 0
      %4565 = vmatprep.subr.bf16.mxu0 0
      %4566 = vmatpush1.bf16.msra.mxu0 0
      %4567 = vmatprep.subr.bf16.mxu0 0
      %4568 = vmatpush1.bf16.msra.mxu0 0
      %4569 = vmatprep.subr.bf16.mxu0 0
      %4570 = vmatpush1.bf16.msra.mxu0 0
      %4571 = vmatprep.subr.bf16.mxu0 0
      %4572 = vmatpush1.bf16.msra.mxu0 0
      %4573 = vmatprep.subr.bf16.mxu0 0
      %4574 = vmatpush1.bf16.msra.mxu0 0
      %4575 = vmatprep.subr.bf16.mxu0 0
      %4576 = vmatpush1.bf16.msra.mxu0 0
      %4577 = vmatprep.subr.bf16.mxu0 0
      %4578 = vmatpush1.bf16.msra.mxu0 0
      %4579 = vmatprep.subr.bf16.mxu0 0
      %4580 = vmatpush1.bf16.msra.mxu0 0
      %4581 = vmatprep.subr.bf16.mxu0 0
      %4582 = vmatpush1.bf16.msra.mxu0 0
      %4583 = vmatprep.subr.bf16.mxu0 0
      %4584 = vmatpush1.bf16.msra.mxu0 0
      %4585 = vmatprep.subr.bf16.mxu0 0
      %4586 = vmatpush1.bf16.msra.mxu0 0
      %4587 = vmatprep.subr.bf16.mxu0 0
      %4588 = vmatpush1.bf16.msra.mxu0 0
      %4589 = vmatprep.subr.bf16.mxu0 0
      %4590 = vmatpush1.bf16.msra.mxu0 0
      %4591 = vmatprep.subr.bf16.mxu0 0
      %4592 = vmatpush1.bf16.msra.mxu0 0
      %4593 = vmatprep.mubr.bf16.mxu0 0
      %4594 = vmatmul.mubr.bf16.gmra.mrb[0].mxu0 %v4553
      %v4595 = vpop.f32.mrb[0].mxu0
      %v4596 = vadd.f32 %v4539, %v4595
      %v4597 = vpop.f32.mrb[0].mxu0
      %v4598 = vadd.f32 %v4541, %v4597
      %v4599 = vpop.f32.mrb[0].mxu0
      %v4600 = vadd.f32 %v4543, %v4599
      %v4601 = vpop.f32.mrb[0].mxu0
      %v4602 = vadd.f32 %v4545, %v4601
      %4603 = vdwg.mxu0
      %v4604 = vadd.f32 %v2793, %v4596
      %v4605 = vadd.f32 %v2794, %v4598
      %v4606 = vadd.f32 %v2795, %v4600
      %v4607 = vadd.f32 %v2796, %v4602
      %4609 = vset.pattern.permute.xlu0 0
      %4610 = vperm.xlu0 %4609, %v2802
      %v4611 = vpop.permute.xlu0 %4610
      %4614 = vset.pattern.permute.xlu0 0
      %4615 = vperm.xlu0 %4614, %v2803
      %v4616 = vpop.permute.xlu0 %4615
      %v4618 = vadd.f32 %v4604, %v4611
      %v4619 = vadd.f32 %v4605, %v4611
      %v4620 = vadd.f32 %v4606, %v4616
      %v4621 = vadd.f32 %v4607, %v4616
      %v4622 = vadd.f32 %v4618, %v4620
      %v4623 = vrot.slane %v4622, 4
      %v4624 = vadd.f32 %v4622, %v4623
      %v4625 = vrot.slane %v4624, 2
      %v4626 = vadd.f32 %v4624, %v4625
      %v4627 = vrot.slane %v4626, 1
      %v4628 = vadd.f32 %v4626, %v4627
      %v4629 = vsel %vm457, %v4619, 0.0
      %v4630 = vsel %vm457, %v4621, 0.0
      %v4631 = vadd.f32 %v4629, %v4630
      %v4632 = vrot.slane %v4631, 4
      %v4633 = vadd.f32 %v4631, %v4632
      %v4634 = vrot.slane %v4633, 2
      %v4635 = vadd.f32 %v4633, %v4634
      %v4636 = vrot.slane %v4635, 1
      %v4637 = vadd.f32 %v4635, %v4636
      %v4638 = vmul.f32 %v4628, %v536
      %v4639 = vmul.f32 %v4637, %v536
      %v4640 = vsub.f32 %v4618, %v4638
      %v4641 = vsub.f32 %v4619, %v4639
      %v4642 = vsub.f32 %v4620, %v4638
      %v4643 = vsub.f32 %v4621, %v4639
      %v4644 = vmul.f32 %v4640, %v4640
      %v4645 = vmul.f32 %v4641, %v4641
      %v4646 = vmul.f32 %v4642, %v4642
      %v4647 = vmul.f32 %v4643, %v4643
      %v4648 = vadd.f32 %v4644, %v4646
      %v4649 = vrot.slane %v4648, 4
      %v4650 = vadd.f32 %v4648, %v4649
      %v4651 = vrot.slane %v4650, 2
      %v4652 = vadd.f32 %v4650, %v4651
      %v4653 = vrot.slane %v4652, 1
      %v4654 = vadd.f32 %v4652, %v4653
      %v4655 = vsel %vm457, %v4645, 0.0
      %v4656 = vsel %vm457, %v4647, 0.0
      %v4657 = vadd.f32 %v4655, %v4656
      %v4658 = vrot.slane %v4657, 4
      %v4659 = vadd.f32 %v4657, %v4658
      %v4660 = vrot.slane %v4659, 2
      %v4661 = vadd.f32 %v4659, %v4660
      %v4662 = vrot.slane %v4661, 1
      %v4663 = vadd.f32 %v4661, %v4662
      %v4664 = vmul.f32 %v4654, %v536
      %v4665 = vmul.f32 %v4663, %v536
      %v4666 = vadd.f32 %v4664, 1e-05
      %v4667 = vadd.f32 %v4665, 1e-05
      %v4668 = vrsqrt.pop %v4666
      %v4669 = vrsqrt.pop %v4667
      %v4670 = vmul.f32 %v4640, %v4668
      %v4671 = vmul.f32 %v4641, %v4669
      %v4672 = vmul.f32 %v4642, %v4668
      %v4673 = vmul.f32 %v4643, %v4669
      %4675 = vset.pattern.permute.xlu0 0
      %4676 = vperm.xlu0 %4675, %v2804
      %v4677 = vpop.permute.xlu0 %4676
      %4680 = vset.pattern.permute.xlu0 0
      %4681 = vperm.xlu0 %4680, %v2805
      %v4682 = vpop.permute.xlu0 %4681
      %v4684 = vmul.f32 %v4670, %v4677
      %v4685 = vmul.f32 %v4671, %v4677
      %v4686 = vmul.f32 %v4672, %v4682
      %v4687 = vmul.f32 %v4673, %v4682
      %4689 = vset.pattern.permute.xlu0 0
      %4690 = vperm.xlu0 %4689, %v2806
      %v4691 = vpop.permute.xlu0 %4690
      %4694 = vset.pattern.permute.xlu0 0
      %4695 = vperm.xlu0 %4694, %v2807
      %v4696 = vpop.permute.xlu0 %4695
      %v4698 = vadd.f32 %v4684, %v4691
      %v4699 = vadd.f32 %v4685, %v4691
      %v4700 = vadd.f32 %v4686, %v4696
      %v4701 = vadd.f32 %v4687, %v4696
      %s4702 = scalar_lea.vmem %s5, 16
      %v4703 = vld [vmem:[%s4702] sm:$0xf]
      %v4704 = vld [vmem:[%s4702 + $0x4] sm:$0xf]
      %v4705 = vld [vmem:[%s4702 + $0x8] sm:$0xf]
      %v4706 = vld [vmem:[%s4702 + $0xc] sm:$0xf]
      %v4707 = vpack.c.bf16 %v4700, %v4698
      %v4708 = vpack.c.bf16 %v4701, %v4699
      %4710 = vset.pattern.permute.xlu0 0
      %4711 = vperm.xlu0 %4710, %v2810
      %v4712 = vpop.permute.xlu0 %4711
      %4715 = vset.pattern.permute.xlu0 0
      %4716 = vperm.xlu0 %4715, %v2811
      %v4717 = vpop.permute.xlu0 %4716
      %4720 = vset.pattern.permute.xlu0 0
      %4721 = vperm.xlu0 %4720, %v2812
      %v4722 = vpop.permute.xlu0 %4721
      %4725 = vset.pattern.permute.xlu0 0
      %4726 = vperm.xlu0 %4725, %v2813
      %v4727 = vpop.permute.xlu0 %4726
      %v4733 = vunpack.c.l.b16 %v4703
      %v4734 = vunpack.c.l.b16 %v4704
      %v4735 = vunpack.c.l.b16 %v4705
      %v4736 = vunpack.c.l.b16 %v4706
      %v4737 = vpack.c.b16 %v4734, %v4733
      %v4738 = vpack.c.b16 %v4736, %v4735
      %v4740 = vsel %vm624, %v4737, 0
      %v4743 = vsel %vm624, %v4738, 0
      %4745 = vmatprep.subr.bf16.mxu0 %v4708
      %4746 = vmatpush1.bf16.msra.mxu0 %v4707
      %4747 = vmatprep.subr.bf16.mxu0 0
      %4748 = vmatpush1.bf16.msra.mxu0 0
      %4749 = vmatprep.subr.bf16.mxu0 0
      %4750 = vmatpush1.bf16.msra.mxu0 0
      %4751 = vmatprep.subr.bf16.mxu0 0
      %4752 = vmatpush1.bf16.msra.mxu0 0
      %4753 = vmatprep.subr.bf16.mxu0 0
      %4754 = vmatpush1.bf16.msra.mxu0 0
      %4755 = vmatprep.subr.bf16.mxu0 0
      %4756 = vmatpush1.bf16.msra.mxu0 0
      %4757 = vmatprep.subr.bf16.mxu0 0
      %4758 = vmatpush1.bf16.msra.mxu0 0
      %4759 = vmatprep.subr.bf16.mxu0 0
      %4760 = vmatpush1.bf16.msra.mxu0 0
      %4761 = vmatprep.subr.bf16.mxu0 0
      %4762 = vmatpush1.bf16.msra.mxu0 0
      %4763 = vmatprep.subr.bf16.mxu0 0
      %4764 = vmatpush1.bf16.msra.mxu0 0
      %4765 = vmatprep.subr.bf16.mxu0 0
      %4766 = vmatpush1.bf16.msra.mxu0 0
      %4767 = vmatprep.subr.bf16.mxu0 0
      %4768 = vmatpush1.bf16.msra.mxu0 0
      %4769 = vmatprep.subr.bf16.mxu0 0
      %4770 = vmatpush1.bf16.msra.mxu0 0
      %4771 = vmatprep.subr.bf16.mxu0 0
      %4772 = vmatpush1.bf16.msra.mxu0 0
      %4773 = vmatprep.subr.bf16.mxu0 0
      %4774 = vmatpush1.bf16.msra.mxu0 0
      %4775 = vmatprep.subr.bf16.mxu0 0
      %4776 = vmatpush1.bf16.msra.mxu0 0
      %4777 = vmatprep.mubr.bf16.mxu0 0
      %4778 = vmatmul.mubr.bf16.gmra.mrb[0].mxu0 %v4740
      %v4779 = vpop.f32.mrb[0].mxu0
      %v4780 = vadd.f32 %v4712, %v4779
      %v4781 = vpop.f32.mrb[0].mxu0
      %v4782 = vadd.f32 %v4712, %v4781
      %v4783 = vpop.f32.mrb[0].mxu0
      %v4784 = vadd.f32 %v4717, %v4783
      %v4785 = vpop.f32.mrb[0].mxu0
      %v4786 = vadd.f32 %v4717, %v4785
      %4787 = vmatprep.mubr.bf16.mxu0 0
      %4788 = vmatmul.mubr.bf16.gmra.mrb[0].mxu0 %v4743
      %v4789 = vpop.f32.mrb[0].mxu0
      %v4790 = vadd.f32 %v4722, %v4789
      %v4791 = vpop.f32.mrb[0].mxu0
      %v4792 = vadd.f32 %v4722, %v4791
      %v4793 = vpop.f32.mrb[0].mxu0
      %v4794 = vadd.f32 %v4727, %v4793
      %v4795 = vpop.f32.mrb[0].mxu0
      %v4796 = vadd.f32 %v4727, %v4795
      %4797 = vdwg.mxu0
      %v4798 = vmul.f32 %v4780, 0.5
      %v4799 = vmul.f32 %v4782, 0.5
      %v4800 = vmul.f32 %v4784, 0.5
      %v4801 = vmul.f32 %v4786, 0.5
      %v4802 = vmul.f32 %v4790, 0.5
      %v4803 = vmul.f32 %v4792, 0.5
      %v4804 = vmul.f32 %v4794, 0.5
      %v4805 = vmul.f32 %v4796, 0.5
      %v4806 = vmul.f32 %v4780, 0.70710677
      %v4807 = vmul.f32 %v4782, 0.70710677
      %v4808 = vmul.f32 %v4784, 0.70710677
      %v4809 = vmul.f32 %v4786, 0.70710677
      %v4810 = vmul.f32 %v4790, 0.70710677
      %v4811 = vmul.f32 %v4792, 0.70710677
      %v4812 = vmul.f32 %v4794, 0.70710677
      %v4813 = vmul.f32 %v4796, 0.70710677
      %vm4814 = vcmp.ge.f32.partialorder %v4806, 0.0
      %vm4815 = vcmp.ge.f32.partialorder %v4807, 0.0
      %vm4816 = vcmp.ge.f32.partialorder %v4808, 0.0
      %vm4817 = vcmp.ge.f32.partialorder %v4809, 0.0
      %vm4818 = vcmp.ge.f32.partialorder %v4810, 0.0
      %vm4819 = vcmp.ge.f32.partialorder %v4811, 0.0
      %vm4820 = vcmp.ge.f32.partialorder %v4812, 0.0
      %vm4821 = vcmp.ge.f32.partialorder %v4813, 0.0
      %v4822 = vsel %vm4814, 1.0, -1.0
      %v4823 = vsel %vm4815, 1.0, -1.0
      %v4824 = vsel %vm4816, 1.0, -1.0
      %v4825 = vsel %vm4817, 1.0, -1.0
      %v4826 = vsel %vm4818, 1.0, -1.0
      %v4827 = vsel %vm4819, 1.0, -1.0
      %v4828 = vsel %vm4820, 1.0, -1.0
      %v4829 = vsel %vm4821, 1.0, -1.0
      %v4830 = vand.u32 2147483647, %v4806
      %v4831 = vand.u32 2147483647, %v4807
      %v4832 = vand.u32 2147483647, %v4808
      %v4833 = vand.u32 2147483647, %v4809
      %v4834 = vand.u32 2147483647, %v4810
      %v4835 = vand.u32 2147483647, %v4811
      %v4836 = vand.u32 2147483647, %v4812
      %v4837 = vand.u32 2147483647, %v4813
      %v4838 = vmul.f32 %v4830, 0.3275911
      %v4839 = vmul.f32 %v4831, 0.3275911
      %v4840 = vmul.f32 %v4832, 0.3275911
      %v4841 = vmul.f32 %v4833, 0.3275911
      %v4842 = vmul.f32 %v4834, 0.3275911
      %v4843 = vmul.f32 %v4835, 0.3275911
      %v4844 = vmul.f32 %v4836, 0.3275911
      %v4845 = vmul.f32 %v4837, 0.3275911
      %v4846 = vadd.f32 %v4838, 1.0
      %v4847 = vadd.f32 %v4839, 1.0
      %v4848 = vadd.f32 %v4840, 1.0
      %v4849 = vadd.f32 %v4841, 1.0
      %v4850 = vadd.f32 %v4842, 1.0
      %v4851 = vadd.f32 %v4843, 1.0
      %v4852 = vadd.f32 %v4844, 1.0
      %v4853 = vadd.f32 %v4845, 1.0
      %v4854 = vrcp.pop %v4846
      %v4855 = vmul.f32 1.0, %v4854
      %v4856 = vrcp.pop %v4847
      %v4857 = vmul.f32 1.0, %v4856
      %v4858 = vrcp.pop %v4848
      %v4859 = vmul.f32 1.0, %v4858
      %v4860 = vrcp.pop %v4849
      %v4861 = vmul.f32 1.0, %v4860
      %v4862 = vrcp.pop %v4850
      %v4863 = vmul.f32 1.0, %v4862
      %v4864 = vrcp.pop %v4851
      %v4865 = vmul.f32 1.0, %v4864
      %v4866 = vrcp.pop %v4852
      %v4867 = vmul.f32 1.0, %v4866
      %v4868 = vrcp.pop %v4853
      %v4869 = vmul.f32 1.0, %v4868
      %v4870 = vmul.f32 %v4855, 1.0614054
      %v4871 = vmul.f32 %v4857, 1.0614054
      %v4872 = vmul.f32 %v4859, 1.0614054
      %v4873 = vmul.f32 %v4861, 1.0614054
      %v4874 = vmul.f32 %v4863, 1.0614054
      %v4875 = vmul.f32 %v4865, 1.0614054
      %v4876 = vmul.f32 %v4867, 1.0614054
      %v4877 = vmul.f32 %v4869, 1.0614054
      %v4878 = vadd.f32 %v4870, -1.4531521
      %v4879 = vadd.f32 %v4871, -1.4531521
      %v4880 = vadd.f32 %v4872, -1.4531521
      %v4881 = vadd.f32 %v4873, -1.4531521
      %v4882 = vadd.f32 %v4874, -1.4531521
      %v4883 = vadd.f32 %v4875, -1.4531521
      %v4884 = vadd.f32 %v4876, -1.4531521
      %v4885 = vadd.f32 %v4877, -1.4531521
      %v4886 = vmul.f32 %v4878, %v4855
      %v4887 = vmul.f32 %v4879, %v4857
      %v4888 = vmul.f32 %v4880, %v4859
      %v4889 = vmul.f32 %v4881, %v4861
      %v4890 = vmul.f32 %v4882, %v4863
      %v4891 = vmul.f32 %v4883, %v4865
      %v4892 = vmul.f32 %v4884, %v4867
      %v4893 = vmul.f32 %v4885, %v4869
      %v4894 = vadd.f32 %v4886, 1.4214138
      %v4895 = vadd.f32 %v4887, 1.4214138
      %v4896 = vadd.f32 %v4888, 1.4214138
      %v4897 = vadd.f32 %v4889, 1.4214138
      %v4898 = vadd.f32 %v4890, 1.4214138
      %v4899 = vadd.f32 %v4891, 1.4214138
      %v4900 = vadd.f32 %v4892, 1.4214138
      %v4901 = vadd.f32 %v4893, 1.4214138
      %v4902 = vmul.f32 %v4894, %v4855
      %v4903 = vmul.f32 %v4895, %v4857
      %v4904 = vmul.f32 %v4896, %v4859
      %v4905 = vmul.f32 %v4897, %v4861
      %v4906 = vmul.f32 %v4898, %v4863
      %v4907 = vmul.f32 %v4899, %v4865
      %v4908 = vmul.f32 %v4900, %v4867
      %v4909 = vmul.f32 %v4901, %v4869
      %v4910 = vadd.f32 %v4902, -0.28449672
      %v4911 = vadd.f32 %v4903, -0.28449672
      %v4912 = vadd.f32 %v4904, -0.28449672
      %v4913 = vadd.f32 %v4905, -0.28449672
      %v4914 = vadd.f32 %v4906, -0.28449672
      %v4915 = vadd.f32 %v4907, -0.28449672
      %v4916 = vadd.f32 %v4908, -0.28449672
      %v4917 = vadd.f32 %v4909, -0.28449672
      %v4918 = vmul.f32 %v4910, %v4855
      %v4919 = vmul.f32 %v4911, %v4857
      %v4920 = vmul.f32 %v4912, %v4859
      %v4921 = vmul.f32 %v4913, %v4861
      %v4922 = vmul.f32 %v4914, %v4863
      %v4923 = vmul.f32 %v4915, %v4865
      %v4924 = vmul.f32 %v4916, %v4867
      %v4925 = vmul.f32 %v4917, %v4869
      %v4926 = vadd.f32 %v4918, 0.2548296
      %v4927 = vadd.f32 %v4919, 0.2548296
      %v4928 = vadd.f32 %v4920, 0.2548296
      %v4929 = vadd.f32 %v4921, 0.2548296
      %v4930 = vadd.f32 %v4922, 0.2548296
      %v4931 = vadd.f32 %v4923, 0.2548296
      %v4932 = vadd.f32 %v4924, 0.2548296
      %v4933 = vadd.f32 %v4925, 0.2548296
      %v4934 = vmul.f32 %v4926, %v4855
      %v4935 = vmul.f32 %v4927, %v4857
      %v4936 = vmul.f32 %v4928, %v4859
      %v4937 = vmul.f32 %v4929, %v4861
      %v4938 = vmul.f32 %v4930, %v4863
      %v4939 = vmul.f32 %v4931, %v4865
      %v4940 = vmul.f32 %v4932, %v4867
      %v4941 = vmul.f32 %v4933, %v4869
      %v4942 = vsub.f32 0.0, %v4830
      %v4943 = vsub.f32 0.0, %v4831
      %v4944 = vsub.f32 0.0, %v4832
      %v4945 = vsub.f32 0.0, %v4833
      %v4946 = vsub.f32 0.0, %v4834
      %v4947 = vsub.f32 0.0, %v4835
      %v4948 = vsub.f32 0.0, %v4836
      %v4949 = vsub.f32 0.0, %v4837
      %v4950 = vmul.f32 %v4942, %v4830
      %v4951 = vmul.f32 %v4943, %v4831
      %v4952 = vmul.f32 %v4944, %v4832
      %v4953 = vmul.f32 %v4945, %v4833
      %v4954 = vmul.f32 %v4946, %v4834
      %v4955 = vmul.f32 %v4947, %v4835
      %v4956 = vmul.f32 %v4948, %v4836
      %v4957 = vmul.f32 %v4949, %v4837
      %v4958 = vmul.f32 %v4950, 1.442695
      %v4959 = vpow.pop %v4958
      %v4960 = vmul.f32 %v4951, 1.442695
      %v4961 = vpow.pop %v4960
      %v4962 = vmul.f32 %v4952, 1.442695
      %v4963 = vpow.pop %v4962
      %v4964 = vmul.f32 %v4953, 1.442695
      %v4965 = vpow.pop %v4964
      %v4966 = vmul.f32 %v4954, 1.442695
      %v4967 = vpow.pop %v4966
      %v4968 = vmul.f32 %v4955, 1.442695
      %v4969 = vpow.pop %v4968
      %v4970 = vmul.f32 %v4956, 1.442695
      %v4971 = vpow.pop %v4970
      %v4972 = vmul.f32 %v4957, 1.442695
      %v4973 = vpow.pop %v4972
      %v4974 = vmul.f32 %v4934, %v4959
      %v4975 = vmul.f32 %v4935, %v4961
      %v4976 = vmul.f32 %v4936, %v4963
      %v4977 = vmul.f32 %v4937, %v4965
      %v4978 = vmul.f32 %v4938, %v4967
      %v4979 = vmul.f32 %v4939, %v4969
      %v4980 = vmul.f32 %v4940, %v4971
      %v4981 = vmul.f32 %v4941, %v4973
      %v4982 = vsub.f32 1.0, %v4974
      %v4983 = vsub.f32 1.0, %v4975
      %v4984 = vsub.f32 1.0, %v4976
      %v4985 = vsub.f32 1.0, %v4977
      %v4986 = vsub.f32 1.0, %v4978
      %v4987 = vsub.f32 1.0, %v4979
      %v4988 = vsub.f32 1.0, %v4980
      %v4989 = vsub.f32 1.0, %v4981
      %v4990 = vmul.f32 %v4822, %v4982
      %v4991 = vmul.f32 %v4823, %v4983
      %v4992 = vmul.f32 %v4824, %v4984
      %v4993 = vmul.f32 %v4825, %v4985
      %v4994 = vmul.f32 %v4826, %v4986
      %v4995 = vmul.f32 %v4827, %v4987
      %v4996 = vmul.f32 %v4828, %v4988
      %v4997 = vmul.f32 %v4829, %v4989
      %v4998 = vadd.f32 %v4990, 1.0
      %v4999 = vadd.f32 %v4991, 1.0
      %v5000 = vadd.f32 %v4992, 1.0
      %v5001 = vadd.f32 %v4993, 1.0
      %v5002 = vadd.f32 %v4994, 1.0
      %v5003 = vadd.f32 %v4995, 1.0
      %v5004 = vadd.f32 %v4996, 1.0
      %v5005 = vadd.f32 %v4997, 1.0
      %v5006 = vmul.f32 %v4798, %v4998
      %v5007 = vmul.f32 %v4799, %v4999
      %v5008 = vmul.f32 %v4800, %v5000
      %v5009 = vmul.f32 %v4801, %v5001
      %v5010 = vmul.f32 %v4802, %v5002
      %v5011 = vmul.f32 %v4803, %v5003
      %v5012 = vmul.f32 %v4804, %v5004
      %v5013 = vmul.f32 %v4805, %v5005
      %s5014 = scalar_lea.vmem %s6, 8
      %v5015 = vld [vmem:[%s5014] sm:$0xf]
      %v5016 = vld [vmem:[%s5014 + $0x4] sm:$0xf]
      %v5017 = vpack.c.bf16 %v5008, %v5006
      %v5018 = vpack.c.bf16 %v5009, %v5007
      %v5019 = vpack.c.bf16 %v5012, %v5010
      %v5020 = vpack.c.bf16 %v5013, %v5011
      %v5023 = vunpack.c.l.b16 %v5015
      %v5024 = vunpack.c.l.b16 %v5016
      %v5025 = vpack.c.b16 %v5024, %v5023
      %v5027 = vsel %vm2732, %v5025, 0
      %5029 = vmatprep.subr.bf16.mxu0 %v5018
      %5030 = vmatpush1.bf16.msra.mxu0 %v5017
      %5031 = vmatprep.subr.bf16.mxu0 %v5020
      %5032 = vmatpush1.bf16.msra.mxu0 %v5019
      %5033 = vmatprep.subr.bf16.mxu0 0
      %5034 = vmatpush1.bf16.msra.mxu0 0
      %5035 = vmatprep.subr.bf16.mxu0 0
      %5036 = vmatpush1.bf16.msra.mxu0 0
      %5037 = vmatprep.subr.bf16.mxu0 0
      %5038 = vmatpush1.bf16.msra.mxu0 0
      %5039 = vmatprep.subr.bf16.mxu0 0
      %5040 = vmatpush1.bf16.msra.mxu0 0
      %5041 = vmatprep.subr.bf16.mxu0 0
      %5042 = vmatpush1.bf16.msra.mxu0 0
      %5043 = vmatprep.subr.bf16.mxu0 0
      %5044 = vmatpush1.bf16.msra.mxu0 0
      %5045 = vmatprep.subr.bf16.mxu0 0
      %5046 = vmatpush1.bf16.msra.mxu0 0
      %5047 = vmatprep.subr.bf16.mxu0 0
      %5048 = vmatpush1.bf16.msra.mxu0 0
      %5049 = vmatprep.subr.bf16.mxu0 0
      %5050 = vmatpush1.bf16.msra.mxu0 0
      %5051 = vmatprep.subr.bf16.mxu0 0
      %5052 = vmatpush1.bf16.msra.mxu0 0
      %5053 = vmatprep.subr.bf16.mxu0 0
      %5054 = vmatpush1.bf16.msra.mxu0 0
      %5055 = vmatprep.subr.bf16.mxu0 0
      %5056 = vmatpush1.bf16.msra.mxu0 0
      %5057 = vmatprep.subr.bf16.mxu0 0
      %5058 = vmatpush1.bf16.msra.mxu0 0
      %5059 = vmatprep.subr.bf16.mxu0 0
      %5060 = vmatpush1.bf16.msra.mxu0 0
      %5061 = vmatprep.mubr.bf16.mxu0 0
      %5062 = vmatmul.mubr.bf16.gmra.mrb[0].mxu0 %v5027
      %v5063 = vpop.f32.mrb[0].mxu0
      %v5064 = vadd.f32 0.0, %v5063
      %v5065 = vpop.f32.mrb[0].mxu0
      %v5066 = vadd.f32 0.0, %v5065
      %v5067 = vpop.f32.mrb[0].mxu0
      %v5068 = vadd.f32 0.0, %v5067
      %v5069 = vpop.f32.mrb[0].mxu0
      %v5070 = vadd.f32 0.0, %v5069
      %5071 = vdwg.mxu0
      %v5072 = vadd.f32 %v4618, %v5064
      %v5073 = vadd.f32 %v4619, %v5066
      %v5074 = vadd.f32 %v4620, %v5068
      %v5075 = vadd.f32 %v4621, %v5070
      %5077 = vset.pattern.permute.xlu0 0
      %5078 = vperm.xlu0 %5077, %v2808
      %v5079 = vpop.permute.xlu0 %5078
      %5082 = vset.pattern.permute.xlu0 0
      %5083 = vperm.xlu0 %5082, %v2809
      %v5084 = vpop.permute.xlu0 %5083
      %v5086 = vadd.f32 %v5072, %v5079
      %v5087 = vadd.f32 %v5073, %v5079
      %v5088 = vadd.f32 %v5074, %v5084
      %v5089 = vadd.f32 %v5075, %v5084
      %v5090 = vpack.c.bf16 %v5088, %v5086
      %v5091 = vpack.c.bf16 %v5089, %v5087
      %v5092 = vld [vmem:[%s2] sm:$0xff]
      %v5093 = vld [vmem:[%s2 + $0x8] sm:$0xff]
      %v5094 = vld [vmem:[%s2 + $0x10] sm:$0xff]
      %v5095 = vld [vmem:[%s2 + $0x18] sm:$0xff]
      %v5096 = vld [vmem:[%s2 + $0x20] sm:$0xff]
      %v5097 = vld [vmem:[%s2 + $0x28] sm:$0xff]
      %v5098 = vld [vmem:[%s2 + $0x30] sm:$0xff]
      %v5099 = vld [vmem:[%s2 + $0x38] sm:$0xff]
      %v5100 = vld [vmem:[%s2 + $0x40] sm:$0xff]
      %v5101 = vld [vmem:[%s2 + $0x48] sm:$0xff]
      %v5102 = vld [vmem:[%s2 + $0x50] sm:$0xff]
      %v5103 = vld [vmem:[%s2 + $0x58] sm:$0xff]
      %v5104 = vld [vmem:[%s2 + $0x60] sm:$0xff]
      %v5105 = vld [vmem:[%s2 + $0x68] sm:$0xff]
      %v5106 = vld [vmem:[%s2 + $0x70] sm:$0xff]
      %v5107 = vld [vmem:[%s2 + $0x78] sm:$0xff]
      %v5108 = vld [vmem:[%s2 + $0x80] sm:$0xff]
      %v5109 = vld [vmem:[%s2 + $0x88] sm:$0xff]
      %v5110 = vld [vmem:[%s2 + $0x90] sm:$0xff]
      %v5111 = vld [vmem:[%s2 + $0x98] sm:$0xff]
      %v5112 = vld [vmem:[%s2 + $0xa0] sm:$0xff]
      %v5113 = vld [vmem:[%s2 + $0xa8] sm:$0xff]
      %v5114 = vld [vmem:[%s2 + $0xb0] sm:$0xff]
      %v5115 = vld [vmem:[%s2 + $0xb8] sm:$0xff]
      %v5140 = vunpack.c.l.b16 %v5092
      %v5141 = vunpack.c.h.b16 %v5092
      %v5142 = vunpack.c.l.b16 %v5093
      %v5143 = vunpack.c.h.b16 %v5093
      %v5144 = vunpack.c.l.b16 %v5094
      %v5145 = vunpack.c.h.b16 %v5094
      %v5146 = vunpack.c.l.b16 %v5095
      %v5147 = vunpack.c.h.b16 %v5095
      %v5148 = vunpack.c.l.b16 %v5096
      %v5149 = vunpack.c.h.b16 %v5096
      %v5150 = vunpack.c.l.b16 %v5097
      %v5151 = vunpack.c.h.b16 %v5097
      %v5152 = vunpack.c.l.b16 %v5098
      %v5153 = vunpack.c.h.b16 %v5098
      %v5154 = vunpack.c.l.b16 %v5099
      %v5155 = vunpack.c.h.b16 %v5099
      %v5156 = vunpack.c.l.b16 %v5100
      %v5157 = vunpack.c.h.b16 %v5100
      %v5158 = vunpack.c.l.b16 %v5101
      %v5159 = vunpack.c.h.b16 %v5101
      %v5160 = vunpack.c.l.b16 %v5102
      %v5161 = vunpack.c.h.b16 %v5102
      %v5162 = vunpack.c.l.b16 %v5103
      %v5163 = vunpack.c.h.b16 %v5103
      %v5164 = vunpack.c.l.b16 %v5104
      %v5165 = vunpack.c.h.b16 %v5104
      %v5166 = vunpack.c.l.b16 %v5105
      %v5167 = vunpack.c.h.b16 %v5105
      %v5168 = vunpack.c.l.b16 %v5106
      %v5169 = vunpack.c.h.b16 %v5106
      %v5170 = vunpack.c.l.b16 %v5107
      %v5171 = vunpack.c.h.b16 %v5107
      %v5172 = vunpack.c.l.b16 %v5108
      %v5173 = vunpack.c.h.b16 %v5108
      %v5174 = vunpack.c.l.b16 %v5109
      %v5175 = vunpack.c.h.b16 %v5109
      %v5176 = vunpack.c.l.b16 %v5110
      %v5177 = vunpack.c.h.b16 %v5110
      %v5178 = vunpack.c.l.b16 %v5111
      %v5179 = vunpack.c.h.b16 %v5111
      %v5180 = vunpack.c.l.b16 %v5112
      %v5181 = vunpack.c.h.b16 %v5112
      %v5182 = vunpack.c.l.b16 %v5113
      %v5183 = vunpack.c.h.b16 %v5113
      %v5184 = vunpack.c.l.b16 %v5114
      %v5185 = vunpack.c.h.b16 %v5114
      %v5186 = vunpack.c.l.b16 %v5115
      %v5187 = vunpack.c.h.b16 %v5115
      %v5188 = vpack.c.b16 %v5142, %v5140
      %v5189 = vpack.c.b16 %v5143, %v5141
      %v5190 = vpack.c.b16 %v5146, %v5144
      %v5191 = vpack.c.b16 %v5147, %v5145
      %v5192 = vpack.c.b16 %v5150, %v5148
      %v5193 = vpack.c.b16 %v5151, %v5149
      %v5194 = vpack.c.b16 %v5154, %v5152
      %v5195 = vpack.c.b16 %v5155, %v5153
      %v5196 = vpack.c.b16 %v5158, %v5156
      %v5197 = vpack.c.b16 %v5159, %v5157
      %v5198 = vpack.c.b16 %v5162, %v5160
      %v5199 = vpack.c.b16 %v5163, %v5161
      %v5200 = vpack.c.b16 %v5166, %v5164
      %v5201 = vpack.c.b16 %v5167, %v5165
      %v5202 = vpack.c.b16 %v5170, %v5168
      %v5203 = vpack.c.b16 %v5171, %v5169
      %v5204 = vpack.c.b16 %v5174, %v5172
      %v5205 = vpack.c.b16 %v5175, %v5173
      %v5206 = vpack.c.b16 %v5178, %v5176
      %v5207 = vpack.c.b16 %v5179, %v5177
      %v5208 = vpack.c.b16 %v5182, %v5180
      %v5209 = vpack.c.b16 %v5183, %v5181
      %v5210 = vpack.c.b16 %v5186, %v5184
      %v5211 = vpack.c.b16 %v5187, %v5185
      %v5237 = vsel %vm457, %v5091, 0
      %5239 = vmatprep.subr.bf16.mxu0 %v5189
      %5240 = vmatpush1.bf16.msra.mxu0 %v5188
      %5241 = vmatprep.subr.bf16.mxu0 %v5191
      %5242 = vmatpush1.bf16.msra.mxu0 %v5190
      %5243 = vmatprep.subr.bf16.mxu0 %v5193
      %5244 = vmatpush1.bf16.msra.mxu0 %v5192
      %5245 = vmatprep.subr.bf16.mxu0 %v5195
      %5246 = vmatpush1.bf16.msra.mxu0 %v5194
      %5247 = vmatprep.subr.bf16.mxu0 %v5197
      %5248 = vmatpush1.bf16.msra.mxu0 %v5196
      %5249 = vmatprep.subr.bf16.mxu0 %v5199
      %5250 = vmatpush1.bf16.msra.mxu0 %v5198
      %5251 = vmatprep.subr.bf16.mxu0 %v5201
      %5252 = vmatpush1.bf16.msra.mxu0 %v5200
      %5253 = vmatprep.subr.bf16.mxu0 %v5203
      %5254 = vmatpush1.bf16.msra.mxu0 %v5202
      %5255 = vmatprep.subr.bf16.mxu0 %v5205
      %5256 = vmatpush1.bf16.msra.mxu0 %v5204
      %5257 = vmatprep.subr.bf16.mxu0 %v5207
      %5258 = vmatpush1.bf16.msra.mxu0 %v5206
      %5259 = vmatprep.subr.bf16.mxu0 %v5209
      %5260 = vmatpush1.bf16.msra.mxu0 %v5208
      %5261 = vmatprep.subr.bf16.mxu0 %v5211
      %5262 = vmatpush1.bf16.msra.mxu0 %v5210
      %5263 = vmatprep.subr.bf16.mxu0 0
      %5264 = vmatpush1.bf16.msra.mxu0 0
      %5265 = vmatprep.subr.bf16.mxu0 0
      %5266 = vmatpush1.bf16.msra.mxu0 0
      %5267 = vmatprep.subr.bf16.mxu0 0
      %5268 = vmatpush1.bf16.msra.mxu0 0
      %5269 = vmatprep.subr.bf16.mxu0 0
      %5270 = vmatpush1.bf16.msra.mxu0 0
      %5271 = vmatprep.mubr.bf16.mxu0 %v5237
      %5272 = vmatmul.mubr.bf16.gmra.mrb[0].mxu0 %v5090
      %v5273 = vpop.f32.mrb[0].mxu0
      %v5274 = vadd.f32 0.0, %v5273
      %v5275 = vpop.f32.mrb[0].mxu0
      %v5276 = vadd.f32 0.0, %v5275
      %v5277 = vpop.f32.mrb[0].mxu0
      %v5278 = vadd.f32 0.0, %v5277
      %v5279 = vpop.f32.mrb[0].mxu0
      %v5280 = vadd.f32 0.0, %v5279
      %5281 = vdwg.mxu0
      %5282 = vst [vmem:[%s305] sm:$0xff] %v5274
      %5283 = vst.msk [vmem:[%s305 + $0x8] sm:$0xff] %vm457, %v5276
      %5284 = vst [vmem:[%s305 + $0x10] sm:$0xff] %v5278
      %5285 = vst.msk [vmem:[%s305 + $0x18] sm:$0xff] %vm457, %v5280
      %p5286 = scmp.lt.s32.totalorder %s19, 1
      %s5287 = scalar_select %p5286, %s19, 1
      %s5288 = smul.addr %s5287, 4
      %s5289 = smul.addr %s5288, 8
      %s5290 = scalar_lea.vmem %s8, %s5289
      // Predicated region
      $region53: #{vit_forward.1} parent=51 // pred_check
        %p5291 = pneg %p210
      $region54: #{vit_forward.1} parent=51 // pred_check_branch
        %5293 = sbr.rel (%p5291) target = $region56
      $region55: #{vit_forward.1} parent=51 // pred_region
        _
      $region56: #{vit_forward.1} parent=51 // pred_fallthru
        _
    $region52: #{vit_forward.1} parent=5 // pred_fallthru
      _
    %p5294 = scmp.le.s32.totalorder 2, %s14
    // Predicated region
    $region57: #{vit_forward.1} parent=5 // pred_check
      %p5295 = pneg %p5294
    $region58: #{vit_forward.1} parent=5 // pred_check_branch
      %5297 = sbr.rel (%p5295) target = $region60
    $region59: #{vit_forward.1} parent=5 // pred_region
      %s5298 = ssub.s32 %s14, 2
      // Predicated region
      $region61: #{vit_forward.1} parent=59 // pred_check
        %p5299 = pneg %p216
      $region62: #{vit_forward.1} parent=59 // pred_check_branch
        %5301 = sbr.rel (%p5299) target = $region64
      $region63: #{vit_forward.1} parent=59 // pred_region
        %p5302 = scmp.lt.s32.totalorder %s20, 1
        %s5303 = scalar_select %p5302, %s20, 1
        %s5304 = smul.addr %s5303, 4
        %s5305 = smul.addr %s5304, 8
        %s5306 = scalar_lea.vmem %s8, %s5305
      $region64: #{vit_forward.1} parent=59 // pred_fallthru
        _
    $region60: #{vit_forward.1} parent=5 // pred_fallthru
      _
  $region6: #{vit_forward.1} parent=0 // loop_footer
    %s18 = sadd.s32 1, %s14
  $region7: #{vit_forward.1} parent=0 // loop_footer_branch
    %13 = sbr.rel target = $region3
  $region8: #{vit_forward.1} parent=0 // loop_exit
    _

</llo_original>
